<compile_context>
chip_gen: v7x
topology: tpu7x:2x2x1
jax: 0.10.0
libtpu: 0.0.40
codegen_flags: <defaults>
</compile_context>

<pallas_src>
import jax
import jax.numpy as jnp
from jax.experimental import pallas as pl
from jax.experimental.pallas import tpu as pltpu

# ---- small, TPU-friendly analogues of the original sizes -------------------
SCREEN_W = 16
SCREEN_H = 8
IN_DIM = 3 * SCREEN_W * SCREEN_H      # 384  (multiple of 128 -> lane-dense output)
HL_WIDTH = 256                        # multiple of 256 -> fills v6e/v7x MXU width
LATENT_WIDTH = 256
BATCH = 256                           # grid of 2 batch tiles -> shardable on v7x
MAX_TB = 128                          # batch tile: fills the MXU systolic rows


def autoencoder_kernel(x_ref, w1_ref, b1_ref, w2_ref, b2_ref,
                       w3_ref, b3_ref, w4_ref, b4_ref, out_ref):
    # bf16 operands on the MXU, f32 accumulation; bias add + ReLU in f32.
    x = x_ref[...].astype(jnp.bfloat16)                                   # (TB, IN_DIM)
    # encoder
    h1 = jnp.dot(x, w1_ref[...], preferred_element_type=jnp.float32) + b1_ref[...]
    h1 = jnp.maximum(h1, 0.0).astype(jnp.bfloat16)                        # ReLU, (TB, HL)
    z = jnp.dot(h1, w2_ref[...], preferred_element_type=jnp.float32) + b2_ref[...]
    z = z.astype(jnp.bfloat16)                                            # (TB, LATENT)
    # decoder
    h2 = jnp.dot(z, w3_ref[...], preferred_element_type=jnp.float32) + b3_ref[...]
    h2 = jnp.maximum(h2, 0.0).astype(jnp.bfloat16)                        # ReLU, (TB, HL)
    y = jnp.dot(h2, w4_ref[...], preferred_element_type=jnp.float32) + b4_ref[...]
    out_ref[...] = y.astype(out_ref.dtype)                                # (TB, IN_DIM)


def autoencoder_forward(x, params, *, single_buffer_weights=True):
    """x: [B, IN_DIM] float32. params: dict of pre-transposed bf16 weights + f32 biases."""
    B, D = x.shape
    assert D == IN_DIM
    tb = min(MAX_TB, B)
    assert B % tb == 0 and tb % 16 == 0        # bf16 vreg tile is (16, 128)

    w1, b1 = params["w1"], params["b1"]   # (IN_DIM, HL) bf16, (1, HL) f32
    w2, b2 = params["w2"], params["b2"]   # (HL, LATENT) bf16, (1, LATENT) f32
    w3, b3 = params["w3"], params["b3"]   # (LATENT, HL) bf16, (1, HL) f32
    w4, b4 = params["w4"], params["b4"]   # (HL, IN_DIM) bf16, (1, IN_DIM) f32

    # Grid-invariant operands: index_map is always (0, 0), so double-buffering
    # them is pure VMEM waste. Single-buffer via pipeline_mode=pl.Buffered(1).
    if single_buffer_weights:
        const = lambda a: pl.BlockSpec(a.shape, lambda i: (0, 0),
                                       pipeline_mode=pl.Buffered(1))
    else:
        const = lambda a: pl.BlockSpec(a.shape, lambda i: (0, 0))

    return pl.pallas_call(
        autoencoder_kernel,
        out_shape=jax.ShapeDtypeStruct((B, IN_DIM), x.dtype),
        grid_spec=pltpu.PrefetchScalarGridSpec(
            num_scalar_prefetch=0,
            grid=(B // tb,),
            in_specs=[
                pl.BlockSpec((tb, IN_DIM), lambda i: (i, 0)),   # x batch tile
                const(w1), const(b1),
                const(w2), const(b2),
                const(w3), const(b3),
                const(w4), const(b4),
            ],
            out_specs=pl.BlockSpec((tb, IN_DIM), lambda i: (i, 0)),
        ),
        compiler_params=pltpu.CompilerParams(
            dimension_semantics=("parallel",),   # batch tiles shard across v7x TCs
        ),
    )(x, w1, b1, w2, b2, w3, b3, w4, b4)


def init_params(key):
    """Deterministic init mimicking nn.Linear (uniform +-1/sqrt(fan_in)).
    Weights are pre-transposed to [in_features, out_features] and stored bf16;
    biases stay f32 (added after the f32-accumulated matmul)."""
    def linear(key, fan_in, fan_out):
        kw, kb = jax.random.split(key)
        bound = 1.0 / jnp.sqrt(fan_in)
        w = jax.random.uniform(kw, (fan_in, fan_out), jnp.float32, -bound, bound)
        b = jax.random.uniform(kb, (1, fan_out), jnp.float32, -bound, bound)
        return w.astype(jnp.bfloat16), b

    k1, k2, k3, k4 = jax.random.split(key, 4)
    w1, b1 = linear(k1, IN_DIM, HL_WIDTH)
    w2, b2 = linear(k2, HL_WIDTH, LATENT_WIDTH)
    w3, b3 = linear(k3, LATENT_WIDTH, HL_WIDTH)
    w4, b4 = linear(k4, HL_WIDTH, IN_DIM)
    return dict(w1=w1, b1=b1, w2=w2, b2=b2, w3=w3, b3=b3, w4=w4, b4=b4)


def reference_forward(x, p):
    """Pure-JAX reference with the same numerics (bf16 operands, f32 accumulation)."""
    f32 = jnp.float32
    bf16 = jnp.bfloat16
    h1 = jnp.maximum(jnp.dot(x.astype(bf16), p["w1"], preferred_element_type=f32) + p["b1"], 0.0)
    z = jnp.dot(h1.astype(bf16), p["w2"], preferred_element_type=f32) + p["b2"]
    h2 = jnp.maximum(jnp.dot(z.astype(bf16), p["w3"], preferred_element_type=f32) + p["b3"], 0.0)
    return jnp.dot(h2.astype(bf16), p["w4"], preferred_element_type=f32) + p["b4"]


if __name__ == "__main__":
    key = jax.random.PRNGKey(0)
    kx, kp = jax.random.split(key)
    x = jax.random.uniform(kx, (BATCH, IN_DIM), jnp.float32)   # screen values in [0, 1)
    params = init_params(kp)

    try:
        y = jax.block_until_ready(
            autoencoder_forward(x, params, single_buffer_weights=True))
    except Exception:
        # Fallback for JAX versions without BlockSpec(pipeline_mode=...):
        # default double-buffered weights are fine at these small sizes.
        y = jax.block_until_ready(
            autoencoder_forward(x, params, single_buffer_weights=False))

    y_ref = reference_forward(x, params)
    assert y.shape == (BATCH, IN_DIM)
    assert jnp.allclose(y, y_ref, atol=1e-2, rtol=5e-2), \
        float(jnp.max(jnp.abs(y - y_ref)))

    print("KERNEL_OK")
</pallas_src>

<mosaic_0001>
module attributes {stable_mosaic.version = 11 : i64} {
  func.func @autoencoder_kernel(%arg0: i32, %arg1: memref<128x384xf32, #tpu.memory_space<vmem>>, %arg2: memref<384x256xbf16, #tpu.memory_space<vmem>>, %arg3: memref<1x256xf32, #tpu.memory_space<vmem>>, %arg4: memref<256x256xbf16, #tpu.memory_space<vmem>>, %arg5: memref<1x256xf32, #tpu.memory_space<vmem>>, %arg6: memref<256x256xbf16, #tpu.memory_space<vmem>>, %arg7: memref<1x256xf32, #tpu.memory_space<vmem>>, %arg8: memref<256x384xbf16, #tpu.memory_space<vmem>>, %arg9: memref<1x384xf32, #tpu.memory_space<vmem>>, %arg10: memref<128x384xf32, #tpu.memory_space<vmem>>) attributes {dimension_semantics = [#tpu.dimension_semantics<parallel>], iteration_bounds = array<i64: 2>, scalar_prefetch = 0 : i64, scratch_operands = 0 : i64, tpu.core_type = #tpu.core_type<tc>, window_params = [{transform_indices = @transform_0, window_bounds = array<i64: 128, 384>}, {pipeline_mode = #tpu.pipeline_mode<synchronous>, transform_indices = @transform_1, window_bounds = array<i64: 384, 256>}, {pipeline_mode = #tpu.pipeline_mode<synchronous>, transform_indices = @transform_2, window_bounds = array<i64: 1, 256>}, {pipeline_mode = #tpu.pipeline_mode<synchronous>, transform_indices = @transform_3, window_bounds = array<i64: 256, 256>}, {pipeline_mode = #tpu.pipeline_mode<synchronous>, transform_indices = @transform_4, window_bounds = array<i64: 1, 256>}, {pipeline_mode = #tpu.pipeline_mode<synchronous>, transform_indices = @transform_5, window_bounds = array<i64: 256, 256>}, {pipeline_mode = #tpu.pipeline_mode<synchronous>, transform_indices = @transform_6, window_bounds = array<i64: 1, 256>}, {pipeline_mode = #tpu.pipeline_mode<synchronous>, transform_indices = @transform_7, window_bounds = array<i64: 256, 384>}, {pipeline_mode = #tpu.pipeline_mode<synchronous>, transform_indices = @transform_8, window_bounds = array<i64: 1, 384>}, {transform_indices = @transform_9, window_bounds = array<i64: 128, 384>}]} {
    %c0 = arith.constant 0 : index
    %c0_0 = arith.constant 0 : index
    %0 = vector.load %arg1[%c0, %c0_0] : memref<128x384xf32, #tpu.memory_space<vmem>>, vector<128x384xf32>
    %1 = arith.truncf %0 : vector<128x384xf32> to vector<128x384xbf16>
    %c0_1 = arith.constant 0 : index
    %c0_2 = arith.constant 0 : index
    %2 = vector.load %arg2[%c0_1, %c0_2] : memref<384x256xbf16, #tpu.memory_space<vmem>>, vector<384x256xbf16>
    %cst = arith.constant dense<0.000000e+00> : vector<128x256xf32>
    %3 = tpu.matmul %1, %2, %cst {dimension_numbers = #tpu.dot_dimension_numbers<[1], [0], [0], [1], [0, 0, 1, 1], [], []>} : vector<128x384xbf16>, vector<384x256xbf16>, vector<128x256xf32> -> vector<128x256xf32>
    %c0_3 = arith.constant 0 : index
    %c0_4 = arith.constant 0 : index
    %4 = vector.load %arg3[%c0_3, %c0_4] : memref<1x256xf32, #tpu.memory_space<vmem>>, vector<1x256xf32>
    %5 = vector.broadcast %4 : vector<1x256xf32> to vector<128x256xf32>
    %6 = arith.addf %3, %5 : vector<128x256xf32>
    %cst_5 = arith.constant 0.000000e+00 : f32
    %7 = vector.broadcast %cst_5 : f32 to vector<128x256xf32>
    %8 = arith.maximumf %6, %7 : vector<128x256xf32>
    %9 = arith.truncf %8 : vector<128x256xf32> to vector<128x256xbf16>
    %c0_6 = arith.constant 0 : index
    %c0_7 = arith.constant 0 : index
    %10 = vector.load %arg4[%c0_6, %c0_7] : memref<256x256xbf16, #tpu.memory_space<vmem>>, vector<256x256xbf16>
    %cst_8 = arith.constant dense<0.000000e+00> : vector<128x256xf32>
    %11 = tpu.matmul %9, %10, %cst_8 {dimension_numbers = #tpu.dot_dimension_numbers<[1], [0], [0], [1], [0, 0, 1, 1], [], []>} : vector<128x256xbf16>, vector<256x256xbf16>, vector<128x256xf32> -> vector<128x256xf32>
    %c0_9 = arith.constant 0 : index
    %c0_10 = arith.constant 0 : index
    %12 = vector.load %arg5[%c0_9, %c0_10] : memref<1x256xf32, #tpu.memory_space<vmem>>, vector<1x256xf32>
    %13 = vector.broadcast %12 : vector<1x256xf32> to vector<128x256xf32>
    %14 = arith.addf %11, %13 : vector<128x256xf32>
    %15 = arith.truncf %14 : vector<128x256xf32> to vector<128x256xbf16>
    %c0_11 = arith.constant 0 : index
    %c0_12 = arith.constant 0 : index
    %16 = vector.load %arg6[%c0_11, %c0_12] : memref<256x256xbf16, #tpu.memory_space<vmem>>, vector<256x256xbf16>
    %cst_13 = arith.constant dense<0.000000e+00> : vector<128x256xf32>
    %17 = tpu.matmul %15, %16, %cst_13 {dimension_numbers = #tpu.dot_dimension_numbers<[1], [0], [0], [1], [0, 0, 1, 1], [], []>} : vector<128x256xbf16>, vector<256x256xbf16>, vector<128x256xf32> -> vector<128x256xf32>
    %c0_14 = arith.constant 0 : index
    %c0_15 = arith.constant 0 : index
    %18 = vector.load %arg7[%c0_14, %c0_15] : memref<1x256xf32, #tpu.memory_space<vmem>>, vector<1x256xf32>
    %19 = vector.broadcast %18 : vector<1x256xf32> to vector<128x256xf32>
    %20 = arith.addf %17, %19 : vector<128x256xf32>
    %cst_16 = arith.constant 0.000000e+00 : f32
    %21 = vector.broadcast %cst_16 : f32 to vector<128x256xf32>
    %22 = arith.maximumf %20, %21 : vector<128x256xf32>
    %23 = arith.truncf %22 : vector<128x256xf32> to vector<128x256xbf16>
    %c0_17 = arith.constant 0 : index
    %c0_18 = arith.constant 0 : index
    %24 = vector.load %arg8[%c0_17, %c0_18] : memref<256x384xbf16, #tpu.memory_space<vmem>>, vector<256x384xbf16>
    %cst_19 = arith.constant dense<0.000000e+00> : vector<128x384xf32>
    %25 = tpu.matmul %23, %24, %cst_19 {dimension_numbers = #tpu.dot_dimension_numbers<[1], [0], [0], [1], [0, 0, 1, 1], [], []>} : vector<128x256xbf16>, vector<256x384xbf16>, vector<128x384xf32> -> vector<128x384xf32>
    %c0_20 = arith.constant 0 : index
    %c0_21 = arith.constant 0 : index
    %26 = vector.load %arg9[%c0_20, %c0_21] : memref<1x384xf32, #tpu.memory_space<vmem>>, vector<1x384xf32>
    %27 = vector.broadcast %26 : vector<1x384xf32> to vector<128x384xf32>
    %28 = arith.addf %25, %27 : vector<128x384xf32>
    %c0_22 = arith.constant 0 : index
    %c0_23 = arith.constant 0 : index
    %29 = vector.load %arg10[%c0_22, %c0_23] : memref<128x384xf32, #tpu.memory_space<vmem>>, vector<128x384xf32>
    tpu.vector_store %arg10[%c0_22, %c0_23], %28 {strides = array<i32>} : memref<128x384xf32, #tpu.memory_space<vmem>>, vector<128x384xf32>,
    return
  }
  func.func @transform_0(%arg0: i32) -> (i32, i32) {
    %c0_i32 = arith.constant 0 : i32
    %c0_i32_0 = arith.constant 0 : i32
    return %arg0, %c0_i32 : i32, i32
  }
  func.func @transform_1(%arg0: i32) -> (i32, i32) {
    %c0_i32 = arith.constant 0 : i32
    %c0_i32_0 = arith.constant 0 : i32
    %c0_i32_1 = arith.constant 0 : i32
    return %c0_i32, %c0_i32_0 : i32, i32
  }
  func.func @transform_2(%arg0: i32) -> (i32, i32) {
    %c0_i32 = arith.constant 0 : i32
    %c0_i32_0 = arith.constant 0 : i32
    %c0_i32_1 = arith.constant 0 : i32
    return %c0_i32, %c0_i32_0 : i32, i32
  }
  func.func @transform_3(%arg0: i32) -> (i32, i32) {
    %c0_i32 = arith.constant 0 : i32
    %c0_i32_0 = arith.constant 0 : i32
    %c0_i32_1 = arith.constant 0 : i32
    return %c0_i32, %c0_i32_0 : i32, i32
  }
  func.func @transform_4(%arg0: i32) -> (i32, i32) {
    %c0_i32 = arith.constant 0 : i32
    %c0_i32_0 = arith.constant 0 : i32
    %c0_i32_1 = arith.constant 0 : i32
    return %c0_i32, %c0_i32_0 : i32, i32
  }
  func.func @transform_5(%arg0: i32) -> (i32, i32) {
    %c0_i32 = arith.constant 0 : i32
    %c0_i32_0 = arith.constant 0 : i32
    %c0_i32_1 = arith.constant 0 : i32
    return %c0_i32, %c0_i32_0 : i32, i32
  }
  func.func @transform_6(%arg0: i32) -> (i32, i32) {
    %c0_i32 = arith.constant 0 : i32
    %c0_i32_0 = arith.constant 0 : i32
    %c0_i32_1 = arith.constant 0 : i32
    return %c0_i32, %c0_i32_0 : i32, i32
  }
  func.func @transform_7(%arg0: i32) -> (i32, i32) {
    %c0_i32 = arith.constant 0 : i32
    %c0_i32_0 = arith.constant 0 : i32
    %c0_i32_1 = arith.constant 0 : i32
    return %c0_i32, %c0_i32_0 : i32, i32
  }
  func.func @transform_8(%arg0: i32) -> (i32, i32) {
    %c0_i32 = arith.constant 0 : i32
    %c0_i32_0 = arith.constant 0 : i32
    %c0_i32_1 = arith.constant 0 : i32
    return %c0_i32, %c0_i32_0 : i32, i32
  }
  func.func @transform_9(%arg0: i32) -> (i32, i32) {
    %c0_i32 = arith.constant 0 : i32
    %c0_i32_0 = arith.constant 0 : i32
    return %arg0, %c0_i32 : i32, i32
  }
}

module attributes {stable_mosaic.version = 11 : i64} {
  func.func @autoencoder_kernel(%arg0: i32, %arg1: memref<128x384xf32, #tpu.memory_space<vmem>>, %arg2: memref<384x256xbf16, #tpu.memory_space<vmem>>, %arg3: memref<1x256xf32, #tpu.memory_space<vmem>>, %arg4: memref<256x256xbf16, #tpu.memory_space<vmem>>, %arg5: memref<1x256xf32, #tpu.memory_space<vmem>>, %arg6: memref<256x256xbf16, #tpu.memory_space<vmem>>, %arg7: memref<1x256xf32, #tpu.memory_space<vmem>>, %arg8: memref<256x384xbf16, #tpu.memory_space<vmem>>, %arg9: memref<1x384xf32, #tpu.memory_space<vmem>>, %arg10: memref<128x384xf32, #tpu.memory_space<vmem>>) attributes {dimension_semantics = [#tpu.dimension_semantics<parallel>], iteration_bounds = array<i64: 2>, scalar_prefetch = 0 : i64, scratch_operands = 0 : i64, tpu.core_type = #tpu.core_type<tc>, window_params = [{transform_indices = @transform_0, window_bounds = array<i64: 128, 384>}, {pipeline_mode = #tpu.pipeline_mode<synchronous>, transform_indices = @transform_1, window_bounds = array<i64: 384, 256>}, {pipeline_mode = #tpu.pipeline_mode<synchronous>, transform_indices = @transform_2, window_bounds = array<i64: 1, 256>}, {pipeline_mode = #tpu.pipeline_mode<synchronous>, transform_indices = @transform_3, window_bounds = array<i64: 256, 256>}, {pipeline_mode = #tpu.pipeline_mode<synchronous>, transform_indices = @transform_4, window_bounds = array<i64: 1, 256>}, {pipeline_mode = #tpu.pipeline_mode<synchronous>, transform_indices = @transform_5, window_bounds = array<i64: 256, 256>}, {pipeline_mode = #tpu.pipeline_mode<synchronous>, transform_indices = @transform_6, window_bounds = array<i64: 1, 256>}, {pipeline_mode = #tpu.pipeline_mode<synchronous>, transform_indices = @transform_7, window_bounds = array<i64: 256, 384>}, {pipeline_mode = #tpu.pipeline_mode<synchronous>, transform_indices = @transform_8, window_bounds = array<i64: 1, 384>}, {transform_indices = @transform_9, window_bounds = array<i64: 128, 384>}]} {
    %c0 = arith.constant 0 : index
    %c0_0 = arith.constant 0 : index
    %0 = vector.load %arg1[%c0, %c0_0] : memref<128x384xf32, #tpu.memory_space<vmem>>, vector<128x384xf32>
    %1 = arith.truncf %0 : vector<128x384xf32> to vector<128x384xbf16>
    %c0_1 = arith.constant 0 : index
    %c0_2 = arith.constant 0 : index
    %2 = vector.load %arg2[%c0_1, %c0_2] : memref<384x256xbf16, #tpu.memory_space<vmem>>, vector<384x256xbf16>
    %cst = arith.constant dense<0.000000e+00> : vector<128x256xf32>
    %3 = tpu.matmul %1, %2, %cst {dimension_numbers = #tpu.dot_dimension_numbers<[1], [0], [0], [1], [0, 0, 1, 1], [], []>} : vector<128x384xbf16>, vector<384x256xbf16>, vector<128x256xf32> -> vector<128x256xf32>
    %c0_3 = arith.constant 0 : index
    %c0_4 = arith.constant 0 : index
    %4 = vector.load %arg3[%c0_3, %c0_4] : memref<1x256xf32, #tpu.memory_space<vmem>>, vector<1x256xf32>
    %5 = vector.broadcast %4 : vector<1x256xf32> to vector<128x256xf32>
    %6 = arith.addf %3, %5 : vector<128x256xf32>
    %cst_5 = arith.constant 0.000000e+00 : f32
    %7 = vector.broadcast %cst_5 : f32 to vector<128x256xf32>
    %8 = arith.maximumf %6, %7 : vector<128x256xf32>
    %9 = arith.truncf %8 : vector<128x256xf32> to vector<128x256xbf16>
    %c0_6 = arith.constant 0 : index
    %c0_7 = arith.constant 0 : index
    %10 = vector.load %arg4[%c0_6, %c0_7] : memref<256x256xbf16, #tpu.memory_space<vmem>>, vector<256x256xbf16>
    %cst_8 = arith.constant dense<0.000000e+00> : vector<128x256xf32>
    %11 = tpu.matmul %9, %10, %cst_8 {dimension_numbers = #tpu.dot_dimension_numbers<[1], [0], [0], [1], [0, 0, 1, 1], [], []>} : vector<128x256xbf16>, vector<256x256xbf16>, vector<128x256xf32> -> vector<128x256xf32>
    %c0_9 = arith.constant 0 : index
    %c0_10 = arith.constant 0 : index
    %12 = vector.load %arg5[%c0_9, %c0_10] : memref<1x256xf32, #tpu.memory_space<vmem>>, vector<1x256xf32>
    %13 = vector.broadcast %12 : vector<1x256xf32> to vector<128x256xf32>
    %14 = arith.addf %11, %13 : vector<128x256xf32>
    %15 = arith.truncf %14 : vector<128x256xf32> to vector<128x256xbf16>
    %c0_11 = arith.constant 0 : index
    %c0_12 = arith.constant 0 : index
    %16 = vector.load %arg6[%c0_11, %c0_12] : memref<256x256xbf16, #tpu.memory_space<vmem>>, vector<256x256xbf16>
    %cst_13 = arith.constant dense<0.000000e+00> : vector<128x256xf32>
    %17 = tpu.matmul %15, %16, %cst_13 {dimension_numbers = #tpu.dot_dimension_numbers<[1], [0], [0], [1], [0, 0, 1, 1], [], []>} : vector<128x256xbf16>, vector<256x256xbf16>, vector<128x256xf32> -> vector<128x256xf32>
    %c0_14 = arith.constant 0 : index
    %c0_15 = arith.constant 0 : index
    %18 = vector.load %arg7[%c0_14, %c0_15] : memref<1x256xf32, #tpu.memory_space<vmem>>, vector<1x256xf32>
    %19 = vector.broadcast %18 : vector<1x256xf32> to vector<128x256xf32>
    %20 = arith.addf %17, %19 : vector<128x256xf32>
    %cst_16 = arith.constant 0.000000e+00 : f32
    %21 = vector.broadcast %cst_16 : f32 to vector<128x256xf32>
    %22 = arith.maximumf %20, %21 : vector<128x256xf32>
    %23 = arith.truncf %22 : vector<128x256xf32> to vector<128x256xbf16>
    %c0_17 = arith.constant 0 : index
    %c0_18 = arith.constant 0 : index
    %24 = vector.load %arg8[%c0_17, %c0_18] : memref<256x384xbf16, #tpu.memory_space<vmem>>, vector<256x384xbf16>
    %cst_19 = arith.constant dense<0.000000e+00> : vector<128x384xf32>
    %25 = tpu.matmul %23, %24, %cst_19 {dimension_numbers = #tpu.dot_dimension_numbers<[1], [0], [0], [1], [0, 0, 1, 1], [], []>} : vector<128x256xbf16>, vector<256x384xbf16>, vector<128x384xf32> -> vector<128x384xf32>
    %c0_20 = arith.constant 0 : index
    %c0_21 = arith.constant 0 : index
    %26 = vector.load %arg9[%c0_20, %c0_21] : memref<1x384xf32, #tpu.memory_space<vmem>>, vector<1x384xf32>
    %27 = vector.broadcast %26 : vector<1x384xf32> to vector<128x384xf32>
    %28 = arith.addf %25, %27 : vector<128x384xf32>
    %c0_22 = arith.constant 0 : index
    %c0_23 = arith.constant 0 : index
    %29 = vector.load %arg10[%c0_22, %c0_23] : memref<128x384xf32, #tpu.memory_space<vmem>>, vector<128x384xf32>
    tpu.vector_store %arg10[%c0_22, %c0_23], %28 {strides = array<i32>} : memref<128x384xf32, #tpu.memory_space<vmem>>, vector<128x384xf32>,
    return
  }
  func.func @transform_0(%arg0: i32) -> (i32, i32) {
    %c0_i32 = arith.constant 0 : i32
    %c0_i32_0 = arith.constant 0 : i32
    return %arg0, %c0_i32 : i32, i32
  }
  func.func @transform_1(%arg0: i32) -> (i32, i32) {
    %c0_i32 = arith.constant 0 : i32
    %c0_i32_0 = arith.constant 0 : i32
    %c0_i32_1 = arith.constant 0 : i32
    return %c0_i32, %c0_i32_0 : i32, i32
  }
  func.func @transform_2(%arg0: i32) -> (i32, i32) {
    %c0_i32 = arith.constant 0 : i32
    %c0_i32_0 = arith.constant 0 : i32
    %c0_i32_1 = arith.constant 0 : i32
    return %c0_i32, %c0_i32_0 : i32, i32
  }
  func.func @transform_3(%arg0: i32) -> (i32, i32) {
    %c0_i32 = arith.constant 0 : i32
    %c0_i32_0 = arith.constant 0 : i32
    %c0_i32_1 = arith.constant 0 : i32
    return %c0_i32, %c0_i32_0 : i32, i32
  }
  func.func @transform_4(%arg0: i32) -> (i32, i32) {
    %c0_i32 = arith.constant 0 : i32
    %c0_i32_0 = arith.constant 0 : i32
    %c0_i32_1 = arith.constant 0 : i32
    return %c0_i32, %c0_i32_0 : i32, i32
  }
  func.func @transform_5(%arg0: i32) -> (i32, i32) {
    %c0_i32 = arith.constant 0 : i32
    %c0_i32_0 = arith.constant 0 : i32
    %c0_i32_1 = arith.constant 0 : i32
    return %c0_i32, %c0_i32_0 : i32, i32
  }
  func.func @transform_6(%arg0: i32) -> (i32, i32) {
    %c0_i32 = arith.constant 0 : i32
    %c0_i32_0 = arith.constant 0 : i32
    %c0_i32_1 = arith.constant 0 : i32
    return %c0_i32, %c0_i32_0 : i32, i32
  }
  func.func @transform_7(%arg0: i32) -> (i32, i32) {
    %c0_i32 = arith.constant 0 : i32
    %c0_i32_0 = arith.constant 0 : i32
    %c0_i32_1 = arith.constant 0 : i32
    return %c0_i32, %c0_i32_0 : i32, i32
  }
  func.func @transform_8(%arg0: i32) -> (i32, i32) {
    %c0_i32 = arith.constant 0 : i32
    %c0_i32_0 = arith.constant 0 : i32
    %c0_i32_1 = arith.constant 0 : i32
    return %c0_i32, %c0_i32_0 : i32, i32
  }
  func.func @transform_9(%arg0: i32) -> (i32, i32) {
    %c0_i32 = arith.constant 0 : i32
    %c0_i32_0 = arith.constant 0 : i32
    return %arg0, %c0_i32 : i32, i32
  }
}

</mosaic_0001>

<llo_original>
// kernel: tpu_custom_call.1
$region0: #{tpu_custom_call.1}
  #allocation0 [shape = 'u32[]', space=smem, size = 0x4, offset = 0x4, fixed_abs, tag = 'smem constant byte address 0x4 - core index']
  #allocation1 [shape = 'u32[144,128]{1,0:T(1,128)}', space=vmem, size = 0x12000, scoped, tag = 'internal scratch']
  %s0 = inlined_call_operand.hbm [shape: f32[256,384], index: 0, kind: input, shape index: {}]
  %s1 = inlined_call_operand.hbm [shape: bf16[384,256], index: 1, kind: input, shape index: {}]
  %s2 = inlined_call_operand.vmem [shape: f32[1,256], index: 2, kind: input, shape index: {}]
  %s3 = inlined_call_operand.hbm [shape: bf16[256,256], index: 3, kind: input, shape index: {}]
  %s4 = inlined_call_operand.vmem [shape: f32[1,256], index: 4, kind: input, shape index: {}]
  %s5 = inlined_call_operand.hbm [shape: bf16[256,256], index: 5, kind: input, shape index: {}]
  %s6 = inlined_call_operand.vmem [shape: f32[1,256], index: 6, kind: input, shape index: {}]
  %s7 = inlined_call_operand.hbm [shape: bf16[256,384], index: 7, kind: input, shape index: {}]
  %s8 = inlined_call_operand.vmem [shape: f32[1,384], index: 8, kind: input, shape index: {}]
  %s9 = inlined_call_operand.hbm [shape: f32[256,384], index: 9, kind: output, shape index: {}]
  %s10 = sld [smem:[#allocation0]]
  $region89: #{tpu_custom_call.1} parent=0
    _
  %s12 = ssub.s32 1, %s10
  %s13 = scalar_select 0, %s12, %s10
  $region1: #{tpu_custom_call.1} parent=0
    #allocation2 [shape = 'u8[393216]{0}', space=vmem, size = 0x60000, scoped, tag = 'input window, operand 0']
    #allocation3 [shape = 's32[2]{0}', space=sflag, size = 0x8, scoped, tag = 'scoped memory for tpu_custom_call.1']
    #allocation4 [shape = 's32[2]{0}', space=sflag, size = 0x8, scoped, tag = 'scoped memory for tpu_custom_call.1']
    #allocation5 [shape = 'u8[196608]{0}', space=vmem, size = 0x30000, scoped, tag = 'input window, operand 1, single buffered']
    #allocation6 [shape = 's32[1]{0}', space=sflag, size = 0x4, scoped, tag = 'scoped memory for tpu_custom_call.1']
    #allocation7 [shape = 'u8[131072]{0}', space=vmem, size = 0x20000, scoped, tag = 'input window, operand 3, single buffered']
    #allocation8 [shape = 'u8[131072]{0}', space=vmem, size = 0x20000, scoped, tag = 'input window, operand 5, single buffered']
    #allocation9 [shape = 's32[1]{0}', space=sflag, size = 0x4, scoped, tag = 'scoped memory for tpu_custom_call.1']
    #allocation10 [shape = 'u8[196608]{0}', space=vmem, size = 0x30000, scoped, tag = 'input window, operand 7, single buffered']
    #allocation11 [shape = 'u8[393216]{0}', space=vmem, size = 0x60000, scoped, tag = 'output window, operand 0']
    %14 = vsyncpa [#allocation3], 0
    %s15 = scalar_lea.sflag [#allocation3], 1
    %16 = vsyncpa %s15, 0
    %17 = vsyncpa [#allocation6], 0
    %18 = vsyncpa [#allocation9], 0
    %19 = vsyncpa [#allocation4], 0
    %s20 = scalar_lea.sflag [#allocation4], 1
    %21 = vsyncpa %s20, 0
    loop: start=0, step=1, limit=4
    $region2: #{tpu_custom_call.1} parent=1 // loop_pre_header
      _
    $region3: #{tpu_custom_call.1} parent=1 // loop_header
      %s23 = sphi 0, %s27
      %p24 = scmp.ge.s32.totalorder %s23, 4
      %s33 = sphi 0, %s35
      %s36 = sphi 0, %s33
      %s37 = sphi 0, %s36
      %s53 = sphi 0, %s37
      %s57 = sphi 0, %s57
      %s59 = sphi 0, %s57
      %s60 = sphi 0, %s59
      %s74 = sphi 0, %s60
      %s78 = sphi 0, %s78
      %s80 = sphi 0, %s78
      %s81 = sphi 0, %s80
      %s95 = sphi 0, %s81
      %s99 = sphi 0, %s99
      %s101 = sphi 0, %s99
      %s102 = sphi 0, %s101
      %s116 = sphi 0, %s102
      %s120 = sphi 0, %s120
      %s122 = sphi 0, %s120
      %s123 = sphi 0, %s122
      %s137 = sphi 0, %s123
      %s141 = sphi 0, %s141
      %s143 = sphi 0, %s141
      %s144 = sphi 0, %s143
      %s158 = sphi 0, %s144
      %s162 = sphi 0, %s162
      %s164 = sphi 0, %s162
      %s165 = sphi 0, %s164
      %s179 = sphi 0, %s165
      %s183 = sphi 0, %s183
      %s185 = sphi 0, %s183
      %s186 = sphi 0, %s185
      %s200 = sphi 0, %s186
      %s204 = sphi 0, %s204
      %s206 = sphi 0, %s204
      %s207 = sphi 0, %s206
      %s221 = sphi 0, %s207
      %s227 = sphi 0, %s229
      %s230 = sphi 0, %s227
      %s231 = sphi 0, %s230
      %s247 = sphi 0, %s231
    $region4: #{tpu_custom_call.1} parent=1 // loop_header_branch
      %26 = sbr.rel (%p24) target = $region8
    $region5: #{tpu_custom_call.1} parent=1 // loop_body
      %s28 = ssub.s32 %s23, 1
      %s29 = ssub.s32 %s23, 2
      %s30 = sadd.s32 %s23, 1
      %s31 = ssub.s32 %s23, %s30
      %p32 = scmp.eq.s32.totalorder %s31, 0
      %s34 = sadd.s32 %s33, 1
      %s35 = scalar_select %p32, %s33, %s34
      %p38 = pneg %p32
      %p39 = scmp.eq.s32.totalorder %s23, 1
      %p40 = por %p38, %p39
      %p41 = scmp.ne.s32.totalorder %s33, %s36
      %p42 = scmp.eq.s32.totalorder %s23, 0
      %p43 = por %p41, %p42
      %p44 = scmp.ne.s32.totalorder %s33, %s36
      %p45 = scmp.eq.s32.totalorder %s28, 1
      %p46 = por %p44, %p45
      %p47 = scmp.ne.s32.totalorder %s36, %s37
      %p48 = scmp.eq.s32.totalorder %s28, 0
      %p49 = por %p47, %p48
      %p50 = scmp.ne.s32.totalorder %s36, %s37
      %p51 = scmp.eq.s32.totalorder %s29, 1
      %p52 = por %p50, %p51
      %p54 = scmp.ne.s32.totalorder %s37, %s53
      %p55 = scmp.eq.s32.totalorder %s29, 0
      %p56 = por %p54, %p55
      %s58 = sadd.s32 %s57, 1
      %p61 = scmp.eq.s32.totalorder %s23, 1
      %p62 = scmp.ne.s32.totalorder %s57, %s59
      %p63 = scmp.eq.s32.totalorder %s23, 0
      %p64 = por %p62, %p63
      %p65 = scmp.ne.s32.totalorder %s57, %s59
      %p66 = scmp.eq.s32.totalorder %s28, 1
      %p67 = por %p65, %p66
      %p68 = scmp.ne.s32.totalorder %s59, %s60
      %p69 = scmp.eq.s32.totalorder %s28, 0
      %p70 = por %p68, %p69
      %p71 = scmp.ne.s32.totalorder %s59, %s60
      %p72 = scmp.eq.s32.totalorder %s29, 1
      %p73 = por %p71, %p72
      %p75 = scmp.ne.s32.totalorder %s60, %s74
      %p76 = scmp.eq.s32.totalorder %s29, 0
      %p77 = por %p75, %p76
      %s79 = sadd.s32 %s78, 1
      %p82 = scmp.eq.s32.totalorder %s23, 1
      %p83 = scmp.ne.s32.totalorder %s78, %s80
      %p84 = scmp.eq.s32.totalorder %s23, 0
      %p85 = por %p83, %p84
      %p86 = scmp.ne.s32.totalorder %s78, %s80
      %p87 = scmp.eq.s32.totalorder %s28, 1
      %p88 = por %p86, %p87
      %p89 = scmp.ne.s32.totalorder %s80, %s81
      %p90 = scmp.eq.s32.totalorder %s28, 0
      %p91 = por %p89, %p90
      %p92 = scmp.ne.s32.totalorder %s80, %s81
      %p93 = scmp.eq.s32.totalorder %s29, 1
      %p94 = por %p92, %p93
      %p96 = scmp.ne.s32.totalorder %s81, %s95
      %p97 = scmp.eq.s32.totalorder %s29, 0
      %p98 = por %p96, %p97
      %s100 = sadd.s32 %s99, 1
      %p103 = scmp.eq.s32.totalorder %s23, 1
      %p104 = scmp.ne.s32.totalorder %s99, %s101
      %p105 = scmp.eq.s32.totalorder %s23, 0
      %p106 = por %p104, %p105
      %p107 = scmp.ne.s32.totalorder %s99, %s101
      %p108 = scmp.eq.s32.totalorder %s28, 1
      %p109 = por %p107, %p108
      %p110 = scmp.ne.s32.totalorder %s101, %s102
      %p111 = scmp.eq.s32.totalorder %s28, 0
      %p112 = por %p110, %p111
      %p113 = scmp.ne.s32.totalorder %s101, %s102
      %p114 = scmp.eq.s32.totalorder %s29, 1
      %p115 = por %p113, %p114
      %p117 = scmp.ne.s32.totalorder %s102, %s116
      %p118 = scmp.eq.s32.totalorder %s29, 0
      %p119 = por %p117, %p118
      %s121 = sadd.s32 %s120, 1
      %p124 = scmp.eq.s32.totalorder %s23, 1
      %p125 = scmp.ne.s32.totalorder %s120, %s122
      %p126 = scmp.eq.s32.totalorder %s23, 0
      %p127 = por %p125, %p126
      %p128 = scmp.ne.s32.totalorder %s120, %s122
      %p129 = scmp.eq.s32.totalorder %s28, 1
      %p130 = por %p128, %p129
      %p131 = scmp.ne.s32.totalorder %s122, %s123
      %p132 = scmp.eq.s32.totalorder %s28, 0
      %p133 = por %p131, %p132
      %p134 = scmp.ne.s32.totalorder %s122, %s123
      %p135 = scmp.eq.s32.totalorder %s29, 1
      %p136 = por %p134, %p135
      %p138 = scmp.ne.s32.totalorder %s123, %s137
      %p139 = scmp.eq.s32.totalorder %s29, 0
      %p140 = por %p138, %p139
      %s142 = sadd.s32 %s141, 1
      %p145 = scmp.eq.s32.totalorder %s23, 1
      %p146 = scmp.ne.s32.totalorder %s141, %s143
      %p147 = scmp.eq.s32.totalorder %s23, 0
      %p148 = por %p146, %p147
      %p149 = scmp.ne.s32.totalorder %s141, %s143
      %p150 = scmp.eq.s32.totalorder %s28, 1
      %p151 = por %p149, %p150
      %p152 = scmp.ne.s32.totalorder %s143, %s144
      %p153 = scmp.eq.s32.totalorder %s28, 0
      %p154 = por %p152, %p153
      %p155 = scmp.ne.s32.totalorder %s143, %s144
      %p156 = scmp.eq.s32.totalorder %s29, 1
      %p157 = por %p155, %p156
      %p159 = scmp.ne.s32.totalorder %s144, %s158
      %p160 = scmp.eq.s32.totalorder %s29, 0
      %p161 = por %p159, %p160
      %s163 = sadd.s32 %s162, 1
      %p166 = scmp.eq.s32.totalorder %s23, 1
      %p167 = scmp.ne.s32.totalorder %s162, %s164
      %p168 = scmp.eq.s32.totalorder %s23, 0
      %p169 = por %p167, %p168
      %p170 = scmp.ne.s32.totalorder %s162, %s164
      %p171 = scmp.eq.s32.totalorder %s28, 1
      %p172 = por %p170, %p171
      %p173 = scmp.ne.s32.totalorder %s164, %s165
      %p174 = scmp.eq.s32.totalorder %s28, 0
      %p175 = por %p173, %p174
      %p176 = scmp.ne.s32.totalorder %s164, %s165
      %p177 = scmp.eq.s32.totalorder %s29, 1
      %p178 = por %p176, %p177
      %p180 = scmp.ne.s32.totalorder %s165, %s179
      %p181 = scmp.eq.s32.totalorder %s29, 0
      %p182 = por %p180, %p181
      %s184 = sadd.s32 %s183, 1
      %p187 = scmp.eq.s32.totalorder %s23, 1
      %p188 = scmp.ne.s32.totalorder %s183, %s185
      %p189 = scmp.eq.s32.totalorder %s23, 0
      %p190 = por %p188, %p189
      %p191 = scmp.ne.s32.totalorder %s183, %s185
      %p192 = scmp.eq.s32.totalorder %s28, 1
      %p193 = por %p191, %p192
      %p194 = scmp.ne.s32.totalorder %s185, %s186
      %p195 = scmp.eq.s32.totalorder %s28, 0
      %p196 = por %p194, %p195
      %p197 = scmp.ne.s32.totalorder %s185, %s186
      %p198 = scmp.eq.s32.totalorder %s29, 1
      %p199 = por %p197, %p198
      %p201 = scmp.ne.s32.totalorder %s186, %s200
      %p202 = scmp.eq.s32.totalorder %s29, 0
      %p203 = por %p201, %p202
      %s205 = sadd.s32 %s204, 1
      %p208 = scmp.eq.s32.totalorder %s23, 1
      %p209 = scmp.ne.s32.totalorder %s204, %s206
      %p210 = scmp.eq.s32.totalorder %s23, 0
      %p211 = por %p209, %p210
      %p212 = scmp.ne.s32.totalorder %s204, %s206
      %p213 = scmp.eq.s32.totalorder %s28, 1
      %p214 = por %p212, %p213
      %p215 = scmp.ne.s32.totalorder %s206, %s207
      %p216 = scmp.eq.s32.totalorder %s28, 0
      %p217 = por %p215, %p216
      %p218 = scmp.ne.s32.totalorder %s206, %s207
      %p219 = scmp.eq.s32.totalorder %s29, 1
      %p220 = por %p218, %p219
      %p222 = scmp.ne.s32.totalorder %s207, %s221
      %p223 = scmp.eq.s32.totalorder %s29, 0
      %p224 = por %p222, %p223
      %s225 = ssub.s32 %s23, %s30
      %p226 = scmp.eq.s32.totalorder %s225, 0
      %s228 = sadd.s32 %s227, 1
      %s229 = scalar_select %p226, %s227, %s228
      %p232 = pneg %p226
      %p233 = scmp.eq.s32.totalorder %s23, 1
      %p234 = por %p232, %p233
      %p235 = scmp.ne.s32.totalorder %s227, %s230
      %p236 = scmp.eq.s32.totalorder %s23, 0
      %p237 = por %p235, %p236
      %p238 = scmp.ne.s32.totalorder %s227, %s230
      %p239 = scmp.eq.s32.totalorder %s28, 1
      %p240 = por %p238, %p239
      %p241 = scmp.ne.s32.totalorder %s230, %s231
      %p242 = scmp.eq.s32.totalorder %s28, 0
      %p243 = por %p241, %p242
      %p244 = scmp.ne.s32.totalorder %s230, %s231
      %p245 = scmp.eq.s32.totalorder %s29, 1
      %p246 = por %p244, %p245
      %p248 = scmp.ne.s32.totalorder %s231, %s247
      %p249 = scmp.eq.s32.totalorder %s29, 0
      %p250 = por %p248, %p249
      %p251 = scmp.le.s32.totalorder 1, %s23
      %p252 = scmp.lt.s32.totalorder %s23, 3
      %p253 = pnand %p251, %p252
      %p254 = pneg %p253
      // Predicated region
      $region9: #{tpu_custom_call.1} parent=5 // pred_check
        _
      $region10: #{tpu_custom_call.1} parent=5 // pred_check_branch
        %256 = sbr.rel (%p253) target = $region12
      $region11: #{tpu_custom_call.1} parent=5 // pred_region
        %s257 = ssub.s32 %s23, 1
        // Predicated region
        $region13: #{tpu_custom_call.1} parent=11 // pred_check
          %p258 = pneg %p70
        $region14: #{tpu_custom_call.1} parent=11 // pred_check_branch
          %260 = sbr.rel (%p258) target = $region16
        $region15: #{tpu_custom_call.1} parent=11 // pred_region
          %s262 = ssub.s32 6144, 6144
          %263 = vsyncadd [#allocation6], %s262
          %s264 = sshll.u32 [#allocation5], 4
          %s265 = int_to_ptr.vmem [resolvable:$true] %s264
          %270 = dma.hbm_to_vmem [thread:$0]  %s1, 6144, %s265, [#allocation6], 128, 128, 8
        $region16: #{tpu_custom_call.1} parent=11 // pred_fallthru
          _
        // Predicated region
        $region17: #{tpu_custom_call.1} parent=11 // pred_check
          %p271 = pneg %p91
        $region18: #{tpu_custom_call.1} parent=11 // pred_check_branch
          %273 = sbr.rel (%p271) target = $region20
        $region19: #{tpu_custom_call.1} parent=11 // pred_region
          _
        $region20: #{tpu_custom_call.1} parent=11 // pred_fallthru
          _
        // Predicated region
        $region21: #{tpu_custom_call.1} parent=11 // pred_check
          %p274 = pneg %p112
        $region22: #{tpu_custom_call.1} parent=11 // pred_check_branch
          %276 = sbr.rel (%p274) target = $region24
        $region23: #{tpu_custom_call.1} parent=11 // pred_region
          %s278 = ssub.s32 4096, 4096
          %279 = vsyncadd [#allocation6], %s278
          %s280 = sshll.u32 [#allocation7], 4
          %s281 = int_to_ptr.vmem [resolvable:$true] %s280
          %286 = dma.hbm_to_vmem [thread:$0]  %s3, 4096, %s281, [#allocation6], 128, 128, 8
        $region24: #{tpu_custom_call.1} parent=11 // pred_fallthru
          _
        // Predicated region
        $region25: #{tpu_custom_call.1} parent=11 // pred_check
          %p287 = pneg %p133
        $region26: #{tpu_custom_call.1} parent=11 // pred_check_branch
          %289 = sbr.rel (%p287) target = $region28
        $region27: #{tpu_custom_call.1} parent=11 // pred_region
          _
        $region28: #{tpu_custom_call.1} parent=11 // pred_fallthru
          _
        // Predicated region
        $region29: #{tpu_custom_call.1} parent=11 // pred_check
          %p290 = pneg %p154
        $region30: #{tpu_custom_call.1} parent=11 // pred_check_branch
          %292 = sbr.rel (%p290) target = $region32
        $region31: #{tpu_custom_call.1} parent=11 // pred_region
          %s294 = ssub.s32 4096, 4096
          %295 = vsyncadd [#allocation9], %s294
          %s296 = sshll.u32 [#allocation8], 4
          %s297 = int_to_ptr.vmem [resolvable:$true] %s296
          %302 = dma.hbm_to_vmem [thread:$0]  %s5, 4096, %s297, [#allocation9], 128, 128, 8
        $region32: #{tpu_custom_call.1} parent=11 // pred_fallthru
          _
        // Predicated region
        $region33: #{tpu_custom_call.1} parent=11 // pred_check
          %p303 = pneg %p175
        $region34: #{tpu_custom_call.1} parent=11 // pred_check_branch
          %305 = sbr.rel (%p303) target = $region36
        $region35: #{tpu_custom_call.1} parent=11 // pred_region
          _
        $region36: #{tpu_custom_call.1} parent=11 // pred_fallthru
          _
        // Predicated region
        $region37: #{tpu_custom_call.1} parent=11 // pred_check
          %p306 = pneg %p196
        $region38: #{tpu_custom_call.1} parent=11 // pred_check_branch
          %308 = sbr.rel (%p306) target = $region40
        $region39: #{tpu_custom_call.1} parent=11 // pred_region
          %s310 = ssub.s32 6144, 6144
          %311 = vsyncadd [#allocation9], %s310
          %s312 = sshll.u32 [#allocation10], 4
          %s313 = int_to_ptr.vmem [resolvable:$true] %s312
          %318 = dma.hbm_to_vmem [thread:$0]  %s7, 6144, %s313, [#allocation9], 192, 192, 12
        $region40: #{tpu_custom_call.1} parent=11 // pred_fallthru
          _
        // Predicated region
        $region41: #{tpu_custom_call.1} parent=11 // pred_check
          %p319 = pneg %p217
        $region42: #{tpu_custom_call.1} parent=11 // pred_check_branch
          %321 = sbr.rel (%p319) target = $region44
        $region43: #{tpu_custom_call.1} parent=11 // pred_region
          _
        $region44: #{tpu_custom_call.1} parent=11 // pred_fallthru
          _
      $region12: #{tpu_custom_call.1} parent=5 // pred_fallthru
        _
      %p322 = scmp.lt.s32.totalorder %s23, 2
      // Predicated region
      $region45: #{tpu_custom_call.1} parent=5 // pred_check
        %p323 = pneg %p322
      $region46: #{tpu_custom_call.1} parent=5 // pred_check_branch
        %325 = sbr.rel (%p323) target = $region48
      $region47: #{tpu_custom_call.1} parent=5 // pred_region
        // Predicated region
        $region49: #{tpu_custom_call.1} parent=47 // pred_check
          %p326 = pneg %p43
        $region50: #{tpu_custom_call.1} parent=47 // pred_check_branch
          %328 = sbr.rel (%p326) target = $region52
        $region51: #{tpu_custom_call.1} parent=47 // pred_region
          %s329 = sand.u32 %s33, 1
          %s330 = scalar_lea.sflag [#allocation3], %s329
          %s331 = sand.u32 %s33, 1
          %s332 = smul.addr %s331, 384
          %s333 = scalar_lea.vmem [#allocation2], %s332
          %s334 = smul.u32 16, %s23
          %s336 = ssub.s32 6144, 6144
          %337 = vsyncadd %s330, %s336
          %s338 = smul.addr %s334, 3
          %s339 = smul.addr %s338, 128
          %s340 = scalar_lea.hbm %s0, %s339
          %s341 = sshll.u32 %s333, 4
          %s342 = int_to_ptr.vmem [resolvable:$true] %s341
          %347 = dma.hbm_to_vmem [thread:$0]  %s340, 6144, %s342, %s330, 384, 384, 24
        $region52: #{tpu_custom_call.1} parent=47 // pred_fallthru
          _
      $region48: #{tpu_custom_call.1} parent=5 // pred_fallthru
        _
      %p348 = scmp.le.s32.totalorder 1, %s23
      %p349 = scmp.lt.s32.totalorder %s23, 3
      %p350 = pnand %p348, %p349
      %p351 = pneg %p350
      // Predicated region
      $region53: #{tpu_custom_call.1} parent=5 // pred_check
        _
      $region54: #{tpu_custom_call.1} parent=5 // pred_check_branch
        %353 = sbr.rel (%p350) target = $region56
      $region55: #{tpu_custom_call.1} parent=5 // pred_region
        %s354 = ssub.s32 %s23, 1
        %s355 = sand.u32 %s36, 1
        %s356 = scalar_lea.sflag [#allocation3], %s355
        %s357 = sand.u32 %s36, 1
        %s358 = smul.addr %s357, 384
        %s359 = scalar_lea.vmem [#allocation2], %s358
        // Predicated region
        $region57: #{tpu_custom_call.1} parent=55 // pred_check
          %p360 = pneg %p49
        $region58: #{tpu_custom_call.1} parent=55 // pred_check_branch
          %362 = sbr.rel (%p360) target = $region60
        $region59: #{tpu_custom_call.1} parent=55 // pred_region
          %363 = dma.done %s356, 6144
        $region60: #{tpu_custom_call.1} parent=55 // pred_fallthru
          _
        // Predicated region
        $region61: #{tpu_custom_call.1} parent=55 // pred_check
          %p364 = pneg %p70
        $region62: #{tpu_custom_call.1} parent=55 // pred_check_branch
          %366 = sbr.rel (%p364) target = $region64
        $region63: #{tpu_custom_call.1} parent=55 // pred_region
          %367 = dma.done [#allocation6], 6144
        $region64: #{tpu_custom_call.1} parent=55 // pred_fallthru
          _
        // Predicated region
        $region65: #{tpu_custom_call.1} parent=55 // pred_check
          %p368 = pneg %p112
        $region66: #{tpu_custom_call.1} parent=55 // pred_check_branch
          %370 = sbr.rel (%p368) target = $region68
        $region67: #{tpu_custom_call.1} parent=55 // pred_region
          %371 = dma.done [#allocation6], 4096
        $region68: #{tpu_custom_call.1} parent=55 // pred_fallthru
          _
        // Predicated region
        $region69: #{tpu_custom_call.1} parent=55 // pred_check
          %p372 = pneg %p154
        $region70: #{tpu_custom_call.1} parent=55 // pred_check_branch
          %374 = sbr.rel (%p372) target = $region72
        $region71: #{tpu_custom_call.1} parent=55 // pred_region
          %375 = dma.done [#allocation9], 4096
        $region72: #{tpu_custom_call.1} parent=55 // pred_fallthru
          _
        // Predicated region
        $region73: #{tpu_custom_call.1} parent=55 // pred_check
          %p376 = pneg %p196
        $region74: #{tpu_custom_call.1} parent=55 // pred_check_branch
          %378 = sbr.rel (%p376) target = $region76
        $region75: #{tpu_custom_call.1} parent=55 // pred_region
          %379 = dma.done [#allocation9], 6144
        $region76: #{tpu_custom_call.1} parent=55 // pred_fallthru
          _
        %s380 = sand.u32 %s36, 1
        %s381 = scalar_lea.sflag [#allocation3], %s380
        %s382 = sand.u32 %s36, 1
        %s383 = smul.addr %s382, 384
        %s384 = scalar_lea.vmem [#allocation2], %s383
        %p385 = pneg %p49
        %p386 = pneg %p46
        %p387 = pneg %p70
        %p388 = pneg %p67
        %p389 = pneg %p91
        %p390 = pneg %p88
        %p391 = pneg %p112
        %p392 = pneg %p109
        %p393 = pneg %p133
        %p394 = pneg %p130
        %p395 = pneg %p154
        %p396 = pneg %p151
        %p397 = pneg %p175
        %p398 = pneg %p172
        %p399 = pneg %p196
        %p400 = pneg %p193
        %p401 = pneg %p217
        %p402 = pneg %p214
        %p403 = pneg %p243
        %p404 = pneg %p240
        %s405 = sand.u32 %s230, 1
        %s406 = scalar_lea.sflag [#allocation4], %s405
        %s407 = sand.u32 %s230, 1
        %s408 = smul.addr %s407, 384
        %s409 = scalar_lea.vmem [#allocation11], %s408
        %s410 = smul.u32 16, %s28
        %s411 = smul.u32 16, %s28
        %v413 = vld [vmem:[%s359] sm:$0xff]
        %v414 = vld [vmem:[%s359 + $0x8] sm:$0xff]
        %v415 = vld [vmem:[%s359 + $0x10] sm:$0xff]
        %v416 = vld [vmem:[%s359 + $0x18] sm:$0xff]
        %v417 = vld [vmem:[%s359 + $0x20] sm:$0xff]
        %v418 = vld [vmem:[%s359 + $0x28] sm:$0xff]
        %v419 = vld [vmem:[%s359 + $0x30] sm:$0xff]
        %v420 = vld [vmem:[%s359 + $0x38] sm:$0xff]
        %v421 = vld [vmem:[%s359 + $0x40] sm:$0xff]
        %v422 = vld [vmem:[%s359 + $0x48] sm:$0xff]
        %v423 = vld [vmem:[%s359 + $0x50] sm:$0xff]
        %v424 = vld [vmem:[%s359 + $0x58] sm:$0xff]
        %v425 = vld [vmem:[%s359 + $0x60] sm:$0xff]
        %v426 = vld [vmem:[%s359 + $0x68] sm:$0xff]
        %v427 = vld [vmem:[%s359 + $0x70] sm:$0xff]
        %v428 = vld [vmem:[%s359 + $0x78] sm:$0xff]
        %v429 = vld [vmem:[%s359 + $0x80] sm:$0xff]
        %v430 = vld [vmem:[%s359 + $0x88] sm:$0xff]
        %v431 = vld [vmem:[%s359 + $0x90] sm:$0xff]
        %v432 = vld [vmem:[%s359 + $0x98] sm:$0xff]
        %v433 = vld [vmem:[%s359 + $0xa0] sm:$0xff]
        %v434 = vld [vmem:[%s359 + $0xa8] sm:$0xff]
        %v435 = vld [vmem:[%s359 + $0xb0] sm:$0xff]
        %v436 = vld [vmem:[%s359 + $0xb8] sm:$0xff]
        %v437 = vld [vmem:[%s359 + $0xc0] sm:$0xff]
        %v438 = vld [vmem:[%s359 + $0xc8] sm:$0xff]
        %v439 = vld [vmem:[%s359 + $0xd0] sm:$0xff]
        %v440 = vld [vmem:[%s359 + $0xd8] sm:$0xff]
        %v441 = vld [vmem:[%s359 + $0xe0] sm:$0xff]
        %v442 = vld [vmem:[%s359 + $0xe8] sm:$0xff]
        %v443 = vld [vmem:[%s359 + $0xf0] sm:$0xff]
        %v444 = vld [vmem:[%s359 + $0xf8] sm:$0xff]
        %v445 = vld [vmem:[%s359 + $0x100] sm:$0xff]
        %v446 = vld [vmem:[%s359 + $0x108] sm:$0xff]
        %v447 = vld [vmem:[%s359 + $0x110] sm:$0xff]
        %v448 = vld [vmem:[%s359 + $0x118] sm:$0xff]
        %v449 = vld [vmem:[%s359 + $0x120] sm:$0xff]
        %v450 = vld [vmem:[%s359 + $0x128] sm:$0xff]
        %v451 = vld [vmem:[%s359 + $0x130] sm:$0xff]
        %v452 = vld [vmem:[%s359 + $0x138] sm:$0xff]
        %v453 = vld [vmem:[%s359 + $0x140] sm:$0xff]
        %v454 = vld [vmem:[%s359 + $0x148] sm:$0xff]
        %v455 = vld [vmem:[%s359 + $0x150] sm:$0xff]
        %v456 = vld [vmem:[%s359 + $0x158] sm:$0xff]
        %v457 = vld [vmem:[%s359 + $0x160] sm:$0xff]
        %v458 = vld [vmem:[%s359 + $0x168] sm:$0xff]
        %v459 = vld [vmem:[%s359 + $0x170] sm:$0xff]
        %v460 = vld [vmem:[%s359 + $0x178] sm:$0xff]
        %v461 = vpack.c.bf16 %v416, %v413
        %v462 = vpack.c.bf16 %v417, %v414
        %v463 = vpack.c.bf16 %v418, %v415
        %v464 = vpack.c.bf16 %v422, %v419
        %v465 = vpack.c.bf16 %v423, %v420
        %v466 = vpack.c.bf16 %v424, %v421
        %v467 = vpack.c.bf16 %v428, %v425
        %v468 = vpack.c.bf16 %v429, %v426
        %v469 = vpack.c.bf16 %v430, %v427
        %v470 = vpack.c.bf16 %v434, %v431
        %v471 = vpack.c.bf16 %v435, %v432
        %v472 = vpack.c.bf16 %v436, %v433
        %v473 = vpack.c.bf16 %v440, %v437
        %v474 = vpack.c.bf16 %v441, %v438
        %v475 = vpack.c.bf16 %v442, %v439
        %v476 = vpack.c.bf16 %v446, %v443
        %v477 = vpack.c.bf16 %v447, %v444
        %v478 = vpack.c.bf16 %v448, %v445
        %v479 = vpack.c.bf16 %v452, %v449
        %v480 = vpack.c.bf16 %v453, %v450
        %v481 = vpack.c.bf16 %v454, %v451
        %v482 = vpack.c.bf16 %v458, %v455
        %v483 = vpack.c.bf16 %v459, %v456
        %v484 = vpack.c.bf16 %v460, %v457
        %v485 = vld [vmem:[#allocation5] sm:$0xff]
        %v486 = vld [vmem:[#allocation5 + $0x8] sm:$0xff]
        %v487 = vld [vmem:[#allocation5 + $0x10] sm:$0xff]
        %v488 = vld [vmem:[#allocation5 + $0x18] sm:$0xff]
        %v489 = vld [vmem:[#allocation5 + $0x20] sm:$0xff]
        %v490 = vld [vmem:[#allocation5 + $0x28] sm:$0xff]
        %v491 = vld [vmem:[#allocation5 + $0x30] sm:$0xff]
        %v492 = vld [vmem:[#allocation5 + $0x38] sm:$0xff]
        %v493 = vld [vmem:[#allocation5 + $0x40] sm:$0xff]
        %v494 = vld [vmem:[#allocation5 + $0x48] sm:$0xff]
        %v495 = vld [vmem:[#allocation5 + $0x50] sm:$0xff]
        %v496 = vld [vmem:[#allocation5 + $0x58] sm:$0xff]
        %v497 = vld [vmem:[#allocation5 + $0x60] sm:$0xff]
        %v498 = vld [vmem:[#allocation5 + $0x68] sm:$0xff]
        %v499 = vld [vmem:[#allocation5 + $0x70] sm:$0xff]
        %v500 = vld [vmem:[#allocation5 + $0x78] sm:$0xff]
        %v501 = vld [vmem:[#allocation5 + $0x80] sm:$0xff]
        %v502 = vld [vmem:[#allocation5 + $0x88] sm:$0xff]
        %v503 = vld [vmem:[#allocation5 + $0x90] sm:$0xff]
        %v504 = vld [vmem:[#allocation5 + $0x98] sm:$0xff]
        %v505 = vld [vmem:[#allocation5 + $0xa0] sm:$0xff]
        %v506 = vld [vmem:[#allocation5 + $0xa8] sm:$0xff]
        %v507 = vld [vmem:[#allocation5 + $0xb0] sm:$0xff]
        %v508 = vld [vmem:[#allocation5 + $0xb8] sm:$0xff]
        %v509 = vld [vmem:[#allocation5 + $0xc0] sm:$0xff]
        %v510 = vld [vmem:[#allocation5 + $0xc8] sm:$0xff]
        %v511 = vld [vmem:[#allocation5 + $0xd0] sm:$0xff]
        %v512 = vld [vmem:[#allocation5 + $0xd8] sm:$0xff]
        %v513 = vld [vmem:[#allocation5 + $0xe0] sm:$0xff]
        %v514 = vld [vmem:[#allocation5 + $0xe8] sm:$0xff]
        %v515 = vld [vmem:[#allocation5 + $0xf0] sm:$0xff]
        %v516 = vld [vmem:[#allocation5 + $0xf8] sm:$0xff]
        %v517 = vld [vmem:[#allocation5 + $0x100] sm:$0xff]
        %v518 = vld [vmem:[#allocation5 + $0x108] sm:$0xff]
        %v519 = vld [vmem:[#allocation5 + $0x110] sm:$0xff]
        %v520 = vld [vmem:[#allocation5 + $0x118] sm:$0xff]
        %v521 = vld [vmem:[#allocation5 + $0x120] sm:$0xff]
        %v522 = vld [vmem:[#allocation5 + $0x128] sm:$0xff]
        %v523 = vld [vmem:[#allocation5 + $0x130] sm:$0xff]
        %v524 = vld [vmem:[#allocation5 + $0x138] sm:$0xff]
        %v525 = vld [vmem:[#allocation5 + $0x140] sm:$0xff]
        %v526 = vld [vmem:[#allocation5 + $0x148] sm:$0xff]
        %v527 = vld [vmem:[#allocation5 + $0x150] sm:$0xff]
        %v528 = vld [vmem:[#allocation5 + $0x158] sm:$0xff]
        %v529 = vld [vmem:[#allocation5 + $0x160] sm:$0xff]
        %v530 = vld [vmem:[#allocation5 + $0x168] sm:$0xff]
        %v531 = vld [vmem:[#allocation5 + $0x170] sm:$0xff]
        %v532 = vld [vmem:[#allocation5 + $0x178] sm:$0xff]
        %v533 = vld [vmem:[%s2] sm:$0x3]
        %v535 = vlaneseq
        %v536 = vshrl.u32 %v535, 7
        %v537 = vsub.s32 0, %v536
        %v538 = vrot.slane %v533, %v537
        %v539 = vlaneseq
        %v540 = vshrl.u32 %v539, 7
        %v541 = vsub.s32 1, %v540
        %v542 = vrot.slane %v533, %v541
        %v593 = vunpack.c.l.b16 %v485
        %v594 = vunpack.c.h.b16 %v485
        %v595 = vunpack.c.l.b16 %v486
        %v596 = vunpack.c.h.b16 %v486
        %v597 = vunpack.c.l.b16 %v487
        %v598 = vunpack.c.h.b16 %v487
        %v599 = vunpack.c.l.b16 %v488
        %v600 = vunpack.c.h.b16 %v488
        %v601 = vunpack.c.l.b16 %v489
        %v602 = vunpack.c.h.b16 %v489
        %v603 = vunpack.c.l.b16 %v490
        %v604 = vunpack.c.h.b16 %v490
        %v605 = vunpack.c.l.b16 %v491
        %v606 = vunpack.c.h.b16 %v491
        %v607 = vunpack.c.l.b16 %v492
        %v608 = vunpack.c.h.b16 %v492
        %v609 = vunpack.c.l.b16 %v493
        %v610 = vunpack.c.h.b16 %v493
        %v611 = vunpack.c.l.b16 %v494
        %v612 = vunpack.c.h.b16 %v494
        %v613 = vunpack.c.l.b16 %v495
        %v614 = vunpack.c.h.b16 %v495
        %v615 = vunpack.c.l.b16 %v496
        %v616 = vunpack.c.h.b16 %v496
        %v617 = vunpack.c.l.b16 %v497
        %v618 = vunpack.c.h.b16 %v497
        %v619 = vunpack.c.l.b16 %v498
        %v620 = vunpack.c.h.b16 %v498
        %v621 = vunpack.c.l.b16 %v499
        %v622 = vunpack.c.h.b16 %v499
        %v623 = vunpack.c.l.b16 %v500
        %v624 = vunpack.c.h.b16 %v500
        %v625 = vunpack.c.l.b16 %v501
        %v626 = vunpack.c.h.b16 %v501
        %v627 = vunpack.c.l.b16 %v502
        %v628 = vunpack.c.h.b16 %v502
        %v629 = vunpack.c.l.b16 %v503
        %v630 = vunpack.c.h.b16 %v503
        %v631 = vunpack.c.l.b16 %v504
        %v632 = vunpack.c.h.b16 %v504
        %v633 = vunpack.c.l.b16 %v505
        %v634 = vunpack.c.h.b16 %v505
        %v635 = vunpack.c.l.b16 %v506
        %v636 = vunpack.c.h.b16 %v506
        %v637 = vunpack.c.l.b16 %v507
        %v638 = vunpack.c.h.b16 %v507
        %v639 = vunpack.c.l.b16 %v508
        %v640 = vunpack.c.h.b16 %v508
        %v641 = vunpack.c.l.b16 %v509
        %v642 = vunpack.c.h.b16 %v509
        %v643 = vunpack.c.l.b16 %v510
        %v644 = vunpack.c.h.b16 %v510
        %v645 = vunpack.c.l.b16 %v511
        %v646 = vunpack.c.h.b16 %v511
        %v647 = vunpack.c.l.b16 %v512
        %v648 = vunpack.c.h.b16 %v512
        %v649 = vunpack.c.l.b16 %v513
        %v650 = vunpack.c.h.b16 %v513
        %v651 = vunpack.c.l.b16 %v514
        %v652 = vunpack.c.h.b16 %v514
        %v653 = vunpack.c.l.b16 %v515
        %v654 = vunpack.c.h.b16 %v515
        %v655 = vunpack.c.l.b16 %v516
        %v656 = vunpack.c.h.b16 %v516
        %v657 = vunpack.c.l.b16 %v517
        %v658 = vunpack.c.h.b16 %v517
        %v659 = vunpack.c.l.b16 %v518
        %v660 = vunpack.c.h.b16 %v518
        %v661 = vunpack.c.l.b16 %v519
        %v662 = vunpack.c.h.b16 %v519
        %v663 = vunpack.c.l.b16 %v520
        %v664 = vunpack.c.h.b16 %v520
        %v665 = vunpack.c.l.b16 %v521
        %v666 = vunpack.c.h.b16 %v521
        %v667 = vunpack.c.l.b16 %v522
        %v668 = vunpack.c.h.b16 %v522
        %v669 = vunpack.c.l.b16 %v523
        %v670 = vunpack.c.h.b16 %v523
        %v671 = vunpack.c.l.b16 %v524
        %v672 = vunpack.c.h.b16 %v524
        %v673 = vunpack.c.l.b16 %v525
        %v674 = vunpack.c.h.b16 %v525
        %v675 = vunpack.c.l.b16 %v526
        %v676 = vunpack.c.h.b16 %v526
        %v677 = vunpack.c.l.b16 %v527
        %v678 = vunpack.c.h.b16 %v527
        %v679 = vunpack.c.l.b16 %v528
        %v680 = vunpack.c.h.b16 %v528
        %v681 = vunpack.c.l.b16 %v529
        %v682 = vunpack.c.h.b16 %v529
        %v683 = vunpack.c.l.b16 %v530
        %v684 = vunpack.c.h.b16 %v530
        %v685 = vunpack.c.l.b16 %v531
        %v686 = vunpack.c.h.b16 %v531
        %v687 = vunpack.c.l.b16 %v532
        %v688 = vunpack.c.h.b16 %v532
        %v689 = vpack.c.b16 %v595, %v593
        %v690 = vpack.c.b16 %v596, %v594
        %v691 = vpack.c.b16 %v599, %v597
        %v692 = vpack.c.b16 %v600, %v598
        %v693 = vpack.c.b16 %v603, %v601
        %v694 = vpack.c.b16 %v604, %v602
        %v695 = vpack.c.b16 %v607, %v605
        %v696 = vpack.c.b16 %v608, %v606
        %v697 = vpack.c.b16 %v611, %v609
        %v698 = vpack.c.b16 %v612, %v610
        %v699 = vpack.c.b16 %v615, %v613
        %v700 = vpack.c.b16 %v616, %v614
        %v701 = vpack.c.b16 %v619, %v617
        %v702 = vpack.c.b16 %v620, %v618
        %v703 = vpack.c.b16 %v623, %v621
        %v704 = vpack.c.b16 %v624, %v622
        %v705 = vpack.c.b16 %v627, %v625
        %v706 = vpack.c.b16 %v628, %v626
        %v707 = vpack.c.b16 %v631, %v629
        %v708 = vpack.c.b16 %v632, %v630
        %v709 = vpack.c.b16 %v635, %v633
        %v710 = vpack.c.b16 %v636, %v634
        %v711 = vpack.c.b16 %v639, %v637
        %v712 = vpack.c.b16 %v640, %v638
        %v713 = vpack.c.b16 %v643, %v641
        %v714 = vpack.c.b16 %v644, %v642
        %v715 = vpack.c.b16 %v647, %v645
        %v716 = vpack.c.b16 %v648, %v646
        %v717 = vpack.c.b16 %v651, %v649
        %v718 = vpack.c.b16 %v652, %v650
        %v719 = vpack.c.b16 %v655, %v653
        %v720 = vpack.c.b16 %v656, %v654
        %v721 = vpack.c.b16 %v659, %v657
        %v722 = vpack.c.b16 %v660, %v658
        %v723 = vpack.c.b16 %v663, %v661
        %v724 = vpack.c.b16 %v664, %v662
        %v725 = vpack.c.b16 %v667, %v665
        %v726 = vpack.c.b16 %v668, %v666
        %v727 = vpack.c.b16 %v671, %v669
        %v728 = vpack.c.b16 %v672, %v670
        %v729 = vpack.c.b16 %v675, %v673
        %v730 = vpack.c.b16 %v676, %v674
        %v731 = vpack.c.b16 %v679, %v677
        %v732 = vpack.c.b16 %v680, %v678
        %v733 = vpack.c.b16 %v683, %v681
        %v734 = vpack.c.b16 %v684, %v682
        %v735 = vpack.c.b16 %v687, %v685
        %v736 = vpack.c.b16 %v688, %v686
        %785 = vmatprep.subr.bf16.mxu0 %v690
        %786 = vmatpush1.bf16.msra.mxu0 %v689
        %787 = vmatprep.subr.bf16.mxu0 %v692
        %788 = vmatpush1.bf16.msra.mxu0 %v691
        %789 = vmatprep.subr.bf16.mxu0 %v694
        %790 = vmatpush1.bf16.msra.mxu0 %v693
        %791 = vmatprep.subr.bf16.mxu0 %v696
        %792 = vmatpush1.bf16.msra.mxu0 %v695
        %793 = vmatprep.subr.bf16.mxu0 %v698
        %794 = vmatpush1.bf16.msra.mxu0 %v697
        %795 = vmatprep.subr.bf16.mxu0 %v700
        %796 = vmatpush1.bf16.msra.mxu0 %v699
        %797 = vmatprep.subr.bf16.mxu0 %v702
        %798 = vmatpush1.bf16.msra.mxu0 %v701
        %799 = vmatprep.subr.bf16.mxu0 %v704
        %800 = vmatpush1.bf16.msra.mxu0 %v703
        %801 = vmatprep.subr.bf16.mxu0 %v706
        %802 = vmatpush1.bf16.msra.mxu0 %v705
        %803 = vmatprep.subr.bf16.mxu0 %v708
        %804 = vmatpush1.bf16.msra.mxu0 %v707
        %805 = vmatprep.subr.bf16.mxu0 %v710
        %806 = vmatpush1.bf16.msra.mxu0 %v709
        %807 = vmatprep.subr.bf16.mxu0 %v712
        %808 = vmatpush1.bf16.msra.mxu0 %v711
        %809 = vmatprep.subr.bf16.mxu0 %v714
        %810 = vmatpush1.bf16.msra.mxu0 %v713
        %811 = vmatprep.subr.bf16.mxu0 %v716
        %812 = vmatpush1.bf16.msra.mxu0 %v715
        %813 = vmatprep.subr.bf16.mxu0 %v718
        %814 = vmatpush1.bf16.msra.mxu0 %v717
        %815 = vmatprep.subr.bf16.mxu0 %v720
        %816 = vmatpush1.bf16.msra.mxu0 %v719
        %817 = vmatprep.mubr.bf16.mxu0 %v462
        %818 = vmatmul.mubr.bf16.gmra.mrb[0].mxu0 %v461
        %v819 = vpop.f32.mrb[0].mxu0
        %v820 = vadd.f32 %v538, %v819
        %v821 = vpop.f32.mrb[0].mxu0
        %v822 = vadd.f32 %v542, %v821
        %v823 = vpop.f32.mrb[0].mxu0
        %v824 = vadd.f32 %v538, %v823
        %v825 = vpop.f32.mrb[0].mxu0
        %v826 = vadd.f32 %v542, %v825
        %827 = vmatprep.mubr.bf16.mxu0 %v465
        %828 = vmatmul.mubr.bf16.gmra.mrb[0].mxu0 %v464
        %v829 = vpop.f32.mrb[0].mxu0
        %v830 = vadd.f32 %v538, %v829
        %v831 = vpop.f32.mrb[0].mxu0
        %v832 = vadd.f32 %v542, %v831
        %v833 = vpop.f32.mrb[0].mxu0
        %v834 = vadd.f32 %v538, %v833
        %v835 = vpop.f32.mrb[0].mxu0
        %v836 = vadd.f32 %v542, %v835
        %837 = vmatprep.mubr.bf16.mxu0 %v468
        %838 = vmatmul.mubr.bf16.gmra.mrb[0].mxu0 %v467
        %v839 = vpop.f32.mrb[0].mxu0
        %v840 = vadd.f32 %v538, %v839
        %v841 = vpop.f32.mrb[0].mxu0
        %v842 = vadd.f32 %v542, %v841
        %v843 = vpop.f32.mrb[0].mxu0
        %v844 = vadd.f32 %v538, %v843
        %v845 = vpop.f32.mrb[0].mxu0
        %v846 = vadd.f32 %v542, %v845
        %847 = vmatprep.mubr.bf16.mxu0 %v471
        %848 = vmatmul.mubr.bf16.gmra.mrb[0].mxu0 %v470
        %v849 = vpop.f32.mrb[0].mxu0
        %v850 = vadd.f32 %v538, %v849
        %v851 = vpop.f32.mrb[0].mxu0
        %v852 = vadd.f32 %v542, %v851
        %v853 = vpop.f32.mrb[0].mxu0
        %v854 = vadd.f32 %v538, %v853
        %v855 = vpop.f32.mrb[0].mxu0
        %v856 = vadd.f32 %v542, %v855
        %857 = vmatprep.mubr.bf16.mxu0 %v474
        %858 = vmatmul.mubr.bf16.gmra.mrb[0].mxu0 %v473
        %v859 = vpop.f32.mrb[0].mxu0
        %v860 = vadd.f32 %v538, %v859
        %v861 = vpop.f32.mrb[0].mxu0
        %v862 = vadd.f32 %v542, %v861
        %v863 = vpop.f32.mrb[0].mxu0
        %v864 = vadd.f32 %v538, %v863
        %v865 = vpop.f32.mrb[0].mxu0
        %v866 = vadd.f32 %v542, %v865
        %867 = vmatprep.mubr.bf16.mxu0 %v477
        %868 = vmatmul.mubr.bf16.gmra.mrb[0].mxu0 %v476
        %v869 = vpop.f32.mrb[0].mxu0
        %v870 = vadd.f32 %v538, %v869
        %v871 = vpop.f32.mrb[0].mxu0
        %v872 = vadd.f32 %v542, %v871
        %v873 = vpop.f32.mrb[0].mxu0
        %v874 = vadd.f32 %v538, %v873
        %v875 = vpop.f32.mrb[0].mxu0
        %v876 = vadd.f32 %v542, %v875
        %877 = vmatprep.mubr.bf16.mxu0 %v480
        %878 = vmatmul.mubr.bf16.gmra.mrb[0].mxu0 %v479
        %v879 = vpop.f32.mrb[0].mxu0
        %v880 = vadd.f32 %v538, %v879
        %v881 = vpop.f32.mrb[0].mxu0
        %v882 = vadd.f32 %v542, %v881
        %v883 = vpop.f32.mrb[0].mxu0
        %v884 = vadd.f32 %v538, %v883
        %v885 = vpop.f32.mrb[0].mxu0
        %v886 = vadd.f32 %v542, %v885
        %887 = vmatprep.mubr.bf16.mxu0 %v483
        %888 = vmatmul.mubr.bf16.gmra.mrb[0].mxu0 %v482
        %v889 = vpop.f32.mrb[0].mxu0
        %v890 = vadd.f32 %v538, %v889
        %v891 = vpop.f32.mrb[0].mxu0
        %v892 = vadd.f32 %v542, %v891
        %v893 = vpop.f32.mrb[0].mxu0
        %v894 = vadd.f32 %v538, %v893
        %v895 = vpop.f32.mrb[0].mxu0
        %v896 = vadd.f32 %v542, %v895
        %897 = vdwg.mxu0
        %898 = vmatprep.subr.bf16.mxu0 %v722
        %899 = vmatpush1.bf16.msra.mxu0 %v721
        %900 = vmatprep.subr.bf16.mxu0 %v724
        %901 = vmatpush1.bf16.msra.mxu0 %v723
        %902 = vmatprep.subr.bf16.mxu0 %v726
        %903 = vmatpush1.bf16.msra.mxu0 %v725
        %904 = vmatprep.subr.bf16.mxu0 %v728
        %905 = vmatpush1.bf16.msra.mxu0 %v727
        %906 = vmatprep.subr.bf16.mxu0 %v730
        %907 = vmatpush1.bf16.msra.mxu0 %v729
        %908 = vmatprep.subr.bf16.mxu0 %v732
        %909 = vmatpush1.bf16.msra.mxu0 %v731
        %910 = vmatprep.subr.bf16.mxu0 %v734
        %911 = vmatpush1.bf16.msra.mxu0 %v733
        %912 = vmatprep.subr.bf16.mxu0 %v736
        %913 = vmatpush1.bf16.msra.mxu0 %v735
        %914 = vmatprep.subr.bf16.mxu0 0
        %915 = vmatpush1.bf16.msra.mxu0 0
        %916 = vmatprep.subr.bf16.mxu0 0
        %917 = vmatpush1.bf16.msra.mxu0 0
        %918 = vmatprep.subr.bf16.mxu0 0
        %919 = vmatpush1.bf16.msra.mxu0 0
        %920 = vmatprep.subr.bf16.mxu0 0
        %921 = vmatpush1.bf16.msra.mxu0 0
        %922 = vmatprep.subr.bf16.mxu0 0
        %923 = vmatpush1.bf16.msra.mxu0 0
        %924 = vmatprep.subr.bf16.mxu0 0
        %925 = vmatpush1.bf16.msra.mxu0 0
        %926 = vmatprep.subr.bf16.mxu0 0
        %927 = vmatpush1.bf16.msra.mxu0 0
        %928 = vmatprep.subr.bf16.mxu0 0
        %929 = vmatpush1.bf16.msra.mxu0 0
        %930 = vmatprep.mubr.bf16.mxu0 0
        %931 = vmatmul.mubr.bf16.gmra.mrb[0].mxu0 %v463
        %v932 = vpop.f32.mrb[0].mxu0
        %v933 = vadd.f32 %v820, %v932
        %v934 = vpop.f32.mrb[0].mxu0
        %v935 = vadd.f32 %v822, %v934
        %v936 = vpop.f32.mrb[0].mxu0
        %v937 = vadd.f32 %v824, %v936
        %v938 = vpop.f32.mrb[0].mxu0
        %v939 = vadd.f32 %v826, %v938
        %940 = vmatprep.mubr.bf16.mxu0 0
        %941 = vmatmul.mubr.bf16.gmra.mrb[0].mxu0 %v466
        %v942 = vpop.f32.mrb[0].mxu0
        %v943 = vadd.f32 %v830, %v942
        %v944 = vpop.f32.mrb[0].mxu0
        %v945 = vadd.f32 %v832, %v944
        %v946 = vpop.f32.mrb[0].mxu0
        %v947 = vadd.f32 %v834, %v946
        %v948 = vpop.f32.mrb[0].mxu0
        %v949 = vadd.f32 %v836, %v948
        %950 = vmatprep.mubr.bf16.mxu0 0
        %951 = vmatmul.mubr.bf16.gmra.mrb[0].mxu0 %v469
        %v952 = vpop.f32.mrb[0].mxu0
        %v953 = vadd.f32 %v840, %v952
        %v954 = vpop.f32.mrb[0].mxu0
        %v955 = vadd.f32 %v842, %v954
        %v956 = vpop.f32.mrb[0].mxu0
        %v957 = vadd.f32 %v844, %v956
        %v958 = vpop.f32.mrb[0].mxu0
        %v959 = vadd.f32 %v846, %v958
        %960 = vmatprep.mubr.bf16.mxu0 0
        %961 = vmatmul.mubr.bf16.gmra.mrb[0].mxu0 %v472
        %v962 = vpop.f32.mrb[0].mxu0
        %v963 = vadd.f32 %v850, %v962
        %v964 = vpop.f32.mrb[0].mxu0
        %v965 = vadd.f32 %v852, %v964
        %v966 = vpop.f32.mrb[0].mxu0
        %v967 = vadd.f32 %v854, %v966
        %v968 = vpop.f32.mrb[0].mxu0
        %v969 = vadd.f32 %v856, %v968
        %970 = vmatprep.mubr.bf16.mxu0 0
        %971 = vmatmul.mubr.bf16.gmra.mrb[0].mxu0 %v475
        %v972 = vpop.f32.mrb[0].mxu0
        %v973 = vadd.f32 %v860, %v972
        %v974 = vpop.f32.mrb[0].mxu0
        %v975 = vadd.f32 %v862, %v974
        %v976 = vpop.f32.mrb[0].mxu0
        %v977 = vadd.f32 %v864, %v976
        %v978 = vpop.f32.mrb[0].mxu0
        %v979 = vadd.f32 %v866, %v978
        %980 = vmatprep.mubr.bf16.mxu0 0
        %981 = vmatmul.mubr.bf16.gmra.mrb[0].mxu0 %v478
        %v982 = vpop.f32.mrb[0].mxu0
        %v983 = vadd.f32 %v870, %v982
        %v984 = vpop.f32.mrb[0].mxu0
        %v985 = vadd.f32 %v872, %v984
        %v986 = vpop.f32.mrb[0].mxu0
        %v987 = vadd.f32 %v874, %v986
        %v988 = vpop.f32.mrb[0].mxu0
        %v989 = vadd.f32 %v876, %v988
        %990 = vmatprep.mubr.bf16.mxu0 0
        %991 = vmatmul.mubr.bf16.gmra.mrb[0].mxu0 %v481
        %v992 = vpop.f32.mrb[0].mxu0
        %v993 = vadd.f32 %v880, %v992
        %v994 = vpop.f32.mrb[0].mxu0
        %v995 = vadd.f32 %v882, %v994
        %v996 = vpop.f32.mrb[0].mxu0
        %v997 = vadd.f32 %v884, %v996
        %v998 = vpop.f32.mrb[0].mxu0
        %v999 = vadd.f32 %v886, %v998
        %1000 = vmatprep.mubr.bf16.mxu0 0
        %1001 = vmatmul.mubr.bf16.gmra.mrb[0].mxu0 %v484
        %v1002 = vpop.f32.mrb[0].mxu0
        %v1003 = vadd.f32 %v890, %v1002
        %v1004 = vpop.f32.mrb[0].mxu0
        %v1005 = vadd.f32 %v892, %v1004
        %v1006 = vpop.f32.mrb[0].mxu0
        %v1007 = vadd.f32 %v894, %v1006
        %v1008 = vpop.f32.mrb[0].mxu0
        %v1009 = vadd.f32 %v896, %v1008
        %1010 = vdwg.mxu0
        %v1011 = vmax.f32 %v933, 0.0
        %v1012 = vmax.f32 %v935, 0.0
        %v1013 = vmax.f32 %v937, 0.0
        %v1014 = vmax.f32 %v939, 0.0
        %v1015 = vmax.f32 %v943, 0.0
        %v1016 = vmax.f32 %v945, 0.0
        %v1017 = vmax.f32 %v947, 0.0
        %v1018 = vmax.f32 %v949, 0.0
        %v1019 = vmax.f32 %v953, 0.0
        %v1020 = vmax.f32 %v955, 0.0
        %v1021 = vmax.f32 %v957, 0.0
        %v1022 = vmax.f32 %v959, 0.0
        %v1023 = vmax.f32 %v963, 0.0
        %v1024 = vmax.f32 %v965, 0.0
        %v1025 = vmax.f32 %v967, 0.0
        %v1026 = vmax.f32 %v969, 0.0
        %v1027 = vmax.f32 %v973, 0.0
        %v1028 = vmax.f32 %v975, 0.0
        %v1029 = vmax.f32 %v977, 0.0
        %v1030 = vmax.f32 %v979, 0.0
        %v1031 = vmax.f32 %v983, 0.0
        %v1032 = vmax.f32 %v985, 0.0
        %v1033 = vmax.f32 %v987, 0.0
        %v1034 = vmax.f32 %v989, 0.0
        %v1035 = vmax.f32 %v993, 0.0
        %v1036 = vmax.f32 %v995, 0.0
        %v1037 = vmax.f32 %v997, 0.0
        %v1038 = vmax.f32 %v999, 0.0
        %v1039 = vmax.f32 %v1003, 0.0
        %v1040 = vmax.f32 %v1005, 0.0
        %v1041 = vmax.f32 %v1007, 0.0
        %v1042 = vmax.f32 %v1009, 0.0
        %v1043 = vpack.c.bf16 %v1013, %v1011
        %v1044 = vpack.c.bf16 %v1014, %v1012
        %v1045 = vpack.c.bf16 %v1017, %v1015
        %v1046 = vpack.c.bf16 %v1018, %v1016
        %v1047 = vpack.c.bf16 %v1021, %v1019
        %v1048 = vpack.c.bf16 %v1022, %v1020
        %v1049 = vpack.c.bf16 %v1025, %v1023
        %v1050 = vpack.c.bf16 %v1026, %v1024
        %v1051 = vpack.c.bf16 %v1029, %v1027
        %v1052 = vpack.c.bf16 %v1030, %v1028
        %v1053 = vpack.c.bf16 %v1033, %v1031
        %v1054 = vpack.c.bf16 %v1034, %v1032
        %v1055 = vpack.c.bf16 %v1037, %v1035
        %v1056 = vpack.c.bf16 %v1038, %v1036
        %v1057 = vpack.c.bf16 %v1041, %v1039
        %v1058 = vpack.c.bf16 %v1042, %v1040
        %v1059 = vld [vmem:[#allocation7] sm:$0xff]
        %v1060 = vld [vmem:[#allocation7 + $0x8] sm:$0xff]
        %v1061 = vld [vmem:[#allocation7 + $0x10] sm:$0xff]
        %v1062 = vld [vmem:[#allocation7 + $0x18] sm:$0xff]
        %v1063 = vld [vmem:[#allocation7 + $0x20] sm:$0xff]
        %v1064 = vld [vmem:[#allocation7 + $0x28] sm:$0xff]
        %v1065 = vld [vmem:[#allocation7 + $0x30] sm:$0xff]
        %v1066 = vld [vmem:[#allocation7 + $0x38] sm:$0xff]
        %v1067 = vld [vmem:[#allocation7 + $0x40] sm:$0xff]
        %v1068 = vld [vmem:[#allocation7 + $0x48] sm:$0xff]
        %v1069 = vld [vmem:[#allocation7 + $0x50] sm:$0xff]
        %v1070 = vld [vmem:[#allocation7 + $0x58] sm:$0xff]
        %v1071 = vld [vmem:[#allocation7 + $0x60] sm:$0xff]
        %v1072 = vld [vmem:[#allocation7 + $0x68] sm:$0xff]
        %v1073 = vld [vmem:[#allocation7 + $0x70] sm:$0xff]
        %v1074 = vld [vmem:[#allocation7 + $0x78] sm:$0xff]
        %v1075 = vld [vmem:[#allocation7 + $0x80] sm:$0xff]
        %v1076 = vld [vmem:[#allocation7 + $0x88] sm:$0xff]
        %v1077 = vld [vmem:[#allocation7 + $0x90] sm:$0xff]
        %v1078 = vld [vmem:[#allocation7 + $0x98] sm:$0xff]
        %v1079 = vld [vmem:[#allocation7 + $0xa0] sm:$0xff]
        %v1080 = vld [vmem:[#allocation7 + $0xa8] sm:$0xff]
        %v1081 = vld [vmem:[#allocation7 + $0xb0] sm:$0xff]
        %v1082 = vld [vmem:[#allocation7 + $0xb8] sm:$0xff]
        %v1083 = vld [vmem:[#allocation7 + $0xc0] sm:$0xff]
        %v1084 = vld [vmem:[#allocation7 + $0xc8] sm:$0xff]
        %v1085 = vld [vmem:[#allocation7 + $0xd0] sm:$0xff]
        %v1086 = vld [vmem:[#allocation7 + $0xd8] sm:$0xff]
        %v1087 = vld [vmem:[#allocation7 + $0xe0] sm:$0xff]
        %v1088 = vld [vmem:[#allocation7 + $0xe8] sm:$0xff]
        %v1089 = vld [vmem:[#allocation7 + $0xf0] sm:$0xff]
        %v1090 = vld [vmem:[#allocation7 + $0xf8] sm:$0xff]
        %v1091 = vld [vmem:[%s4] sm:$0x3]
        %v1093 = vlaneseq
        %v1094 = vshrl.u32 %v1093, 7
        %v1095 = vsub.s32 0, %v1094
        %v1096 = vrot.slane %v1091, %v1095
        %v1097 = vlaneseq
        %v1098 = vshrl.u32 %v1097, 7
        %v1099 = vsub.s32 1, %v1098
        %v1100 = vrot.slane %v1091, %v1099
        %v1135 = vunpack.c.l.b16 %v1059
        %v1136 = vunpack.c.h.b16 %v1059
        %v1137 = vunpack.c.l.b16 %v1060
        %v1138 = vunpack.c.h.b16 %v1060
        %v1139 = vunpack.c.l.b16 %v1061
        %v1140 = vunpack.c.h.b16 %v1061
        %v1141 = vunpack.c.l.b16 %v1062
        %v1142 = vunpack.c.h.b16 %v1062
        %v1143 = vunpack.c.l.b16 %v1063
        %v1144 = vunpack.c.h.b16 %v1063
        %v1145 = vunpack.c.l.b16 %v1064
        %v1146 = vunpack.c.h.b16 %v1064
        %v1147 = vunpack.c.l.b16 %v1065
        %v1148 = vunpack.c.h.b16 %v1065
        %v1149 = vunpack.c.l.b16 %v1066
        %v1150 = vunpack.c.h.b16 %v1066
        %v1151 = vunpack.c.l.b16 %v1067
        %v1152 = vunpack.c.h.b16 %v1067
        %v1153 = vunpack.c.l.b16 %v1068
        %v1154 = vunpack.c.h.b16 %v1068
        %v1155 = vunpack.c.l.b16 %v1069
        %v1156 = vunpack.c.h.b16 %v1069
        %v1157 = vunpack.c.l.b16 %v1070
        %v1158 = vunpack.c.h.b16 %v1070
        %v1159 = vunpack.c.l.b16 %v1071
        %v1160 = vunpack.c.h.b16 %v1071
        %v1161 = vunpack.c.l.b16 %v1072
        %v1162 = vunpack.c.h.b16 %v1072
        %v1163 = vunpack.c.l.b16 %v1073
        %v1164 = vunpack.c.h.b16 %v1073
        %v1165 = vunpack.c.l.b16 %v1074
        %v1166 = vunpack.c.h.b16 %v1074
        %v1167 = vunpack.c.l.b16 %v1075
        %v1168 = vunpack.c.h.b16 %v1075
        %v1169 = vunpack.c.l.b16 %v1076
        %v1170 = vunpack.c.h.b16 %v1076
        %v1171 = vunpack.c.l.b16 %v1077
        %v1172 = vunpack.c.h.b16 %v1077
        %v1173 = vunpack.c.l.b16 %v1078
        %v1174 = vunpack.c.h.b16 %v1078
        %v1175 = vunpack.c.l.b16 %v1079
        %v1176 = vunpack.c.h.b16 %v1079
        %v1177 = vunpack.c.l.b16 %v1080
        %v1178 = vunpack.c.h.b16 %v1080
        %v1179 = vunpack.c.l.b16 %v1081
        %v1180 = vunpack.c.h.b16 %v1081
        %v1181 = vunpack.c.l.b16 %v1082
        %v1182 = vunpack.c.h.b16 %v1082
        %v1183 = vunpack.c.l.b16 %v1083
        %v1184 = vunpack.c.h.b16 %v1083
        %v1185 = vunpack.c.l.b16 %v1084
        %v1186 = vunpack.c.h.b16 %v1084
        %v1187 = vunpack.c.l.b16 %v1085
        %v1188 = vunpack.c.h.b16 %v1085
        %v1189 = vunpack.c.l.b16 %v1086
        %v1190 = vunpack.c.h.b16 %v1086
        %v1191 = vunpack.c.l.b16 %v1087
        %v1192 = vunpack.c.h.b16 %v1087
        %v1193 = vunpack.c.l.b16 %v1088
        %v1194 = vunpack.c.h.b16 %v1088
        %v1195 = vunpack.c.l.b16 %v1089
        %v1196 = vunpack.c.h.b16 %v1089
        %v1197 = vunpack.c.l.b16 %v1090
        %v1198 = vunpack.c.h.b16 %v1090
        %v1199 = vpack.c.b16 %v1137, %v1135
        %v1200 = vpack.c.b16 %v1138, %v1136
        %v1201 = vpack.c.b16 %v1141, %v1139
        %v1202 = vpack.c.b16 %v1142, %v1140
        %v1203 = vpack.c.b16 %v1145, %v1143
        %v1204 = vpack.c.b16 %v1146, %v1144
        %v1205 = vpack.c.b16 %v1149, %v1147
        %v1206 = vpack.c.b16 %v1150, %v1148
        %v1207 = vpack.c.b16 %v1153, %v1151
        %v1208 = vpack.c.b16 %v1154, %v1152
        %v1209 = vpack.c.b16 %v1157, %v1155
        %v1210 = vpack.c.b16 %v1158, %v1156
        %v1211 = vpack.c.b16 %v1161, %v1159
        %v1212 = vpack.c.b16 %v1162, %v1160
        %v1213 = vpack.c.b16 %v1165, %v1163
        %v1214 = vpack.c.b16 %v1166, %v1164
        %v1215 = vpack.c.b16 %v1169, %v1167
        %v1216 = vpack.c.b16 %v1170, %v1168
        %v1217 = vpack.c.b16 %v1173, %v1171
        %v1218 = vpack.c.b16 %v1174, %v1172
        %v1219 = vpack.c.b16 %v1177, %v1175
        %v1220 = vpack.c.b16 %v1178, %v1176
        %v1221 = vpack.c.b16 %v1181, %v1179
        %v1222 = vpack.c.b16 %v1182, %v1180
        %v1223 = vpack.c.b16 %v1185, %v1183
        %v1224 = vpack.c.b16 %v1186, %v1184
        %v1225 = vpack.c.b16 %v1189, %v1187
        %v1226 = vpack.c.b16 %v1190, %v1188
        %v1227 = vpack.c.b16 %v1193, %v1191
        %v1228 = vpack.c.b16 %v1194, %v1192
        %v1229 = vpack.c.b16 %v1197, %v1195
        %v1230 = vpack.c.b16 %v1198, %v1196
        %1263 = vmatprep.subr.bf16.mxu0 %v1200
        %1264 = vmatpush1.bf16.msra.mxu0 %v1199
        %1265 = vmatprep.subr.bf16.mxu0 %v1202
        %1266 = vmatpush1.bf16.msra.mxu0 %v1201
        %1267 = vmatprep.subr.bf16.mxu0 %v1204
        %1268 = vmatpush1.bf16.msra.mxu0 %v1203
        %1269 = vmatprep.subr.bf16.mxu0 %v1206
        %1270 = vmatpush1.bf16.msra.mxu0 %v1205
        %1271 = vmatprep.subr.bf16.mxu0 %v1208
        %1272 = vmatpush1.bf16.msra.mxu0 %v1207
        %1273 = vmatprep.subr.bf16.mxu0 %v1210
        %1274 = vmatpush1.bf16.msra.mxu0 %v1209
        %1275 = vmatprep.subr.bf16.mxu0 %v1212
        %1276 = vmatpush1.bf16.msra.mxu0 %v1211
        %1277 = vmatprep.subr.bf16.mxu0 %v1214
        %1278 = vmatpush1.bf16.msra.mxu0 %v1213
        %1279 = vmatprep.subr.bf16.mxu0 %v1216
        %1280 = vmatpush1.bf16.msra.mxu0 %v1215
        %1281 = vmatprep.subr.bf16.mxu0 %v1218
        %1282 = vmatpush1.bf16.msra.mxu0 %v1217
        %1283 = vmatprep.subr.bf16.mxu0 %v1220
        %1284 = vmatpush1.bf16.msra.mxu0 %v1219
        %1285 = vmatprep.subr.bf16.mxu0 %v1222
        %1286 = vmatpush1.bf16.msra.mxu0 %v1221
        %1287 = vmatprep.subr.bf16.mxu0 %v1224
        %1288 = vmatpush1.bf16.msra.mxu0 %v1223
        %1289 = vmatprep.subr.bf16.mxu0 %v1226
        %1290 = vmatpush1.bf16.msra.mxu0 %v1225
        %1291 = vmatprep.subr.bf16.mxu0 %v1228
        %1292 = vmatpush1.bf16.msra.mxu0 %v1227
        %1293 = vmatprep.subr.bf16.mxu0 %v1230
        %1294 = vmatpush1.bf16.msra.mxu0 %v1229
        %1295 = vmatprep.mubr.bf16.mxu0 %v1044
        %1296 = vmatmul.mubr.bf16.gmra.mrb[0].mxu0 %v1043
        %v1297 = vpop.f32.mrb[0].mxu0
        %v1298 = vadd.f32 %v1096, %v1297
        %v1299 = vpop.f32.mrb[0].mxu0
        %v1300 = vadd.f32 %v1100, %v1299
        %v1301 = vpop.f32.mrb[0].mxu0
        %v1302 = vadd.f32 %v1096, %v1301
        %v1303 = vpop.f32.mrb[0].mxu0
        %v1304 = vadd.f32 %v1100, %v1303
        %1305 = vmatprep.mubr.bf16.mxu0 %v1046
        %1306 = vmatmul.mubr.bf16.gmra.mrb[0].mxu0 %v1045
        %v1307 = vpop.f32.mrb[0].mxu0
        %v1308 = vadd.f32 %v1096, %v1307
        %v1309 = vpop.f32.mrb[0].mxu0
        %v1310 = vadd.f32 %v1100, %v1309
        %v1311 = vpop.f32.mrb[0].mxu0
        %v1312 = vadd.f32 %v1096, %v1311
        %v1313 = vpop.f32.mrb[0].mxu0
        %v1314 = vadd.f32 %v1100, %v1313
        %1315 = vmatprep.mubr.bf16.mxu0 %v1048
        %1316 = vmatmul.mubr.bf16.gmra.mrb[0].mxu0 %v1047
        %v1317 = vpop.f32.mrb[0].mxu0
        %v1318 = vadd.f32 %v1096, %v1317
        %v1319 = vpop.f32.mrb[0].mxu0
        %v1320 = vadd.f32 %v1100, %v1319
        %v1321 = vpop.f32.mrb[0].mxu0
        %v1322 = vadd.f32 %v1096, %v1321
        %v1323 = vpop.f32.mrb[0].mxu0
        %v1324 = vadd.f32 %v1100, %v1323
        %1325 = vmatprep.mubr.bf16.mxu0 %v1050
        %1326 = vmatmul.mubr.bf16.gmra.mrb[0].mxu0 %v1049
        %v1327 = vpop.f32.mrb[0].mxu0
        %v1328 = vadd.f32 %v1096, %v1327
        %v1329 = vpop.f32.mrb[0].mxu0
        %v1330 = vadd.f32 %v1100, %v1329
        %v1331 = vpop.f32.mrb[0].mxu0
        %v1332 = vadd.f32 %v1096, %v1331
        %v1333 = vpop.f32.mrb[0].mxu0
        %v1334 = vadd.f32 %v1100, %v1333
        %1335 = vmatprep.mubr.bf16.mxu0 %v1052
        %1336 = vmatmul.mubr.bf16.gmra.mrb[0].mxu0 %v1051
        %v1337 = vpop.f32.mrb[0].mxu0
        %v1338 = vadd.f32 %v1096, %v1337
        %v1339 = vpop.f32.mrb[0].mxu0
        %v1340 = vadd.f32 %v1100, %v1339
        %v1341 = vpop.f32.mrb[0].mxu0
        %v1342 = vadd.f32 %v1096, %v1341
        %v1343 = vpop.f32.mrb[0].mxu0
        %v1344 = vadd.f32 %v1100, %v1343
        %1345 = vmatprep.mubr.bf16.mxu0 %v1054
        %1346 = vmatmul.mubr.bf16.gmra.mrb[0].mxu0 %v1053
        %v1347 = vpop.f32.mrb[0].mxu0
        %v1348 = vadd.f32 %v1096, %v1347
        %v1349 = vpop.f32.mrb[0].mxu0
        %v1350 = vadd.f32 %v1100, %v1349
        %v1351 = vpop.f32.mrb[0].mxu0
        %v1352 = vadd.f32 %v1096, %v1351
        %v1353 = vpop.f32.mrb[0].mxu0
        %v1354 = vadd.f32 %v1100, %v1353
        %1355 = vmatprep.mubr.bf16.mxu0 %v1056
        %1356 = vmatmul.mubr.bf16.gmra.mrb[0].mxu0 %v1055
        %v1357 = vpop.f32.mrb[0].mxu0
        %v1358 = vadd.f32 %v1096, %v1357
        %v1359 = vpop.f32.mrb[0].mxu0
        %v1360 = vadd.f32 %v1100, %v1359
        %v1361 = vpop.f32.mrb[0].mxu0
        %v1362 = vadd.f32 %v1096, %v1361
        %v1363 = vpop.f32.mrb[0].mxu0
        %v1364 = vadd.f32 %v1100, %v1363
        %1365 = vmatprep.mubr.bf16.mxu0 %v1058
        %1366 = vmatmul.mubr.bf16.gmra.mrb[0].mxu0 %v1057
        %v1367 = vpop.f32.mrb[0].mxu0
        %v1368 = vadd.f32 %v1096, %v1367
        %v1369 = vpop.f32.mrb[0].mxu0
        %v1370 = vadd.f32 %v1100, %v1369
        %v1371 = vpop.f32.mrb[0].mxu0
        %v1372 = vadd.f32 %v1096, %v1371
        %v1373 = vpop.f32.mrb[0].mxu0
        %v1374 = vadd.f32 %v1100, %v1373
        %1375 = vdwg.mxu0
        %v1376 = vpack.c.bf16 %v1302, %v1298
        %v1377 = vpack.c.bf16 %v1304, %v1300
        %v1378 = vpack.c.bf16 %v1312, %v1308
        %v1379 = vpack.c.bf16 %v1314, %v1310
        %v1380 = vpack.c.bf16 %v1322, %v1318
        %v1381 = vpack.c.bf16 %v1324, %v1320
        %v1382 = vpack.c.bf16 %v1332, %v1328
        %v1383 = vpack.c.bf16 %v1334, %v1330
        %v1384 = vpack.c.bf16 %v1342, %v1338
        %v1385 = vpack.c.bf16 %v1344, %v1340
        %v1386 = vpack.c.bf16 %v1352, %v1348
        %v1387 = vpack.c.bf16 %v1354, %v1350
        %v1388 = vpack.c.bf16 %v1362, %v1358
        %v1389 = vpack.c.bf16 %v1364, %v1360
        %v1390 = vpack.c.bf16 %v1372, %v1368
        %v1391 = vpack.c.bf16 %v1374, %v1370
        %v1392 = vld [vmem:[#allocation8] sm:$0xff]
        %v1393 = vld [vmem:[#allocation8 + $0x8] sm:$0xff]
        %v1394 = vld [vmem:[#allocation8 + $0x10] sm:$0xff]
        %v1395 = vld [vmem:[#allocation8 + $0x18] sm:$0xff]
        %v1396 = vld [vmem:[#allocation8 + $0x20] sm:$0xff]
        %v1397 = vld [vmem:[#allocation8 + $0x28] sm:$0xff]
        %v1398 = vld [vmem:[#allocation8 + $0x30] sm:$0xff]
        %v1399 = vld [vmem:[#allocation8 + $0x38] sm:$0xff]
        %v1400 = vld [vmem:[#allocation8 + $0x40] sm:$0xff]
        %v1401 = vld [vmem:[#allocation8 + $0x48] sm:$0xff]
        %v1402 = vld [vmem:[#allocation8 + $0x50] sm:$0xff]
        %v1403 = vld [vmem:[#allocation8 + $0x58] sm:$0xff]
        %v1404 = vld [vmem:[#allocation8 + $0x60] sm:$0xff]
        %v1405 = vld [vmem:[#allocation8 + $0x68] sm:$0xff]
        %v1406 = vld [vmem:[#allocation8 + $0x70] sm:$0xff]
        %v1407 = vld [vmem:[#allocation8 + $0x78] sm:$0xff]
        %v1408 = vld [vmem:[#allocation8 + $0x80] sm:$0xff]
        %v1409 = vld [vmem:[#allocation8 + $0x88] sm:$0xff]
        %v1410 = vld [vmem:[#allocation8 + $0x90] sm:$0xff]
        %v1411 = vld [vmem:[#allocation8 + $0x98] sm:$0xff]
        %v1412 = vld [vmem:[#allocation8 + $0xa0] sm:$0xff]
        %v1413 = vld [vmem:[#allocation8 + $0xa8] sm:$0xff]
        %v1414 = vld [vmem:[#allocation8 + $0xb0] sm:$0xff]
        %v1415 = vld [vmem:[#allocation8 + $0xb8] sm:$0xff]
        %v1416 = vld [vmem:[#allocation8 + $0xc0] sm:$0xff]
        %v1417 = vld [vmem:[#allocation8 + $0xc8] sm:$0xff]
        %v1418 = vld [vmem:[#allocation8 + $0xd0] sm:$0xff]
        %v1419 = vld [vmem:[#allocation8 + $0xd8] sm:$0xff]
        %v1420 = vld [vmem:[#allocation8 + $0xe0] sm:$0xff]
        %v1421 = vld [vmem:[#allocation8 + $0xe8] sm:$0xff]
        %v1422 = vld [vmem:[#allocation8 + $0xf0] sm:$0xff]
        %v1423 = vld [vmem:[#allocation8 + $0xf8] sm:$0xff]
        %v1424 = vld [vmem:[%s6] sm:$0x3]
        %v1426 = vlaneseq
        %v1427 = vshrl.u32 %v1426, 7
        %v1428 = vsub.s32 0, %v1427
        %v1429 = vrot.slane %v1424, %v1428
        %v1430 = vlaneseq
        %v1431 = vshrl.u32 %v1430, 7
        %v1432 = vsub.s32 1, %v1431
        %v1433 = vrot.slane %v1424, %v1432
        %v1468 = vunpack.c.l.b16 %v1392
        %v1469 = vunpack.c.h.b16 %v1392
        %v1470 = vunpack.c.l.b16 %v1393
        %v1471 = vunpack.c.h.b16 %v1393
        %v1472 = vunpack.c.l.b16 %v1394
        %v1473 = vunpack.c.h.b16 %v1394
        %v1474 = vunpack.c.l.b16 %v1395
        %v1475 = vunpack.c.h.b16 %v1395
        %v1476 = vunpack.c.l.b16 %v1396
        %v1477 = vunpack.c.h.b16 %v1396
        %v1478 = vunpack.c.l.b16 %v1397
        %v1479 = vunpack.c.h.b16 %v1397
        %v1480 = vunpack.c.l.b16 %v1398
        %v1481 = vunpack.c.h.b16 %v1398
        %v1482 = vunpack.c.l.b16 %v1399
        %v1483 = vunpack.c.h.b16 %v1399
        %v1484 = vunpack.c.l.b16 %v1400
        %v1485 = vunpack.c.h.b16 %v1400
        %v1486 = vunpack.c.l.b16 %v1401
        %v1487 = vunpack.c.h.b16 %v1401
        %v1488 = vunpack.c.l.b16 %v1402
        %v1489 = vunpack.c.h.b16 %v1402
        %v1490 = vunpack.c.l.b16 %v1403
        %v1491 = vunpack.c.h.b16 %v1403
        %v1492 = vunpack.c.l.b16 %v1404
        %v1493 = vunpack.c.h.b16 %v1404
        %v1494 = vunpack.c.l.b16 %v1405
        %v1495 = vunpack.c.h.b16 %v1405
        %v1496 = vunpack.c.l.b16 %v1406
        %v1497 = vunpack.c.h.b16 %v1406
        %v1498 = vunpack.c.l.b16 %v1407
        %v1499 = vunpack.c.h.b16 %v1407
        %v1500 = vunpack.c.l.b16 %v1408
        %v1501 = vunpack.c.h.b16 %v1408
        %v1502 = vunpack.c.l.b16 %v1409
        %v1503 = vunpack.c.h.b16 %v1409
        %v1504 = vunpack.c.l.b16 %v1410
        %v1505 = vunpack.c.h.b16 %v1410
        %v1506 = vunpack.c.l.b16 %v1411
        %v1507 = vunpack.c.h.b16 %v1411
        %v1508 = vunpack.c.l.b16 %v1412
        %v1509 = vunpack.c.h.b16 %v1412
        %v1510 = vunpack.c.l.b16 %v1413
        %v1511 = vunpack.c.h.b16 %v1413
        %v1512 = vunpack.c.l.b16 %v1414
        %v1513 = vunpack.c.h.b16 %v1414
        %v1514 = vunpack.c.l.b16 %v1415
        %v1515 = vunpack.c.h.b16 %v1415
        %v1516 = vunpack.c.l.b16 %v1416
        %v1517 = vunpack.c.h.b16 %v1416
        %v1518 = vunpack.c.l.b16 %v1417
        %v1519 = vunpack.c.h.b16 %v1417
        %v1520 = vunpack.c.l.b16 %v1418
        %v1521 = vunpack.c.h.b16 %v1418
        %v1522 = vunpack.c.l.b16 %v1419
        %v1523 = vunpack.c.h.b16 %v1419
        %v1524 = vunpack.c.l.b16 %v1420
        %v1525 = vunpack.c.h.b16 %v1420
        %v1526 = vunpack.c.l.b16 %v1421
        %v1527 = vunpack.c.h.b16 %v1421
        %v1528 = vunpack.c.l.b16 %v1422
        %v1529 = vunpack.c.h.b16 %v1422
        %v1530 = vunpack.c.l.b16 %v1423
        %v1531 = vunpack.c.h.b16 %v1423
        %v1532 = vpack.c.b16 %v1470, %v1468
        %v1533 = vpack.c.b16 %v1471, %v1469
        %v1534 = vpack.c.b16 %v1474, %v1472
        %v1535 = vpack.c.b16 %v1475, %v1473
        %v1536 = vpack.c.b16 %v1478, %v1476
        %v1537 = vpack.c.b16 %v1479, %v1477
        %v1538 = vpack.c.b16 %v1482, %v1480
        %v1539 = vpack.c.b16 %v1483, %v1481
        %v1540 = vpack.c.b16 %v1486, %v1484
        %v1541 = vpack.c.b16 %v1487, %v1485
        %v1542 = vpack.c.b16 %v1490, %v1488
        %v1543 = vpack.c.b16 %v1491, %v1489
        %v1544 = vpack.c.b16 %v1494, %v1492
        %v1545 = vpack.c.b16 %v1495, %v1493
        %v1546 = vpack.c.b16 %v1498, %v1496
        %v1547 = vpack.c.b16 %v1499, %v1497
        %v1548 = vpack.c.b16 %v1502, %v1500
        %v1549 = vpack.c.b16 %v1503, %v1501
        %v1550 = vpack.c.b16 %v1506, %v1504
        %v1551 = vpack.c.b16 %v1507, %v1505
        %v1552 = vpack.c.b16 %v1510, %v1508
        %v1553 = vpack.c.b16 %v1511, %v1509
        %v1554 = vpack.c.b16 %v1514, %v1512
        %v1555 = vpack.c.b16 %v1515, %v1513
        %v1556 = vpack.c.b16 %v1518, %v1516
        %v1557 = vpack.c.b16 %v1519, %v1517
        %v1558 = vpack.c.b16 %v1522, %v1520
        %v1559 = vpack.c.b16 %v1523, %v1521
        %v1560 = vpack.c.b16 %v1526, %v1524
        %v1561 = vpack.c.b16 %v1527, %v1525
        %v1562 = vpack.c.b16 %v1530, %v1528
        %v1563 = vpack.c.b16 %v1531, %v1529
        %1596 = vmatprep.subr.bf16.mxu0 %v1533
        %1597 = vmatpush1.bf16.msra.mxu0 %v1532
        %1598 = vmatprep.subr.bf16.mxu0 %v1535
        %1599 = vmatpush1.bf16.msra.mxu0 %v1534
        %1600 = vmatprep.subr.bf16.mxu0 %v1537
        %1601 = vmatpush1.bf16.msra.mxu0 %v1536
        %1602 = vmatprep.subr.bf16.mxu0 %v1539
        %1603 = vmatpush1.bf16.msra.mxu0 %v1538
        %1604 = vmatprep.subr.bf16.mxu0 %v1541
        %1605 = vmatpush1.bf16.msra.mxu0 %v1540
        %1606 = vmatprep.subr.bf16.mxu0 %v1543
        %1607 = vmatpush1.bf16.msra.mxu0 %v1542
        %1608 = vmatprep.subr.bf16.mxu0 %v1545
        %1609 = vmatpush1.bf16.msra.mxu0 %v1544
        %1610 = vmatprep.subr.bf16.mxu0 %v1547
        %1611 = vmatpush1.bf16.msra.mxu0 %v1546
        %1612 = vmatprep.subr.bf16.mxu0 %v1549
        %1613 = vmatpush1.bf16.msra.mxu0 %v1548
        %1614 = vmatprep.subr.bf16.mxu0 %v1551
        %1615 = vmatpush1.bf16.msra.mxu0 %v1550
        %1616 = vmatprep.subr.bf16.mxu0 %v1553
        %1617 = vmatpush1.bf16.msra.mxu0 %v1552
        %1618 = vmatprep.subr.bf16.mxu0 %v1555
        %1619 = vmatpush1.bf16.msra.mxu0 %v1554
        %1620 = vmatprep.subr.bf16.mxu0 %v1557
        %1621 = vmatpush1.bf16.msra.mxu0 %v1556
        %1622 = vmatprep.subr.bf16.mxu0 %v1559
        %1623 = vmatpush1.bf16.msra.mxu0 %v1558
        %1624 = vmatprep.subr.bf16.mxu0 %v1561
        %1625 = vmatpush1.bf16.msra.mxu0 %v1560
        %1626 = vmatprep.subr.bf16.mxu0 %v1563
        %1627 = vmatpush1.bf16.msra.mxu0 %v1562
        %1628 = vmatprep.mubr.bf16.mxu0 %v1377
        %1629 = vmatmul.mubr.bf16.gmra.mrb[0].mxu0 %v1376
        %v1630 = vpop.f32.mrb[0].mxu0
        %v1631 = vadd.f32 %v1429, %v1630
        %v1632 = vpop.f32.mrb[0].mxu0
        %v1633 = vadd.f32 %v1433, %v1632
        %v1634 = vpop.f32.mrb[0].mxu0
        %v1635 = vadd.f32 %v1429, %v1634
        %v1636 = vpop.f32.mrb[0].mxu0
        %v1637 = vadd.f32 %v1433, %v1636
        %1638 = vmatprep.mubr.bf16.mxu0 %v1379
        %1639 = vmatmul.mubr.bf16.gmra.mrb[0].mxu0 %v1378
        %v1640 = vpop.f32.mrb[0].mxu0
        %v1641 = vadd.f32 %v1429, %v1640
        %v1642 = vpop.f32.mrb[0].mxu0
        %v1643 = vadd.f32 %v1433, %v1642
        %v1644 = vpop.f32.mrb[0].mxu0
        %v1645 = vadd.f32 %v1429, %v1644
        %v1646 = vpop.f32.mrb[0].mxu0
        %v1647 = vadd.f32 %v1433, %v1646
        %1648 = vmatprep.mubr.bf16.mxu0 %v1381
        %1649 = vmatmul.mubr.bf16.gmra.mrb[0].mxu0 %v1380
        %v1650 = vpop.f32.mrb[0].mxu0
        %v1651 = vadd.f32 %v1429, %v1650
        %v1652 = vpop.f32.mrb[0].mxu0
        %v1653 = vadd.f32 %v1433, %v1652
        %v1654 = vpop.f32.mrb[0].mxu0
        %v1655 = vadd.f32 %v1429, %v1654
        %v1656 = vpop.f32.mrb[0].mxu0
        %v1657 = vadd.f32 %v1433, %v1656
        %1658 = vmatprep.mubr.bf16.mxu0 %v1383
        %1659 = vmatmul.mubr.bf16.gmra.mrb[0].mxu0 %v1382
        %v1660 = vpop.f32.mrb[0].mxu0
        %v1661 = vadd.f32 %v1429, %v1660
        %v1662 = vpop.f32.mrb[0].mxu0
        %v1663 = vadd.f32 %v1433, %v1662
        %v1664 = vpop.f32.mrb[0].mxu0
        %v1665 = vadd.f32 %v1429, %v1664
        %v1666 = vpop.f32.mrb[0].mxu0
        %v1667 = vadd.f32 %v1433, %v1666
        %1668 = vmatprep.mubr.bf16.mxu0 %v1385
        %1669 = vmatmul.mubr.bf16.gmra.mrb[0].mxu0 %v1384
        %v1670 = vpop.f32.mrb[0].mxu0
        %v1671 = vadd.f32 %v1429, %v1670
        %v1672 = vpop.f32.mrb[0].mxu0
        %v1673 = vadd.f32 %v1433, %v1672
        %v1674 = vpop.f32.mrb[0].mxu0
        %v1675 = vadd.f32 %v1429, %v1674
        %v1676 = vpop.f32.mrb[0].mxu0
        %v1677 = vadd.f32 %v1433, %v1676
        %1678 = vmatprep.mubr.bf16.mxu0 %v1387
        %1679 = vmatmul.mubr.bf16.gmra.mrb[0].mxu0 %v1386
        %v1680 = vpop.f32.mrb[0].mxu0
        %v1681 = vadd.f32 %v1429, %v1680
        %v1682 = vpop.f32.mrb[0].mxu0
        %v1683 = vadd.f32 %v1433, %v1682
        %v1684 = vpop.f32.mrb[0].mxu0
        %v1685 = vadd.f32 %v1429, %v1684
        %v1686 = vpop.f32.mrb[0].mxu0
        %v1687 = vadd.f32 %v1433, %v1686
        %1688 = vmatprep.mubr.bf16.mxu0 %v1389
        %1689 = vmatmul.mubr.bf16.gmra.mrb[0].mxu0 %v1388
        %v1690 = vpop.f32.mrb[0].mxu0
        %v1691 = vadd.f32 %v1429, %v1690
        %v1692 = vpop.f32.mrb[0].mxu0
        %v1693 = vadd.f32 %v1433, %v1692
        %v1694 = vpop.f32.mrb[0].mxu0
        %v1695 = vadd.f32 %v1429, %v1694
        %v1696 = vpop.f32.mrb[0].mxu0
        %v1697 = vadd.f32 %v1433, %v1696
        %1698 = vmatprep.mubr.bf16.mxu0 %v1391
        %1699 = vmatmul.mubr.bf16.gmra.mrb[0].mxu0 %v1390
        %v1700 = vpop.f32.mrb[0].mxu0
        %v1701 = vadd.f32 %v1429, %v1700
        %v1702 = vpop.f32.mrb[0].mxu0
        %v1703 = vadd.f32 %v1433, %v1702
        %v1704 = vpop.f32.mrb[0].mxu0
        %v1705 = vadd.f32 %v1429, %v1704
        %v1706 = vpop.f32.mrb[0].mxu0
        %v1707 = vadd.f32 %v1433, %v1706
        %1708 = vdwg.mxu0
        %v1709 = vmax.f32 %v1631, 0.0
        %v1710 = vmax.f32 %v1633, 0.0
        %v1711 = vmax.f32 %v1635, 0.0
        %v1712 = vmax.f32 %v1637, 0.0
        %v1713 = vmax.f32 %v1641, 0.0
        %v1714 = vmax.f32 %v1643, 0.0
        %v1715 = vmax.f32 %v1645, 0.0
        %v1716 = vmax.f32 %v1647, 0.0
        %v1717 = vmax.f32 %v1651, 0.0
        %v1718 = vmax.f32 %v1653, 0.0
        %v1719 = vmax.f32 %v1655, 0.0
        %v1720 = vmax.f32 %v1657, 0.0
        %v1721 = vmax.f32 %v1661, 0.0
        %v1722 = vmax.f32 %v1663, 0.0
        %v1723 = vmax.f32 %v1665, 0.0
        %v1724 = vmax.f32 %v1667, 0.0
        %v1725 = vmax.f32 %v1671, 0.0
        %v1726 = vmax.f32 %v1673, 0.0
        %v1727 = vmax.f32 %v1675, 0.0
        %v1728 = vmax.f32 %v1677, 0.0
        %v1729 = vmax.f32 %v1681, 0.0
        %v1730 = vmax.f32 %v1683, 0.0
        %v1731 = vmax.f32 %v1685, 0.0
        %v1732 = vmax.f32 %v1687, 0.0
        %v1733 = vmax.f32 %v1691, 0.0
        %v1734 = vmax.f32 %v1693, 0.0
        %v1735 = vmax.f32 %v1695, 0.0
        %v1736 = vmax.f32 %v1697, 0.0
        %v1737 = vmax.f32 %v1701, 0.0
        %v1738 = vmax.f32 %v1703, 0.0
        %v1739 = vmax.f32 %v1705, 0.0
        %v1740 = vmax.f32 %v1707, 0.0
        %v1741 = vpack.c.bf16 %v1711, %v1709
        %v1742 = vpack.c.bf16 %v1712, %v1710
        %v1743 = vpack.c.bf16 %v1715, %v1713
        %v1744 = vpack.c.bf16 %v1716, %v1714
        %v1745 = vpack.c.bf16 %v1719, %v1717
        %v1746 = vpack.c.bf16 %v1720, %v1718
        %v1747 = vpack.c.bf16 %v1723, %v1721
        %v1748 = vpack.c.bf16 %v1724, %v1722
        %v1749 = vpack.c.bf16 %v1727, %v1725
        %v1750 = vpack.c.bf16 %v1728, %v1726
        %v1751 = vpack.c.bf16 %v1731, %v1729
        %v1752 = vpack.c.bf16 %v1732, %v1730
        %v1753 = vpack.c.bf16 %v1735, %v1733
        %v1754 = vpack.c.bf16 %v1736, %v1734
        %v1755 = vpack.c.bf16 %v1739, %v1737
        %v1756 = vpack.c.bf16 %v1740, %v1738
        %v1757 = vld [vmem:[#allocation10] sm:$0xff]
        %v1758 = vld [vmem:[#allocation10 + $0x8] sm:$0xf]
        %v1759 = vld [vmem:[#allocation10 + $0xc] sm:$0xff]
        %v1760 = vld [vmem:[#allocation10 + $0x14] sm:$0xf]
        %v1761 = vld [vmem:[#allocation10 + $0x18] sm:$0xff]
        %v1762 = vld [vmem:[#allocation10 + $0x20] sm:$0xf]
        %v1763 = vld [vmem:[#allocation10 + $0x24] sm:$0xff]
        %v1764 = vld [vmem:[#allocation10 + $0x2c] sm:$0xf]
        %v1765 = vld [vmem:[#allocation10 + $0x30] sm:$0xff]
        %v1766 = vld [vmem:[#allocation10 + $0x38] sm:$0xf]
        %v1767 = vld [vmem:[#allocation10 + $0x3c] sm:$0xff]
        %v1768 = vld [vmem:[#allocation10 + $0x44] sm:$0xf]
        %v1769 = vld [vmem:[#allocation10 + $0x48] sm:$0xff]
        %v1770 = vld [vmem:[#allocation10 + $0x50] sm:$0xf]
        %v1771 = vld [vmem:[#allocation10 + $0x54] sm:$0xff]
        %v1772 = vld [vmem:[#allocation10 + $0x5c] sm:$0xf]
        %v1773 = vld [vmem:[#allocation10 + $0x60] sm:$0xff]
        %v1774 = vld [vmem:[#allocation10 + $0x68] sm:$0xf]
        %v1775 = vld [vmem:[#allocation10 + $0x6c] sm:$0xff]
        %v1776 = vld [vmem:[#allocation10 + $0x74] sm:$0xf]
        %v1777 = vld [vmem:[#allocation10 + $0x78] sm:$0xff]
        %v1778 = vld [vmem:[#allocation10 + $0x80] sm:$0xf]
        %v1779 = vld [vmem:[#allocation10 + $0x84] sm:$0xff]
        %v1780 = vld [vmem:[#allocation10 + $0x8c] sm:$0xf]
        %v1781 = vld [vmem:[#allocation10 + $0x90] sm:$0xff]
        %v1782 = vld [vmem:[#allocation10 + $0x98] sm:$0xf]
        %v1783 = vld [vmem:[#allocation10 + $0x9c] sm:$0xff]
        %v1784 = vld [vmem:[#allocation10 + $0xa4] sm:$0xf]
        %v1785 = vld [vmem:[#allocation10 + $0xa8] sm:$0xff]
        %v1786 = vld [vmem:[#allocation10 + $0xb0] sm:$0xf]
        %v1787 = vld [vmem:[#allocation10 + $0xb4] sm:$0xff]
        %v1788 = vld [vmem:[#allocation10 + $0xbc] sm:$0xf]
        %v1789 = vld [vmem:[#allocation10 + $0xc0] sm:$0xff]
        %v1790 = vld [vmem:[#allocation10 + $0xc8] sm:$0xf]
        %v1791 = vld [vmem:[#allocation10 + $0xcc] sm:$0xff]
        %v1792 = vld [vmem:[#allocation10 + $0xd4] sm:$0xf]
        %v1793 = vld [vmem:[#allocation10 + $0xd8] sm:$0xff]
        %v1794 = vld [vmem:[#allocation10 + $0xe0] sm:$0xf]
        %v1795 = vld [vmem:[#allocation10 + $0xe4] sm:$0xff]
        %v1796 = vld [vmem:[#allocation10 + $0xec] sm:$0xf]
        %v1797 = vld [vmem:[#allocation10 + $0xf0] sm:$0xff]
        %v1798 = vld [vmem:[#allocation10 + $0xf8] sm:$0xf]
        %v1799 = vld [vmem:[#allocation10 + $0xfc] sm:$0xff]
        %v1800 = vld [vmem:[#allocation10 + $0x104] sm:$0xf]
        %v1801 = vld [vmem:[#allocation10 + $0x108] sm:$0xff]
        %v1802 = vld [vmem:[#allocation10 + $0x110] sm:$0xf]
        %v1803 = vld [vmem:[#allocation10 + $0x114] sm:$0xff]
        %v1804 = vld [vmem:[#allocation10 + $0x11c] sm:$0xf]
        %v1805 = vld [vmem:[#allocation10 + $0x120] sm:$0xff]
        %v1806 = vld [vmem:[#allocation10 + $0x128] sm:$0xf]
        %v1807 = vld [vmem:[#allocation10 + $0x12c] sm:$0xff]
        %v1808 = vld [vmem:[#allocation10 + $0x134] sm:$0xf]
        %v1809 = vld [vmem:[#allocation10 + $0x138] sm:$0xff]
        %v1810 = vld [vmem:[#allocation10 + $0x140] sm:$0xf]
        %v1811 = vld [vmem:[#allocation10 + $0x144] sm:$0xff]
        %v1812 = vld [vmem:[#allocation10 + $0x14c] sm:$0xf]
        %v1813 = vld [vmem:[#allocation10 + $0x150] sm:$0xff]
        %v1814 = vld [vmem:[#allocation10 + $0x158] sm:$0xf]
        %v1815 = vld [vmem:[#allocation10 + $0x15c] sm:$0xff]
        %v1816 = vld [vmem:[#allocation10 + $0x164] sm:$0xf]
        %v1817 = vld [vmem:[#allocation10 + $0x168] sm:$0xff]
        %v1818 = vld [vmem:[#allocation10 + $0x170] sm:$0xf]
        %v1819 = vld [vmem:[#allocation10 + $0x174] sm:$0xff]
        %v1820 = vld [vmem:[#allocation10 + $0x17c] sm:$0xf]
        %v1821 = vld [vmem:[%s8] sm:$0x7]
        %v1823 = vlaneseq
        %v1824 = vshrl.u32 %v1823, 7
        %v1825 = vsub.s32 0, %v1824
        %v1826 = vrot.slane %v1821, %v1825
        %v1827 = vlaneseq
        %v1828 = vshrl.u32 %v1827, 7
        %v1829 = vsub.s32 1, %v1828
        %v1830 = vrot.slane %v1821, %v1829
        %v1831 = vlaneseq
        %v1832 = vshrl.u32 %v1831, 7
        %v1833 = vsub.s32 2, %v1832
        %v1834 = vrot.slane %v1821, %v1833
        %v1902 = vunpack.c.l.b16 %v1757
        %v1903 = vunpack.c.h.b16 %v1757
        %v1904 = vunpack.c.l.b16 %v1758
        %v1905 = vunpack.c.l.b16 %v1759
        %v1906 = vunpack.c.h.b16 %v1759
        %v1907 = vunpack.c.l.b16 %v1760
        %v1908 = vunpack.c.l.b16 %v1761
        %v1909 = vunpack.c.h.b16 %v1761
        %v1910 = vunpack.c.l.b16 %v1762
        %v1911 = vunpack.c.l.b16 %v1763
        %v1912 = vunpack.c.h.b16 %v1763
        %v1913 = vunpack.c.l.b16 %v1764
        %v1914 = vunpack.c.l.b16 %v1765
        %v1915 = vunpack.c.h.b16 %v1765
        %v1916 = vunpack.c.l.b16 %v1766
        %v1917 = vunpack.c.l.b16 %v1767
        %v1918 = vunpack.c.h.b16 %v1767
        %v1919 = vunpack.c.l.b16 %v1768
        %v1920 = vunpack.c.l.b16 %v1769
        %v1921 = vunpack.c.h.b16 %v1769
        %v1922 = vunpack.c.l.b16 %v1770
        %v1923 = vunpack.c.l.b16 %v1771
        %v1924 = vunpack.c.h.b16 %v1771
        %v1925 = vunpack.c.l.b16 %v1772
        %v1926 = vunpack.c.l.b16 %v1773
        %v1927 = vunpack.c.h.b16 %v1773
        %v1928 = vunpack.c.l.b16 %v1774
        %v1929 = vunpack.c.l.b16 %v1775
        %v1930 = vunpack.c.h.b16 %v1775
        %v1931 = vunpack.c.l.b16 %v1776
        %v1932 = vunpack.c.l.b16 %v1777
        %v1933 = vunpack.c.h.b16 %v1777
        %v1934 = vunpack.c.l.b16 %v1778
        %v1935 = vunpack.c.l.b16 %v1779
        %v1936 = vunpack.c.h.b16 %v1779
        %v1937 = vunpack.c.l.b16 %v1780
        %v1938 = vunpack.c.l.b16 %v1781
        %v1939 = vunpack.c.h.b16 %v1781
        %v1940 = vunpack.c.l.b16 %v1782
        %v1941 = vunpack.c.l.b16 %v1783
        %v1942 = vunpack.c.h.b16 %v1783
        %v1943 = vunpack.c.l.b16 %v1784
        %v1944 = vunpack.c.l.b16 %v1785
        %v1945 = vunpack.c.h.b16 %v1785
        %v1946 = vunpack.c.l.b16 %v1786
        %v1947 = vunpack.c.l.b16 %v1787
        %v1948 = vunpack.c.h.b16 %v1787
        %v1949 = vunpack.c.l.b16 %v1788
        %v1950 = vunpack.c.l.b16 %v1789
        %v1951 = vunpack.c.h.b16 %v1789
        %v1952 = vunpack.c.l.b16 %v1790
        %v1953 = vunpack.c.l.b16 %v1791
        %v1954 = vunpack.c.h.b16 %v1791
        %v1955 = vunpack.c.l.b16 %v1792
        %v1956 = vunpack.c.l.b16 %v1793
        %v1957 = vunpack.c.h.b16 %v1793
        %v1958 = vunpack.c.l.b16 %v1794
        %v1959 = vunpack.c.l.b16 %v1795
        %v1960 = vunpack.c.h.b16 %v1795
        %v1961 = vunpack.c.l.b16 %v1796
        %v1962 = vunpack.c.l.b16 %v1797
        %v1963 = vunpack.c.h.b16 %v1797
        %v1964 = vunpack.c.l.b16 %v1798
        %v1965 = vunpack.c.l.b16 %v1799
        %v1966 = vunpack.c.h.b16 %v1799
        %v1967 = vunpack.c.l.b16 %v1800
        %v1968 = vunpack.c.l.b16 %v1801
        %v1969 = vunpack.c.h.b16 %v1801
        %v1970 = vunpack.c.l.b16 %v1802
        %v1971 = vunpack.c.l.b16 %v1803
        %v1972 = vunpack.c.h.b16 %v1803
        %v1973 = vunpack.c.l.b16 %v1804
        %v1974 = vunpack.c.l.b16 %v1805
        %v1975 = vunpack.c.h.b16 %v1805
        %v1976 = vunpack.c.l.b16 %v1806
        %v1977 = vunpack.c.l.b16 %v1807
        %v1978 = vunpack.c.h.b16 %v1807
        %v1979 = vunpack.c.l.b16 %v1808
        %v1980 = vunpack.c.l.b16 %v1809
        %v1981 = vunpack.c.h.b16 %v1809
        %v1982 = vunpack.c.l.b16 %v1810
        %v1983 = vunpack.c.l.b16 %v1811
        %v1984 = vunpack.c.h.b16 %v1811
        %v1985 = vunpack.c.l.b16 %v1812
        %v1986 = vunpack.c.l.b16 %v1813
        %v1987 = vunpack.c.h.b16 %v1813
        %v1988 = vunpack.c.l.b16 %v1814
        %v1989 = vunpack.c.l.b16 %v1815
        %v1990 = vunpack.c.h.b16 %v1815
        %v1991 = vunpack.c.l.b16 %v1816
        %v1992 = vunpack.c.l.b16 %v1817
        %v1993 = vunpack.c.h.b16 %v1817
        %v1994 = vunpack.c.l.b16 %v1818
        %v1995 = vunpack.c.l.b16 %v1819
        %v1996 = vunpack.c.h.b16 %v1819
        %v1997 = vunpack.c.l.b16 %v1820
        %v1998 = vpack.c.b16 %v1905, %v1902
        %v1999 = vpack.c.b16 %v1906, %v1903
        %v2000 = vpack.c.b16 %v1907, %v1904
        %v2001 = vpack.c.b16 %v1911, %v1908
        %v2002 = vpack.c.b16 %v1912, %v1909
        %v2003 = vpack.c.b16 %v1913, %v1910
        %v2004 = vpack.c.b16 %v1917, %v1914
        %v2005 = vpack.c.b16 %v1918, %v1915
        %v2006 = vpack.c.b16 %v1919, %v1916
        %v2007 = vpack.c.b16 %v1923, %v1920
        %v2008 = vpack.c.b16 %v1924, %v1921
        %v2009 = vpack.c.b16 %v1925, %v1922
        %v2010 = vpack.c.b16 %v1929, %v1926
        %v2011 = vpack.c.b16 %v1930, %v1927
        %v2012 = vpack.c.b16 %v1931, %v1928
        %v2013 = vpack.c.b16 %v1935, %v1932
        %v2014 = vpack.c.b16 %v1936, %v1933
        %v2015 = vpack.c.b16 %v1937, %v1934
        %v2016 = vpack.c.b16 %v1941, %v1938
        %v2017 = vpack.c.b16 %v1942, %v1939
        %v2018 = vpack.c.b16 %v1943, %v1940
        %v2019 = vpack.c.b16 %v1947, %v1944
        %v2020 = vpack.c.b16 %v1948, %v1945
        %v2021 = vpack.c.b16 %v1949, %v1946
        %v2022 = vpack.c.b16 %v1953, %v1950
        %v2023 = vpack.c.b16 %v1954, %v1951
        %v2024 = vpack.c.b16 %v1955, %v1952
        %v2025 = vpack.c.b16 %v1959, %v1956
        %v2026 = vpack.c.b16 %v1960, %v1957
        %v2027 = vpack.c.b16 %v1961, %v1958
        %v2028 = vpack.c.b16 %v1965, %v1962
        %v2029 = vpack.c.b16 %v1966, %v1963
        %v2030 = vpack.c.b16 %v1967, %v1964
        %v2031 = vpack.c.b16 %v1971, %v1968
        %v2032 = vpack.c.b16 %v1972, %v1969
        %v2033 = vpack.c.b16 %v1973, %v1970
        %v2034 = vpack.c.b16 %v1977, %v1974
        %v2035 = vpack.c.b16 %v1978, %v1975
        %v2036 = vpack.c.b16 %v1979, %v1976
        %v2037 = vpack.c.b16 %v1983, %v1980
        %v2038 = vpack.c.b16 %v1984, %v1981
        %v2039 = vpack.c.b16 %v1985, %v1982
        %v2040 = vpack.c.b16 %v1989, %v1986
        %v2041 = vpack.c.b16 %v1990, %v1987
        %v2042 = vpack.c.b16 %v1991, %v1988
        %v2043 = vpack.c.b16 %v1995, %v1992
        %v2044 = vpack.c.b16 %v1996, %v1993
        %v2045 = vpack.c.b16 %v1997, %v1994
        %2094 = vmatprep.subr.bf16.mxu0 %v1999
        %2095 = vmatpush1.bf16.msra.mxu0 %v1998
        %2096 = vmatprep.subr.bf16.mxu0 %v2002
        %2097 = vmatpush1.bf16.msra.mxu0 %v2001
        %2098 = vmatprep.subr.bf16.mxu0 %v2005
        %2099 = vmatpush1.bf16.msra.mxu0 %v2004
        %2100 = vmatprep.subr.bf16.mxu0 %v2008
        %2101 = vmatpush1.bf16.msra.mxu0 %v2007
        %2102 = vmatprep.subr.bf16.mxu0 %v2011
        %2103 = vmatpush1.bf16.msra.mxu0 %v2010
        %2104 = vmatprep.subr.bf16.mxu0 %v2014
        %2105 = vmatpush1.bf16.msra.mxu0 %v2013
        %2106 = vmatprep.subr.bf16.mxu0 %v2017
        %2107 = vmatpush1.bf16.msra.mxu0 %v2016
        %2108 = vmatprep.subr.bf16.mxu0 %v2020
        %2109 = vmatpush1.bf16.msra.mxu0 %v2019
        %2110 = vmatprep.subr.bf16.mxu0 %v2023
        %2111 = vmatpush1.bf16.msra.mxu0 %v2022
        %2112 = vmatprep.subr.bf16.mxu0 %v2026
        %2113 = vmatpush1.bf16.msra.mxu0 %v2025
        %2114 = vmatprep.subr.bf16.mxu0 %v2029
        %2115 = vmatpush1.bf16.msra.mxu0 %v2028
        %2116 = vmatprep.subr.bf16.mxu0 %v2032
        %2117 = vmatpush1.bf16.msra.mxu0 %v2031
        %2118 = vmatprep.subr.bf16.mxu0 %v2035
        %2119 = vmatpush1.bf16.msra.mxu0 %v2034
        %2120 = vmatprep.subr.bf16.mxu0 %v2038
        %2121 = vmatpush1.bf16.msra.mxu0 %v2037
        %2122 = vmatprep.subr.bf16.mxu0 %v2041
        %2123 = vmatpush1.bf16.msra.mxu0 %v2040
        %2124 = vmatprep.subr.bf16.mxu0 %v2044
        %2125 = vmatpush1.bf16.msra.mxu0 %v2043
        %2126 = vmatprep.mubr.bf16.mxu0 %v1742
        %2127 = vmatmul.mubr.bf16.gmra.mrb[0].mxu0 %v1741
        %v2128 = vpop.f32.mrb[0].mxu0
        %v2129 = vadd.f32 %v1826, %v2128
        %v2130 = vpop.f32.mrb[0].mxu0
        %v2131 = vadd.f32 %v1830, %v2130
        %v2132 = vpop.f32.mrb[0].mxu0
        %v2133 = vadd.f32 %v1826, %v2132
        %v2134 = vpop.f32.mrb[0].mxu0
        %v2135 = vadd.f32 %v1830, %v2134
        %2136 = vmatprep.mubr.bf16.mxu0 %v1744
        %2137 = vmatmul.mubr.bf16.gmra.mrb[0].mxu0 %v1743
        %v2138 = vpop.f32.mrb[0].mxu0
        %v2139 = vadd.f32 %v1826, %v2138
        %v2140 = vpop.f32.mrb[0].mxu0
        %v2141 = vadd.f32 %v1830, %v2140
        %v2142 = vpop.f32.mrb[0].mxu0
        %v2143 = vadd.f32 %v1826, %v2142
        %v2144 = vpop.f32.mrb[0].mxu0
        %v2145 = vadd.f32 %v1830, %v2144
        %2146 = vmatprep.mubr.bf16.mxu0 %v1746
        %2147 = vmatmul.mubr.bf16.gmra.mrb[0].mxu0 %v1745
        %v2148 = vpop.f32.mrb[0].mxu0
        %v2149 = vadd.f32 %v1826, %v2148
        %v2150 = vpop.f32.mrb[0].mxu0
        %v2151 = vadd.f32 %v1830, %v2150
        %v2152 = vpop.f32.mrb[0].mxu0
        %v2153 = vadd.f32 %v1826, %v2152
        %v2154 = vpop.f32.mrb[0].mxu0
        %v2155 = vadd.f32 %v1830, %v2154
        %2156 = vmatprep.mubr.bf16.mxu0 %v1748
        %2157 = vmatmul.mubr.bf16.gmra.mrb[0].mxu0 %v1747
        %v2158 = vpop.f32.mrb[0].mxu0
        %v2159 = vadd.f32 %v1826, %v2158
        %v2160 = vpop.f32.mrb[0].mxu0
        %v2161 = vadd.f32 %v1830, %v2160
        %v2162 = vpop.f32.mrb[0].mxu0
        %v2163 = vadd.f32 %v1826, %v2162
        %v2164 = vpop.f32.mrb[0].mxu0
        %v2165 = vadd.f32 %v1830, %v2164
        %2166 = vmatprep.mubr.bf16.mxu0 %v1750
        %2167 = vmatmul.mubr.bf16.gmra.mrb[0].mxu0 %v1749
        %v2168 = vpop.f32.mrb[0].mxu0
        %v2169 = vadd.f32 %v1826, %v2168
        %v2170 = vpop.f32.mrb[0].mxu0
        %v2171 = vadd.f32 %v1830, %v2170
        %v2172 = vpop.f32.mrb[0].mxu0
        %v2173 = vadd.f32 %v1826, %v2172
        %v2174 = vpop.f32.mrb[0].mxu0
        %v2175 = vadd.f32 %v1830, %v2174
        %2176 = vmatprep.mubr.bf16.mxu0 %v1752
        %2177 = vmatmul.mubr.bf16.gmra.mrb[0].mxu0 %v1751
        %v2178 = vpop.f32.mrb[0].mxu0
        %v2179 = vadd.f32 %v1826, %v2178
        %v2180 = vpop.f32.mrb[0].mxu0
        %v2181 = vadd.f32 %v1830, %v2180
        %v2182 = vpop.f32.mrb[0].mxu0
        %v2183 = vadd.f32 %v1826, %v2182
        %v2184 = vpop.f32.mrb[0].mxu0
        %v2185 = vadd.f32 %v1830, %v2184
        %2186 = vmatprep.mubr.bf16.mxu0 %v1754
        %2187 = vmatmul.mubr.bf16.gmra.mrb[0].mxu0 %v1753
        %v2188 = vpop.f32.mrb[0].mxu0
        %v2189 = vadd.f32 %v1826, %v2188
        %v2190 = vpop.f32.mrb[0].mxu0
        %v2191 = vadd.f32 %v1830, %v2190
        %v2192 = vpop.f32.mrb[0].mxu0
        %v2193 = vadd.f32 %v1826, %v2192
        %v2194 = vpop.f32.mrb[0].mxu0
        %v2195 = vadd.f32 %v1830, %v2194
        %2196 = vmatprep.mubr.bf16.mxu0 %v1756
        %2197 = vmatmul.mubr.bf16.gmra.mrb[0].mxu0 %v1755
        %v2198 = vpop.f32.mrb[0].mxu0
        %v2199 = vadd.f32 %v1826, %v2198
        %v2200 = vpop.f32.mrb[0].mxu0
        %v2201 = vadd.f32 %v1830, %v2200
        %v2202 = vpop.f32.mrb[0].mxu0
        %v2203 = vadd.f32 %v1826, %v2202
        %v2204 = vpop.f32.mrb[0].mxu0
        %v2205 = vadd.f32 %v1830, %v2204
        %2206 = vdwg.mxu0
        %2207 = vmatprep.subr.bf16.mxu0 0
        %2208 = vmatpush1.bf16.msra.mxu0 %v2000
        %2209 = vmatprep.subr.bf16.mxu0 0
        %2210 = vmatpush1.bf16.msra.mxu0 %v2003
        %2211 = vmatprep.subr.bf16.mxu0 0
        %2212 = vmatpush1.bf16.msra.mxu0 %v2006
        %2213 = vmatprep.subr.bf16.mxu0 0
        %2214 = vmatpush1.bf16.msra.mxu0 %v2009
        %2215 = vmatprep.subr.bf16.mxu0 0
        %2216 = vmatpush1.bf16.msra.mxu0 %v2012
        %2217 = vmatprep.subr.bf16.mxu0 0
        %2218 = vmatpush1.bf16.msra.mxu0 %v2015
        %2219 = vmatprep.subr.bf16.mxu0 0
        %2220 = vmatpush1.bf16.msra.mxu0 %v2018
        %2221 = vmatprep.subr.bf16.mxu0 0
        %2222 = vmatpush1.bf16.msra.mxu0 %v2021
        %2223 = vmatprep.subr.bf16.mxu0 0
        %2224 = vmatpush1.bf16.msra.mxu0 %v2024
        %2225 = vmatprep.subr.bf16.mxu0 0
        %2226 = vmatpush1.bf16.msra.mxu0 %v2027
        %2227 = vmatprep.subr.bf16.mxu0 0
        %2228 = vmatpush1.bf16.msra.mxu0 %v2030
        %2229 = vmatprep.subr.bf16.mxu0 0
        %2230 = vmatpush1.bf16.msra.mxu0 %v2033
        %2231 = vmatprep.subr.bf16.mxu0 0
        %2232 = vmatpush1.bf16.msra.mxu0 %v2036
        %2233 = vmatprep.subr.bf16.mxu0 0
        %2234 = vmatpush1.bf16.msra.mxu0 %v2039
        %2235 = vmatprep.subr.bf16.mxu0 0
        %2236 = vmatpush1.bf16.msra.mxu0 %v2042
        %2237 = vmatprep.subr.bf16.mxu0 0
        %2238 = vmatpush1.bf16.msra.mxu0 %v2045
        %2239 = vmatprep.mubr.bf16.mxu0 %v1742
        %2240 = vmatmul.mubr.bf16.gmra.mrb[0].mxu0 %v1741
        %v2241 = vpop.f32.mrb[0].mxu0
        %v2242 = vadd.f32 %v1834, %v2241
        %v2243 = vpop.f32.mrb[0].mxu0
        %v2244 = vpop.f32.mrb[0].mxu0
        %v2245 = vadd.f32 %v1834, %v2244
        %v2246 = vpop.f32.mrb[0].mxu0
        %2247 = vmatprep.mubr.bf16.mxu0 %v1744
        %2248 = vmatmul.mubr.bf16.gmra.mrb[0].mxu0 %v1743
        %v2249 = vpop.f32.mrb[0].mxu0
        %v2250 = vadd.f32 %v1834, %v2249
        %v2251 = vpop.f32.mrb[0].mxu0
        %v2252 = vpop.f32.mrb[0].mxu0
        %v2253 = vadd.f32 %v1834, %v2252
        %v2254 = vpop.f32.mrb[0].mxu0
        %2255 = vmatprep.mubr.bf16.mxu0 %v1746
        %2256 = vmatmul.mubr.bf16.gmra.mrb[0].mxu0 %v1745
        %v2257 = vpop.f32.mrb[0].mxu0
        %v2258 = vadd.f32 %v1834, %v2257
        %v2259 = vpop.f32.mrb[0].mxu0
        %v2260 = vpop.f32.mrb[0].mxu0
        %v2261 = vadd.f32 %v1834, %v2260
        %v2262 = vpop.f32.mrb[0].mxu0
        %2263 = vmatprep.mubr.bf16.mxu0 %v1748
        %2264 = vmatmul.mubr.bf16.gmra.mrb[0].mxu0 %v1747
        %v2265 = vpop.f32.mrb[0].mxu0
        %v2266 = vadd.f32 %v1834, %v2265
        %v2267 = vpop.f32.mrb[0].mxu0
        %v2268 = vpop.f32.mrb[0].mxu0
        %v2269 = vadd.f32 %v1834, %v2268
        %v2270 = vpop.f32.mrb[0].mxu0
        %2271 = vmatprep.mubr.bf16.mxu0 %v1750
        %2272 = vmatmul.mubr.bf16.gmra.mrb[0].mxu0 %v1749
        %v2273 = vpop.f32.mrb[0].mxu0
        %v2274 = vadd.f32 %v1834, %v2273
        %v2275 = vpop.f32.mrb[0].mxu0
        %v2276 = vpop.f32.mrb[0].mxu0
        %v2277 = vadd.f32 %v1834, %v2276
        %v2278 = vpop.f32.mrb[0].mxu0
        %2279 = vmatprep.mubr.bf16.mxu0 %v1752
        %2280 = vmatmul.mubr.bf16.gmra.mrb[0].mxu0 %v1751
        %v2281 = vpop.f32.mrb[0].mxu0
        %v2282 = vadd.f32 %v1834, %v2281
        %v2283 = vpop.f32.mrb[0].mxu0
        %v2284 = vpop.f32.mrb[0].mxu0
        %v2285 = vadd.f32 %v1834, %v2284
        %v2286 = vpop.f32.mrb[0].mxu0
        %2287 = vmatprep.mubr.bf16.mxu0 %v1754
        %2288 = vmatmul.mubr.bf16.gmra.mrb[0].mxu0 %v1753
        %v2289 = vpop.f32.mrb[0].mxu0
        %v2290 = vadd.f32 %v1834, %v2289
        %v2291 = vpop.f32.mrb[0].mxu0
        %v2292 = vpop.f32.mrb[0].mxu0
        %v2293 = vadd.f32 %v1834, %v2292
        %v2294 = vpop.f32.mrb[0].mxu0
        %2295 = vmatprep.mubr.bf16.mxu0 %v1756
        %2296 = vmatmul.mubr.bf16.gmra.mrb[0].mxu0 %v1755
        %v2297 = vpop.f32.mrb[0].mxu0
        %v2298 = vadd.f32 %v1834, %v2297
        %v2299 = vpop.f32.mrb[0].mxu0
        %v2300 = vpop.f32.mrb[0].mxu0
        %v2301 = vadd.f32 %v1834, %v2300
        %v2302 = vpop.f32.mrb[0].mxu0
        %2303 = vdwg.mxu0
        %2304 = vst [vmem:[%s409] sm:$0xff] %v2129
        %2305 = vst [vmem:[%s409 + $0x8] sm:$0xff] %v2131
        %2306 = vst [vmem:[%s409 + $0x10] sm:$0xff] %v2242
        %2307 = vst [vmem:[%s409 + $0x18] sm:$0xff] %v2133
        %2308 = vst [vmem:[%s409 + $0x20] sm:$0xff] %v2135
        %2309 = vst [vmem:[%s409 + $0x28] sm:$0xff] %v2245
        %2310 = vst [vmem:[%s409 + $0x30] sm:$0xff] %v2139
        %2311 = vst [vmem:[%s409 + $0x38] sm:$0xff] %v2141
        %2312 = vst [vmem:[%s409 + $0x40] sm:$0xff] %v2250
        %2313 = vst [vmem:[%s409 + $0x48] sm:$0xff] %v2143
        %2314 = vst [vmem:[%s409 + $0x50] sm:$0xff] %v2145
        %2315 = vst [vmem:[%s409 + $0x58] sm:$0xff] %v2253
        %2316 = vst [vmem:[%s409 + $0x60] sm:$0xff] %v2149
        %2317 = vst [vmem:[%s409 + $0x68] sm:$0xff] %v2151
        %2318 = vst [vmem:[%s409 + $0x70] sm:$0xff] %v2258
        %2319 = vst [vmem:[%s409 + $0x78] sm:$0xff] %v2153
        %2320 = vst [vmem:[%s409 + $0x80] sm:$0xff] %v2155
        %2321 = vst [vmem:[%s409 + $0x88] sm:$0xff] %v2261
        %2322 = vst [vmem:[%s409 + $0x90] sm:$0xff] %v2159
        %2323 = vst [vmem:[%s409 + $0x98] sm:$0xff] %v2161
        %2324 = vst [vmem:[%s409 + $0xa0] sm:$0xff] %v2266
        %2325 = vst [vmem:[%s409 + $0xa8] sm:$0xff] %v2163
        %2326 = vst [vmem:[%s409 + $0xb0] sm:$0xff] %v2165
        %2327 = vst [vmem:[%s409 + $0xb8] sm:$0xff] %v2269
        %2328 = vst [vmem:[%s409 + $0xc0] sm:$0xff] %v2169
        %2329 = vst [vmem:[%s409 + $0xc8] sm:$0xff] %v2171
        %2330 = vst [vmem:[%s409 + $0xd0] sm:$0xff] %v2274
        %2331 = vst [vmem:[%s409 + $0xd8] sm:$0xff] %v2173
        %2332 = vst [vmem:[%s409 + $0xe0] sm:$0xff] %v2175
        %2333 = vst [vmem:[%s409 + $0xe8] sm:$0xff] %v2277
        %2334 = vst [vmem:[%s409 + $0xf0] sm:$0xff] %v2179
        %2335 = vst [vmem:[%s409 + $0xf8] sm:$0xff] %v2181
        %2336 = vst [vmem:[%s409 + $0x100] sm:$0xff] %v2282
        %2337 = vst [vmem:[%s409 + $0x108] sm:$0xff] %v2183
        %2338 = vst [vmem:[%s409 + $0x110] sm:$0xff] %v2185
        %2339 = vst [vmem:[%s409 + $0x118] sm:$0xff] %v2285
        %2340 = vst [vmem:[%s409 + $0x120] sm:$0xff] %v2189
        %2341 = vst [vmem:[%s409 + $0x128] sm:$0xff] %v2191
        %2342 = vst [vmem:[%s409 + $0x130] sm:$0xff] %v2290
        %2343 = vst [vmem:[%s409 + $0x138] sm:$0xff] %v2193
        %2344 = vst [vmem:[%s409 + $0x140] sm:$0xff] %v2195
        %2345 = vst [vmem:[%s409 + $0x148] sm:$0xff] %v2293
        %2346 = vst [vmem:[%s409 + $0x150] sm:$0xff] %v2199
        %2347 = vst [vmem:[%s409 + $0x158] sm:$0xff] %v2201
        %2348 = vst [vmem:[%s409 + $0x160] sm:$0xff] %v2298
        %2349 = vst [vmem:[%s409 + $0x168] sm:$0xff] %v2203
        %2350 = vst [vmem:[%s409 + $0x170] sm:$0xff] %v2205
        %2351 = vst [vmem:[%s409 + $0x178] sm:$0xff] %v2301
        %s2352 = sand.u32 %s230, 1
        %s2353 = scalar_lea.sflag [#allocation4], %s2352
        %s2354 = sand.u32 %s230, 1
        %s2355 = smul.addr %s2354, 384
        %s2356 = scalar_lea.vmem [#allocation11], %s2355
        // Predicated region
        $region77: #{tpu_custom_call.1} parent=55 // pred_check
          %p2357 = pneg %p240
        $region78: #{tpu_custom_call.1} parent=55 // pred_check_branch
          %2359 = sbr.rel (%p2357) target = $region80
        $region79: #{tpu_custom_call.1} parent=55 // pred_region
          %s2360 = smul.u32 16, %s28
          %s2362 = ssub.s32 6144, 6144
          %2363 = vsyncadd %s2353, %s2362
          %s2364 = smul.addr %s2360, 3
          %s2365 = smul.addr %s2364, 128
          %s2366 = scalar_lea.hbm %s9, %s2365
          %s2367 = sshll.u32 %s2356, 4
          %s2368 = int_to_ptr.vmem [resolvable:$true] %s2367
          %2373 = dma.vmem_to_hbm [thread:$0]  %s2368, 6144, %s2366, %s2353, 384, 384, 24
        $region80: #{tpu_custom_call.1} parent=55 // pred_fallthru
          _
      $region56: #{tpu_custom_call.1} parent=5 // pred_fallthru
        _
      %p2374 = scmp.le.s32.totalorder 2, %s23
      // Predicated region
      $region81: #{tpu_custom_call.1} parent=5 // pred_check
        %p2375 = pneg %p2374
      $region82: #{tpu_custom_call.1} parent=5 // pred_check_branch
        %2377 = sbr.rel (%p2375) target = $region84
      $region83: #{tpu_custom_call.1} parent=5 // pred_region
        %s2378 = ssub.s32 %s23, 2
        // Predicated region
        $region85: #{tpu_custom_call.1} parent=83 // pred_check
          %p2379 = pneg %p246
        $region86: #{tpu_custom_call.1} parent=83 // pred_check_branch
          %2381 = sbr.rel (%p2379) target = $region88
        $region87: #{tpu_custom_call.1} parent=83 // pred_region
          %s2382 = sand.u32 %s231, 1
          %s2383 = scalar_lea.sflag [#allocation4], %s2382
          %s2384 = sand.u32 %s231, 1
          %s2385 = smul.addr %s2384, 384
          %s2386 = scalar_lea.vmem [#allocation11], %s2385
          %2387 = dma.done %s2383, 6144
        $region88: #{tpu_custom_call.1} parent=83 // pred_fallthru
          _
      $region84: #{tpu_custom_call.1} parent=5 // pred_fallthru
        _
    $region6: #{tpu_custom_call.1} parent=1 // loop_footer
      %s27 = sadd.s32 1, %s23
    $region7: #{tpu_custom_call.1} parent=1 // loop_footer_branch
      %22 = sbr.rel target = $region3
    $region8: #{tpu_custom_call.1} parent=1 // loop_exit
      _
    %2388 = vsyncpa [#allocation3], 1
    %s2389 = scalar_lea.sflag [#allocation3], 1
    %2390 = vsyncpa %s2389, 1
    %2391 = vsyncpa [#allocation6], 1
    %2392 = vsyncpa [#allocation9], 1
    %2393 = vsyncpa [#allocation4], 1
    %s2394 = scalar_lea.sflag [#allocation4], 1
    %2395 = vsyncpa %s2394, 1

// kernel: tpu_custom_call.1
$region0: #{tpu_custom_call.1}
  #allocation0 [shape = 'u32[]', space=smem, size = 0x4, offset = 0x4, fixed_abs, tag = 'smem constant byte address 0x4 - core index']
  #allocation1 [shape = 'u32[144,128]{1,0:T(1,128)}', space=vmem, size = 0x12000, scoped, tag = 'internal scratch']
  %s0 = inlined_call_operand.hbm [shape: f32[256,384], index: 0, kind: input, shape index: {}]
  %s1 = inlined_call_operand.hbm [shape: bf16[384,256], index: 1, kind: input, shape index: {}]
  %s2 = inlined_call_operand.vmem [shape: f32[1,256], index: 2, kind: input, shape index: {}]
  %s3 = inlined_call_operand.hbm [shape: bf16[256,256], index: 3, kind: input, shape index: {}]
  %s4 = inlined_call_operand.vmem [shape: f32[1,256], index: 4, kind: input, shape index: {}]
  %s5 = inlined_call_operand.hbm [shape: bf16[256,256], index: 5, kind: input, shape index: {}]
  %s6 = inlined_call_operand.vmem [shape: f32[1,256], index: 6, kind: input, shape index: {}]
  %s7 = inlined_call_operand.hbm [shape: bf16[256,384], index: 7, kind: input, shape index: {}]
  %s8 = inlined_call_operand.vmem [shape: f32[1,384], index: 8, kind: input, shape index: {}]
  %s9 = inlined_call_operand.hbm [shape: f32[256,384], index: 9, kind: output, shape index: {}]
  %s10 = sld [smem:[#allocation0]]
  $region89: #{tpu_custom_call.1} parent=0
    _
  %s12 = ssub.s32 1, %s10
  %s13 = scalar_select 0, %s12, %s10
  $region1: #{tpu_custom_call.1} parent=0
    #allocation2 [shape = 'u8[393216]{0}', space=vmem, size = 0x60000, scoped, tag = 'input window, operand 0']
    #allocation3 [shape = 's32[2]{0}', space=sflag, size = 0x8, scoped, tag = 'scoped memory for tpu_custom_call.1']
    #allocation4 [shape = 's32[2]{0}', space=sflag, size = 0x8, scoped, tag = 'scoped memory for tpu_custom_call.1']
    #allocation5 [shape = 'u8[196608]{0}', space=vmem, size = 0x30000, scoped, tag = 'input window, operand 1, single buffered']
    #allocation6 [shape = 's32[1]{0}', space=sflag, size = 0x4, scoped, tag = 'scoped memory for tpu_custom_call.1']
    #allocation7 [shape = 'u8[131072]{0}', space=vmem, size = 0x20000, scoped, tag = 'input window, operand 3, single buffered']
    #allocation8 [shape = 'u8[131072]{0}', space=vmem, size = 0x20000, scoped, tag = 'input window, operand 5, single buffered']
    #allocation9 [shape = 's32[1]{0}', space=sflag, size = 0x4, scoped, tag = 'scoped memory for tpu_custom_call.1']
    #allocation10 [shape = 'u8[196608]{0}', space=vmem, size = 0x30000, scoped, tag = 'input window, operand 7, single buffered']
    #allocation11 [shape = 'u8[393216]{0}', space=vmem, size = 0x60000, scoped, tag = 'output window, operand 0']
    %14 = vsyncpa [#allocation3], 0
    %s15 = scalar_lea.sflag [#allocation3], 1
    %16 = vsyncpa %s15, 0
    %17 = vsyncpa [#allocation6], 0
    %18 = vsyncpa [#allocation9], 0
    %19 = vsyncpa [#allocation4], 0
    %s20 = scalar_lea.sflag [#allocation4], 1
    %21 = vsyncpa %s20, 0
    loop: start=0, step=1, limit=4
    $region2: #{tpu_custom_call.1} parent=1 // loop_pre_header
      _
    $region3: #{tpu_custom_call.1} parent=1 // loop_header
      %s23 = sphi 0, %s27
      %p24 = scmp.ge.s32.totalorder %s23, 4
      %s33 = sphi 0, %s35
      %s36 = sphi 0, %s33
      %s37 = sphi 0, %s36
      %s53 = sphi 0, %s37
      %s57 = sphi 0, %s57
      %s59 = sphi 0, %s57
      %s60 = sphi 0, %s59
      %s74 = sphi 0, %s60
      %s78 = sphi 0, %s78
      %s80 = sphi 0, %s78
      %s81 = sphi 0, %s80
      %s95 = sphi 0, %s81
      %s99 = sphi 0, %s99
      %s101 = sphi 0, %s99
      %s102 = sphi 0, %s101
      %s116 = sphi 0, %s102
      %s120 = sphi 0, %s120
      %s122 = sphi 0, %s120
      %s123 = sphi 0, %s122
      %s137 = sphi 0, %s123
      %s141 = sphi 0, %s141
      %s143 = sphi 0, %s141
      %s144 = sphi 0, %s143
      %s158 = sphi 0, %s144
      %s162 = sphi 0, %s162
      %s164 = sphi 0, %s162
      %s165 = sphi 0, %s164
      %s179 = sphi 0, %s165
      %s183 = sphi 0, %s183
      %s185 = sphi 0, %s183
      %s186 = sphi 0, %s185
      %s200 = sphi 0, %s186
      %s204 = sphi 0, %s204
      %s206 = sphi 0, %s204
      %s207 = sphi 0, %s206
      %s221 = sphi 0, %s207
      %s227 = sphi 0, %s229
      %s230 = sphi 0, %s227
      %s231 = sphi 0, %s230
      %s247 = sphi 0, %s231
    $region4: #{tpu_custom_call.1} parent=1 // loop_header_branch
      %26 = sbr.rel (%p24) target = $region8
    $region5: #{tpu_custom_call.1} parent=1 // loop_body
      %s28 = ssub.s32 %s23, 1
      %s29 = ssub.s32 %s23, 2
      %s30 = sadd.s32 %s23, 1
      %s31 = ssub.s32 %s23, %s30
      %p32 = scmp.eq.s32.totalorder %s31, 0
      %s34 = sadd.s32 %s33, 1
      %s35 = scalar_select %p32, %s33, %s34
      %p38 = pneg %p32
      %p39 = scmp.eq.s32.totalorder %s23, 1
      %p40 = por %p38, %p39
      %p41 = scmp.ne.s32.totalorder %s33, %s36
      %p42 = scmp.eq.s32.totalorder %s23, 0
      %p43 = por %p41, %p42
      %p44 = scmp.ne.s32.totalorder %s33, %s36
      %p45 = scmp.eq.s32.totalorder %s28, 1
      %p46 = por %p44, %p45
      %p47 = scmp.ne.s32.totalorder %s36, %s37
      %p48 = scmp.eq.s32.totalorder %s28, 0
      %p49 = por %p47, %p48
      %p50 = scmp.ne.s32.totalorder %s36, %s37
      %p51 = scmp.eq.s32.totalorder %s29, 1
      %p52 = por %p50, %p51
      %p54 = scmp.ne.s32.totalorder %s37, %s53
      %p55 = scmp.eq.s32.totalorder %s29, 0
      %p56 = por %p54, %p55
      %s58 = sadd.s32 %s57, 1
      %p61 = scmp.eq.s32.totalorder %s23, 1
      %p62 = scmp.ne.s32.totalorder %s57, %s59
      %p63 = scmp.eq.s32.totalorder %s23, 0
      %p64 = por %p62, %p63
      %p65 = scmp.ne.s32.totalorder %s57, %s59
      %p66 = scmp.eq.s32.totalorder %s28, 1
      %p67 = por %p65, %p66
      %p68 = scmp.ne.s32.totalorder %s59, %s60
      %p69 = scmp.eq.s32.totalorder %s28, 0
      %p70 = por %p68, %p69
      %p71 = scmp.ne.s32.totalorder %s59, %s60
      %p72 = scmp.eq.s32.totalorder %s29, 1
      %p73 = por %p71, %p72
      %p75 = scmp.ne.s32.totalorder %s60, %s74
      %p76 = scmp.eq.s32.totalorder %s29, 0
      %p77 = por %p75, %p76
      %s79 = sadd.s32 %s78, 1
      %p82 = scmp.eq.s32.totalorder %s23, 1
      %p83 = scmp.ne.s32.totalorder %s78, %s80
      %p84 = scmp.eq.s32.totalorder %s23, 0
      %p85 = por %p83, %p84
      %p86 = scmp.ne.s32.totalorder %s78, %s80
      %p87 = scmp.eq.s32.totalorder %s28, 1
      %p88 = por %p86, %p87
      %p89 = scmp.ne.s32.totalorder %s80, %s81
      %p90 = scmp.eq.s32.totalorder %s28, 0
      %p91 = por %p89, %p90
      %p92 = scmp.ne.s32.totalorder %s80, %s81
      %p93 = scmp.eq.s32.totalorder %s29, 1
      %p94 = por %p92, %p93
      %p96 = scmp.ne.s32.totalorder %s81, %s95
      %p97 = scmp.eq.s32.totalorder %s29, 0
      %p98 = por %p96, %p97
      %s100 = sadd.s32 %s99, 1
      %p103 = scmp.eq.s32.totalorder %s23, 1
      %p104 = scmp.ne.s32.totalorder %s99, %s101
      %p105 = scmp.eq.s32.totalorder %s23, 0
      %p106 = por %p104, %p105
      %p107 = scmp.ne.s32.totalorder %s99, %s101
      %p108 = scmp.eq.s32.totalorder %s28, 1
      %p109 = por %p107, %p108
      %p110 = scmp.ne.s32.totalorder %s101, %s102
      %p111 = scmp.eq.s32.totalorder %s28, 0
      %p112 = por %p110, %p111
      %p113 = scmp.ne.s32.totalorder %s101, %s102
      %p114 = scmp.eq.s32.totalorder %s29, 1
      %p115 = por %p113, %p114
      %p117 = scmp.ne.s32.totalorder %s102, %s116
      %p118 = scmp.eq.s32.totalorder %s29, 0
      %p119 = por %p117, %p118
      %s121 = sadd.s32 %s120, 1
      %p124 = scmp.eq.s32.totalorder %s23, 1
      %p125 = scmp.ne.s32.totalorder %s120, %s122
      %p126 = scmp.eq.s32.totalorder %s23, 0
      %p127 = por %p125, %p126
      %p128 = scmp.ne.s32.totalorder %s120, %s122
      %p129 = scmp.eq.s32.totalorder %s28, 1
      %p130 = por %p128, %p129
      %p131 = scmp.ne.s32.totalorder %s122, %s123
      %p132 = scmp.eq.s32.totalorder %s28, 0
      %p133 = por %p131, %p132
      %p134 = scmp.ne.s32.totalorder %s122, %s123
      %p135 = scmp.eq.s32.totalorder %s29, 1
      %p136 = por %p134, %p135
      %p138 = scmp.ne.s32.totalorder %s123, %s137
      %p139 = scmp.eq.s32.totalorder %s29, 0
      %p140 = por %p138, %p139
      %s142 = sadd.s32 %s141, 1
      %p145 = scmp.eq.s32.totalorder %s23, 1
      %p146 = scmp.ne.s32.totalorder %s141, %s143
      %p147 = scmp.eq.s32.totalorder %s23, 0
      %p148 = por %p146, %p147
      %p149 = scmp.ne.s32.totalorder %s141, %s143
      %p150 = scmp.eq.s32.totalorder %s28, 1
      %p151 = por %p149, %p150
      %p152 = scmp.ne.s32.totalorder %s143, %s144
      %p153 = scmp.eq.s32.totalorder %s28, 0
      %p154 = por %p152, %p153
      %p155 = scmp.ne.s32.totalorder %s143, %s144
      %p156 = scmp.eq.s32.totalorder %s29, 1
      %p157 = por %p155, %p156
      %p159 = scmp.ne.s32.totalorder %s144, %s158
      %p160 = scmp.eq.s32.totalorder %s29, 0
      %p161 = por %p159, %p160
      %s163 = sadd.s32 %s162, 1
      %p166 = scmp.eq.s32.totalorder %s23, 1
      %p167 = scmp.ne.s32.totalorder %s162, %s164
      %p168 = scmp.eq.s32.totalorder %s23, 0
      %p169 = por %p167, %p168
      %p170 = scmp.ne.s32.totalorder %s162, %s164
      %p171 = scmp.eq.s32.totalorder %s28, 1
      %p172 = por %p170, %p171
      %p173 = scmp.ne.s32.totalorder %s164, %s165
      %p174 = scmp.eq.s32.totalorder %s28, 0
      %p175 = por %p173, %p174
      %p176 = scmp.ne.s32.totalorder %s164, %s165
      %p177 = scmp.eq.s32.totalorder %s29, 1
      %p178 = por %p176, %p177
      %p180 = scmp.ne.s32.totalorder %s165, %s179
      %p181 = scmp.eq.s32.totalorder %s29, 0
      %p182 = por %p180, %p181
      %s184 = sadd.s32 %s183, 1
      %p187 = scmp.eq.s32.totalorder %s23, 1
      %p188 = scmp.ne.s32.totalorder %s183, %s185
      %p189 = scmp.eq.s32.totalorder %s23, 0
      %p190 = por %p188, %p189
      %p191 = scmp.ne.s32.totalorder %s183, %s185
      %p192 = scmp.eq.s32.totalorder %s28, 1
      %p193 = por %p191, %p192
      %p194 = scmp.ne.s32.totalorder %s185, %s186
      %p195 = scmp.eq.s32.totalorder %s28, 0
      %p196 = por %p194, %p195
      %p197 = scmp.ne.s32.totalorder %s185, %s186
      %p198 = scmp.eq.s32.totalorder %s29, 1
      %p199 = por %p197, %p198
      %p201 = scmp.ne.s32.totalorder %s186, %s200
      %p202 = scmp.eq.s32.totalorder %s29, 0
      %p203 = por %p201, %p202
      %s205 = sadd.s32 %s204, 1
      %p208 = scmp.eq.s32.totalorder %s23, 1
      %p209 = scmp.ne.s32.totalorder %s204, %s206
      %p210 = scmp.eq.s32.totalorder %s23, 0
      %p211 = por %p209, %p210
      %p212 = scmp.ne.s32.totalorder %s204, %s206
      %p213 = scmp.eq.s32.totalorder %s28, 1
      %p214 = por %p212, %p213
      %p215 = scmp.ne.s32.totalorder %s206, %s207
      %p216 = scmp.eq.s32.totalorder %s28, 0
      %p217 = por %p215, %p216
      %p218 = scmp.ne.s32.totalorder %s206, %s207
      %p219 = scmp.eq.s32.totalorder %s29, 1
      %p220 = por %p218, %p219
      %p222 = scmp.ne.s32.totalorder %s207, %s221
      %p223 = scmp.eq.s32.totalorder %s29, 0
      %p224 = por %p222, %p223
      %s225 = ssub.s32 %s23, %s30
      %p226 = scmp.eq.s32.totalorder %s225, 0
      %s228 = sadd.s32 %s227, 1
      %s229 = scalar_select %p226, %s227, %s228
      %p232 = pneg %p226
      %p233 = scmp.eq.s32.totalorder %s23, 1
      %p234 = por %p232, %p233
      %p235 = scmp.ne.s32.totalorder %s227, %s230
      %p236 = scmp.eq.s32.totalorder %s23, 0
      %p237 = por %p235, %p236
      %p238 = scmp.ne.s32.totalorder %s227, %s230
      %p239 = scmp.eq.s32.totalorder %s28, 1
      %p240 = por %p238, %p239
      %p241 = scmp.ne.s32.totalorder %s230, %s231
      %p242 = scmp.eq.s32.totalorder %s28, 0
      %p243 = por %p241, %p242
      %p244 = scmp.ne.s32.totalorder %s230, %s231
      %p245 = scmp.eq.s32.totalorder %s29, 1
      %p246 = por %p244, %p245
      %p248 = scmp.ne.s32.totalorder %s231, %s247
      %p249 = scmp.eq.s32.totalorder %s29, 0
      %p250 = por %p248, %p249
      %p251 = scmp.le.s32.totalorder 1, %s23
      %p252 = scmp.lt.s32.totalorder %s23, 3
      %p253 = pnand %p251, %p252
      %p254 = pneg %p253
      // Predicated region
      $region9: #{tpu_custom_call.1} parent=5 // pred_check
        _
      $region10: #{tpu_custom_call.1} parent=5 // pred_check_branch
        %256 = sbr.rel (%p253) target = $region12
      $region11: #{tpu_custom_call.1} parent=5 // pred_region
        %s257 = ssub.s32 %s23, 1
        // Predicated region
        $region13: #{tpu_custom_call.1} parent=11 // pred_check
          %p258 = pneg %p70
        $region14: #{tpu_custom_call.1} parent=11 // pred_check_branch
          %260 = sbr.rel (%p258) target = $region16
        $region15: #{tpu_custom_call.1} parent=11 // pred_region
          %s262 = ssub.s32 6144, 6144
          %263 = vsyncadd [#allocation6], %s262
          %s264 = sshll.u32 [#allocation5], 4
          %s265 = int_to_ptr.vmem [resolvable:$true] %s264
          %270 = dma.hbm_to_vmem [thread:$0]  %s1, 6144, %s265, [#allocation6], 128, 128, 8
        $region16: #{tpu_custom_call.1} parent=11 // pred_fallthru
          _
        // Predicated region
        $region17: #{tpu_custom_call.1} parent=11 // pred_check
          %p271 = pneg %p91
        $region18: #{tpu_custom_call.1} parent=11 // pred_check_branch
          %273 = sbr.rel (%p271) target = $region20
        $region19: #{tpu_custom_call.1} parent=11 // pred_region
          _
        $region20: #{tpu_custom_call.1} parent=11 // pred_fallthru
          _
        // Predicated region
        $region21: #{tpu_custom_call.1} parent=11 // pred_check
          %p274 = pneg %p112
        $region22: #{tpu_custom_call.1} parent=11 // pred_check_branch
          %276 = sbr.rel (%p274) target = $region24
        $region23: #{tpu_custom_call.1} parent=11 // pred_region
          %s278 = ssub.s32 4096, 4096
          %279 = vsyncadd [#allocation6], %s278
          %s280 = sshll.u32 [#allocation7], 4
          %s281 = int_to_ptr.vmem [resolvable:$true] %s280
          %286 = dma.hbm_to_vmem [thread:$0]  %s3, 4096, %s281, [#allocation6], 128, 128, 8
        $region24: #{tpu_custom_call.1} parent=11 // pred_fallthru
          _
        // Predicated region
        $region25: #{tpu_custom_call.1} parent=11 // pred_check
          %p287 = pneg %p133
        $region26: #{tpu_custom_call.1} parent=11 // pred_check_branch
          %289 = sbr.rel (%p287) target = $region28
        $region27: #{tpu_custom_call.1} parent=11 // pred_region
          _
        $region28: #{tpu_custom_call.1} parent=11 // pred_fallthru
          _
        // Predicated region
        $region29: #{tpu_custom_call.1} parent=11 // pred_check
          %p290 = pneg %p154
        $region30: #{tpu_custom_call.1} parent=11 // pred_check_branch
          %292 = sbr.rel (%p290) target = $region32
        $region31: #{tpu_custom_call.1} parent=11 // pred_region
          %s294 = ssub.s32 4096, 4096
          %295 = vsyncadd [#allocation9], %s294
          %s296 = sshll.u32 [#allocation8], 4
          %s297 = int_to_ptr.vmem [resolvable:$true] %s296
          %302 = dma.hbm_to_vmem [thread:$0]  %s5, 4096, %s297, [#allocation9], 128, 128, 8
        $region32: #{tpu_custom_call.1} parent=11 // pred_fallthru
          _
        // Predicated region
        $region33: #{tpu_custom_call.1} parent=11 // pred_check
          %p303 = pneg %p175
        $region34: #{tpu_custom_call.1} parent=11 // pred_check_branch
          %305 = sbr.rel (%p303) target = $region36
        $region35: #{tpu_custom_call.1} parent=11 // pred_region
          _
        $region36: #{tpu_custom_call.1} parent=11 // pred_fallthru
          _
        // Predicated region
        $region37: #{tpu_custom_call.1} parent=11 // pred_check
          %p306 = pneg %p196
        $region38: #{tpu_custom_call.1} parent=11 // pred_check_branch
          %308 = sbr.rel (%p306) target = $region40
        $region39: #{tpu_custom_call.1} parent=11 // pred_region
          %s310 = ssub.s32 6144, 6144
          %311 = vsyncadd [#allocation9], %s310
          %s312 = sshll.u32 [#allocation10], 4
          %s313 = int_to_ptr.vmem [resolvable:$true] %s312
          %318 = dma.hbm_to_vmem [thread:$0]  %s7, 6144, %s313, [#allocation9], 192, 192, 12
        $region40: #{tpu_custom_call.1} parent=11 // pred_fallthru
          _
        // Predicated region
        $region41: #{tpu_custom_call.1} parent=11 // pred_check
          %p319 = pneg %p217
        $region42: #{tpu_custom_call.1} parent=11 // pred_check_branch
          %321 = sbr.rel (%p319) target = $region44
        $region43: #{tpu_custom_call.1} parent=11 // pred_region
          _
        $region44: #{tpu_custom_call.1} parent=11 // pred_fallthru
          _
      $region12: #{tpu_custom_call.1} parent=5 // pred_fallthru
        _
      %p322 = scmp.lt.s32.totalorder %s23, 2
      // Predicated region
      $region45: #{tpu_custom_call.1} parent=5 // pred_check
        %p323 = pneg %p322
      $region46: #{tpu_custom_call.1} parent=5 // pred_check_branch
        %325 = sbr.rel (%p323) target = $region48
      $region47: #{tpu_custom_call.1} parent=5 // pred_region
        // Predicated region
        $region49: #{tpu_custom_call.1} parent=47 // pred_check
          %p326 = pneg %p43
        $region50: #{tpu_custom_call.1} parent=47 // pred_check_branch
          %328 = sbr.rel (%p326) target = $region52
        $region51: #{tpu_custom_call.1} parent=47 // pred_region
          %s329 = sand.u32 %s33, 1
          %s330 = scalar_lea.sflag [#allocation3], %s329
          %s331 = sand.u32 %s33, 1
          %s332 = smul.addr %s331, 384
          %s333 = scalar_lea.vmem [#allocation2], %s332
          %s334 = smul.u32 16, %s23
          %s336 = ssub.s32 6144, 6144
          %337 = vsyncadd %s330, %s336
          %s338 = smul.addr %s334, 3
          %s339 = smul.addr %s338, 128
          %s340 = scalar_lea.hbm %s0, %s339
          %s341 = sshll.u32 %s333, 4
          %s342 = int_to_ptr.vmem [resolvable:$true] %s341
          %347 = dma.hbm_to_vmem [thread:$0]  %s340, 6144, %s342, %s330, 384, 384, 24
        $region52: #{tpu_custom_call.1} parent=47 // pred_fallthru
          _
      $region48: #{tpu_custom_call.1} parent=5 // pred_fallthru
        _
      %p348 = scmp.le.s32.totalorder 1, %s23
      %p349 = scmp.lt.s32.totalorder %s23, 3
      %p350 = pnand %p348, %p349
      %p351 = pneg %p350
      // Predicated region
      $region53: #{tpu_custom_call.1} parent=5 // pred_check
        _
      $region54: #{tpu_custom_call.1} parent=5 // pred_check_branch
        %353 = sbr.rel (%p350) target = $region56
      $region55: #{tpu_custom_call.1} parent=5 // pred_region
        %s354 = ssub.s32 %s23, 1
        %s355 = sand.u32 %s36, 1
        %s356 = scalar_lea.sflag [#allocation3], %s355
        %s357 = sand.u32 %s36, 1
        %s358 = smul.addr %s357, 384
        %s359 = scalar_lea.vmem [#allocation2], %s358
        // Predicated region
        $region57: #{tpu_custom_call.1} parent=55 // pred_check
          %p360 = pneg %p49
        $region58: #{tpu_custom_call.1} parent=55 // pred_check_branch
          %362 = sbr.rel (%p360) target = $region60
        $region59: #{tpu_custom_call.1} parent=55 // pred_region
          %363 = dma.done %s356, 6144
        $region60: #{tpu_custom_call.1} parent=55 // pred_fallthru
          _
        // Predicated region
        $region61: #{tpu_custom_call.1} parent=55 // pred_check
          %p364 = pneg %p70
        $region62: #{tpu_custom_call.1} parent=55 // pred_check_branch
          %366 = sbr.rel (%p364) target = $region64
        $region63: #{tpu_custom_call.1} parent=55 // pred_region
          %367 = dma.done [#allocation6], 6144
        $region64: #{tpu_custom_call.1} parent=55 // pred_fallthru
          _
        // Predicated region
        $region65: #{tpu_custom_call.1} parent=55 // pred_check
          %p368 = pneg %p112
        $region66: #{tpu_custom_call.1} parent=55 // pred_check_branch
          %370 = sbr.rel (%p368) target = $region68
        $region67: #{tpu_custom_call.1} parent=55 // pred_region
          %371 = dma.done [#allocation6], 4096
        $region68: #{tpu_custom_call.1} parent=55 // pred_fallthru
          _
        // Predicated region
        $region69: #{tpu_custom_call.1} parent=55 // pred_check
          %p372 = pneg %p154
        $region70: #{tpu_custom_call.1} parent=55 // pred_check_branch
          %374 = sbr.rel (%p372) target = $region72
        $region71: #{tpu_custom_call.1} parent=55 // pred_region
          %375 = dma.done [#allocation9], 4096
        $region72: #{tpu_custom_call.1} parent=55 // pred_fallthru
          _
        // Predicated region
        $region73: #{tpu_custom_call.1} parent=55 // pred_check
          %p376 = pneg %p196
        $region74: #{tpu_custom_call.1} parent=55 // pred_check_branch
          %378 = sbr.rel (%p376) target = $region76
        $region75: #{tpu_custom_call.1} parent=55 // pred_region
          %379 = dma.done [#allocation9], 6144
        $region76: #{tpu_custom_call.1} parent=55 // pred_fallthru
          _
        %s380 = sand.u32 %s36, 1
        %s381 = scalar_lea.sflag [#allocation3], %s380
        %s382 = sand.u32 %s36, 1
        %s383 = smul.addr %s382, 384
        %s384 = scalar_lea.vmem [#allocation2], %s383
        %p385 = pneg %p49
        %p386 = pneg %p46
        %p387 = pneg %p70
        %p388 = pneg %p67
        %p389 = pneg %p91
        %p390 = pneg %p88
        %p391 = pneg %p112
        %p392 = pneg %p109
        %p393 = pneg %p133
        %p394 = pneg %p130
        %p395 = pneg %p154
        %p396 = pneg %p151
        %p397 = pneg %p175
        %p398 = pneg %p172
        %p399 = pneg %p196
        %p400 = pneg %p193
        %p401 = pneg %p217
        %p402 = pneg %p214
        %p403 = pneg %p243
        %p404 = pneg %p240
        %s405 = sand.u32 %s230, 1
        %s406 = scalar_lea.sflag [#allocation4], %s405
        %s407 = sand.u32 %s230, 1
        %s408 = smul.addr %s407, 384
        %s409 = scalar_lea.vmem [#allocation11], %s408
        %s410 = smul.u32 16, %s28
        %s411 = smul.u32 16, %s28
        %v413 = vld [vmem:[%s359] sm:$0xff]
        %v414 = vld [vmem:[%s359 + $0x8] sm:$0xff]
        %v415 = vld [vmem:[%s359 + $0x10] sm:$0xff]
        %v416 = vld [vmem:[%s359 + $0x18] sm:$0xff]
        %v417 = vld [vmem:[%s359 + $0x20] sm:$0xff]
        %v418 = vld [vmem:[%s359 + $0x28] sm:$0xff]
        %v419 = vld [vmem:[%s359 + $0x30] sm:$0xff]
        %v420 = vld [vmem:[%s359 + $0x38] sm:$0xff]
        %v421 = vld [vmem:[%s359 + $0x40] sm:$0xff]
        %v422 = vld [vmem:[%s359 + $0x48] sm:$0xff]
        %v423 = vld [vmem:[%s359 + $0x50] sm:$0xff]
        %v424 = vld [vmem:[%s359 + $0x58] sm:$0xff]
        %v425 = vld [vmem:[%s359 + $0x60] sm:$0xff]
        %v426 = vld [vmem:[%s359 + $0x68] sm:$0xff]
        %v427 = vld [vmem:[%s359 + $0x70] sm:$0xff]
        %v428 = vld [vmem:[%s359 + $0x78] sm:$0xff]
        %v429 = vld [vmem:[%s359 + $0x80] sm:$0xff]
        %v430 = vld [vmem:[%s359 + $0x88] sm:$0xff]
        %v431 = vld [vmem:[%s359 + $0x90] sm:$0xff]
        %v432 = vld [vmem:[%s359 + $0x98] sm:$0xff]
        %v433 = vld [vmem:[%s359 + $0xa0] sm:$0xff]
        %v434 = vld [vmem:[%s359 + $0xa8] sm:$0xff]
        %v435 = vld [vmem:[%s359 + $0xb0] sm:$0xff]
        %v436 = vld [vmem:[%s359 + $0xb8] sm:$0xff]
        %v437 = vld [vmem:[%s359 + $0xc0] sm:$0xff]
        %v438 = vld [vmem:[%s359 + $0xc8] sm:$0xff]
        %v439 = vld [vmem:[%s359 + $0xd0] sm:$0xff]
        %v440 = vld [vmem:[%s359 + $0xd8] sm:$0xff]
        %v441 = vld [vmem:[%s359 + $0xe0] sm:$0xff]
        %v442 = vld [vmem:[%s359 + $0xe8] sm:$0xff]
        %v443 = vld [vmem:[%s359 + $0xf0] sm:$0xff]
        %v444 = vld [vmem:[%s359 + $0xf8] sm:$0xff]
        %v445 = vld [vmem:[%s359 + $0x100] sm:$0xff]
        %v446 = vld [vmem:[%s359 + $0x108] sm:$0xff]
        %v447 = vld [vmem:[%s359 + $0x110] sm:$0xff]
        %v448 = vld [vmem:[%s359 + $0x118] sm:$0xff]
        %v449 = vld [vmem:[%s359 + $0x120] sm:$0xff]
        %v450 = vld [vmem:[%s359 + $0x128] sm:$0xff]
        %v451 = vld [vmem:[%s359 + $0x130] sm:$0xff]
        %v452 = vld [vmem:[%s359 + $0x138] sm:$0xff]
        %v453 = vld [vmem:[%s359 + $0x140] sm:$0xff]
        %v454 = vld [vmem:[%s359 + $0x148] sm:$0xff]
        %v455 = vld [vmem:[%s359 + $0x150] sm:$0xff]
        %v456 = vld [vmem:[%s359 + $0x158] sm:$0xff]
        %v457 = vld [vmem:[%s359 + $0x160] sm:$0xff]
        %v458 = vld [vmem:[%s359 + $0x168] sm:$0xff]
        %v459 = vld [vmem:[%s359 + $0x170] sm:$0xff]
        %v460 = vld [vmem:[%s359 + $0x178] sm:$0xff]
        %v461 = vpack.c.bf16 %v416, %v413
        %v462 = vpack.c.bf16 %v417, %v414
        %v463 = vpack.c.bf16 %v418, %v415
        %v464 = vpack.c.bf16 %v422, %v419
        %v465 = vpack.c.bf16 %v423, %v420
        %v466 = vpack.c.bf16 %v424, %v421
        %v467 = vpack.c.bf16 %v428, %v425
        %v468 = vpack.c.bf16 %v429, %v426
        %v469 = vpack.c.bf16 %v430, %v427
        %v470 = vpack.c.bf16 %v434, %v431
        %v471 = vpack.c.bf16 %v435, %v432
        %v472 = vpack.c.bf16 %v436, %v433
        %v473 = vpack.c.bf16 %v440, %v437
        %v474 = vpack.c.bf16 %v441, %v438
        %v475 = vpack.c.bf16 %v442, %v439
        %v476 = vpack.c.bf16 %v446, %v443
        %v477 = vpack.c.bf16 %v447, %v444
        %v478 = vpack.c.bf16 %v448, %v445
        %v479 = vpack.c.bf16 %v452, %v449
        %v480 = vpack.c.bf16 %v453, %v450
        %v481 = vpack.c.bf16 %v454, %v451
        %v482 = vpack.c.bf16 %v458, %v455
        %v483 = vpack.c.bf16 %v459, %v456
        %v484 = vpack.c.bf16 %v460, %v457
        %v485 = vld [vmem:[#allocation5] sm:$0xff]
        %v486 = vld [vmem:[#allocation5 + $0x8] sm:$0xff]
        %v487 = vld [vmem:[#allocation5 + $0x10] sm:$0xff]
        %v488 = vld [vmem:[#allocation5 + $0x18] sm:$0xff]
        %v489 = vld [vmem:[#allocation5 + $0x20] sm:$0xff]
        %v490 = vld [vmem:[#allocation5 + $0x28] sm:$0xff]
        %v491 = vld [vmem:[#allocation5 + $0x30] sm:$0xff]
        %v492 = vld [vmem:[#allocation5 + $0x38] sm:$0xff]
        %v493 = vld [vmem:[#allocation5 + $0x40] sm:$0xff]
        %v494 = vld [vmem:[#allocation5 + $0x48] sm:$0xff]
        %v495 = vld [vmem:[#allocation5 + $0x50] sm:$0xff]
        %v496 = vld [vmem:[#allocation5 + $0x58] sm:$0xff]
        %v497 = vld [vmem:[#allocation5 + $0x60] sm:$0xff]
        %v498 = vld [vmem:[#allocation5 + $0x68] sm:$0xff]
        %v499 = vld [vmem:[#allocation5 + $0x70] sm:$0xff]
        %v500 = vld [vmem:[#allocation5 + $0x78] sm:$0xff]
        %v501 = vld [vmem:[#allocation5 + $0x80] sm:$0xff]
        %v502 = vld [vmem:[#allocation5 + $0x88] sm:$0xff]
        %v503 = vld [vmem:[#allocation5 + $0x90] sm:$0xff]
        %v504 = vld [vmem:[#allocation5 + $0x98] sm:$0xff]
        %v505 = vld [vmem:[#allocation5 + $0xa0] sm:$0xff]
        %v506 = vld [vmem:[#allocation5 + $0xa8] sm:$0xff]
        %v507 = vld [vmem:[#allocation5 + $0xb0] sm:$0xff]
        %v508 = vld [vmem:[#allocation5 + $0xb8] sm:$0xff]
        %v509 = vld [vmem:[#allocation5 + $0xc0] sm:$0xff]
        %v510 = vld [vmem:[#allocation5 + $0xc8] sm:$0xff]
        %v511 = vld [vmem:[#allocation5 + $0xd0] sm:$0xff]
        %v512 = vld [vmem:[#allocation5 + $0xd8] sm:$0xff]
        %v513 = vld [vmem:[#allocation5 + $0xe0] sm:$0xff]
        %v514 = vld [vmem:[#allocation5 + $0xe8] sm:$0xff]
        %v515 = vld [vmem:[#allocation5 + $0xf0] sm:$0xff]
        %v516 = vld [vmem:[#allocation5 + $0xf8] sm:$0xff]
        %v517 = vld [vmem:[#allocation5 + $0x100] sm:$0xff]
        %v518 = vld [vmem:[#allocation5 + $0x108] sm:$0xff]
        %v519 = vld [vmem:[#allocation5 + $0x110] sm:$0xff]
        %v520 = vld [vmem:[#allocation5 + $0x118] sm:$0xff]
        %v521 = vld [vmem:[#allocation5 + $0x120] sm:$0xff]
        %v522 = vld [vmem:[#allocation5 + $0x128] sm:$0xff]
        %v523 = vld [vmem:[#allocation5 + $0x130] sm:$0xff]
        %v524 = vld [vmem:[#allocation5 + $0x138] sm:$0xff]
        %v525 = vld [vmem:[#allocation5 + $0x140] sm:$0xff]
        %v526 = vld [vmem:[#allocation5 + $0x148] sm:$0xff]
        %v527 = vld [vmem:[#allocation5 + $0x150] sm:$0xff]
        %v528 = vld [vmem:[#allocation5 + $0x158] sm:$0xff]
        %v529 = vld [vmem:[#allocation5 + $0x160] sm:$0xff]
        %v530 = vld [vmem:[#allocation5 + $0x168] sm:$0xff]
        %v531 = vld [vmem:[#allocation5 + $0x170] sm:$0xff]
        %v532 = vld [vmem:[#allocation5 + $0x178] sm:$0xff]
        %v533 = vld [vmem:[%s2] sm:$0x3]
        %v535 = vlaneseq
        %v536 = vshrl.u32 %v535, 7
        %v537 = vsub.s32 0, %v536
        %v538 = vrot.slane %v533, %v537
        %v539 = vlaneseq
        %v540 = vshrl.u32 %v539, 7
        %v541 = vsub.s32 1, %v540
        %v542 = vrot.slane %v533, %v541
        %v593 = vunpack.c.l.b16 %v485
        %v594 = vunpack.c.h.b16 %v485
        %v595 = vunpack.c.l.b16 %v486
        %v596 = vunpack.c.h.b16 %v486
        %v597 = vunpack.c.l.b16 %v487
        %v598 = vunpack.c.h.b16 %v487
        %v599 = vunpack.c.l.b16 %v488
        %v600 = vunpack.c.h.b16 %v488
        %v601 = vunpack.c.l.b16 %v489
        %v602 = vunpack.c.h.b16 %v489
        %v603 = vunpack.c.l.b16 %v490
        %v604 = vunpack.c.h.b16 %v490
        %v605 = vunpack.c.l.b16 %v491
        %v606 = vunpack.c.h.b16 %v491
        %v607 = vunpack.c.l.b16 %v492
        %v608 = vunpack.c.h.b16 %v492
        %v609 = vunpack.c.l.b16 %v493
        %v610 = vunpack.c.h.b16 %v493
        %v611 = vunpack.c.l.b16 %v494
        %v612 = vunpack.c.h.b16 %v494
        %v613 = vunpack.c.l.b16 %v495
        %v614 = vunpack.c.h.b16 %v495
        %v615 = vunpack.c.l.b16 %v496
        %v616 = vunpack.c.h.b16 %v496
        %v617 = vunpack.c.l.b16 %v497
        %v618 = vunpack.c.h.b16 %v497
        %v619 = vunpack.c.l.b16 %v498
        %v620 = vunpack.c.h.b16 %v498
        %v621 = vunpack.c.l.b16 %v499
        %v622 = vunpack.c.h.b16 %v499
        %v623 = vunpack.c.l.b16 %v500
        %v624 = vunpack.c.h.b16 %v500
        %v625 = vunpack.c.l.b16 %v501
        %v626 = vunpack.c.h.b16 %v501
        %v627 = vunpack.c.l.b16 %v502
        %v628 = vunpack.c.h.b16 %v502
        %v629 = vunpack.c.l.b16 %v503
        %v630 = vunpack.c.h.b16 %v503
        %v631 = vunpack.c.l.b16 %v504
        %v632 = vunpack.c.h.b16 %v504
        %v633 = vunpack.c.l.b16 %v505
        %v634 = vunpack.c.h.b16 %v505
        %v635 = vunpack.c.l.b16 %v506
        %v636 = vunpack.c.h.b16 %v506
        %v637 = vunpack.c.l.b16 %v507
        %v638 = vunpack.c.h.b16 %v507
        %v639 = vunpack.c.l.b16 %v508
        %v640 = vunpack.c.h.b16 %v508
        %v641 = vunpack.c.l.b16 %v509
        %v642 = vunpack.c.h.b16 %v509
        %v643 = vunpack.c.l.b16 %v510
        %v644 = vunpack.c.h.b16 %v510
        %v645 = vunpack.c.l.b16 %v511
        %v646 = vunpack.c.h.b16 %v511
        %v647 = vunpack.c.l.b16 %v512
        %v648 = vunpack.c.h.b16 %v512
        %v649 = vunpack.c.l.b16 %v513
        %v650 = vunpack.c.h.b16 %v513
        %v651 = vunpack.c.l.b16 %v514
        %v652 = vunpack.c.h.b16 %v514
        %v653 = vunpack.c.l.b16 %v515
        %v654 = vunpack.c.h.b16 %v515
        %v655 = vunpack.c.l.b16 %v516
        %v656 = vunpack.c.h.b16 %v516
        %v657 = vunpack.c.l.b16 %v517
        %v658 = vunpack.c.h.b16 %v517
        %v659 = vunpack.c.l.b16 %v518
        %v660 = vunpack.c.h.b16 %v518
        %v661 = vunpack.c.l.b16 %v519
        %v662 = vunpack.c.h.b16 %v519
        %v663 = vunpack.c.l.b16 %v520
        %v664 = vunpack.c.h.b16 %v520
        %v665 = vunpack.c.l.b16 %v521
        %v666 = vunpack.c.h.b16 %v521
        %v667 = vunpack.c.l.b16 %v522
        %v668 = vunpack.c.h.b16 %v522
        %v669 = vunpack.c.l.b16 %v523
        %v670 = vunpack.c.h.b16 %v523
        %v671 = vunpack.c.l.b16 %v524
        %v672 = vunpack.c.h.b16 %v524
        %v673 = vunpack.c.l.b16 %v525
        %v674 = vunpack.c.h.b16 %v525
        %v675 = vunpack.c.l.b16 %v526
        %v676 = vunpack.c.h.b16 %v526
        %v677 = vunpack.c.l.b16 %v527
        %v678 = vunpack.c.h.b16 %v527
        %v679 = vunpack.c.l.b16 %v528
        %v680 = vunpack.c.h.b16 %v528
        %v681 = vunpack.c.l.b16 %v529
        %v682 = vunpack.c.h.b16 %v529
        %v683 = vunpack.c.l.b16 %v530
        %v684 = vunpack.c.h.b16 %v530
        %v685 = vunpack.c.l.b16 %v531
        %v686 = vunpack.c.h.b16 %v531
        %v687 = vunpack.c.l.b16 %v532
        %v688 = vunpack.c.h.b16 %v532
        %v689 = vpack.c.b16 %v595, %v593
        %v690 = vpack.c.b16 %v596, %v594
        %v691 = vpack.c.b16 %v599, %v597
        %v692 = vpack.c.b16 %v600, %v598
        %v693 = vpack.c.b16 %v603, %v601
        %v694 = vpack.c.b16 %v604, %v602
        %v695 = vpack.c.b16 %v607, %v605
        %v696 = vpack.c.b16 %v608, %v606
        %v697 = vpack.c.b16 %v611, %v609
        %v698 = vpack.c.b16 %v612, %v610
        %v699 = vpack.c.b16 %v615, %v613
        %v700 = vpack.c.b16 %v616, %v614
        %v701 = vpack.c.b16 %v619, %v617
        %v702 = vpack.c.b16 %v620, %v618
        %v703 = vpack.c.b16 %v623, %v621
        %v704 = vpack.c.b16 %v624, %v622
        %v705 = vpack.c.b16 %v627, %v625
        %v706 = vpack.c.b16 %v628, %v626
        %v707 = vpack.c.b16 %v631, %v629
        %v708 = vpack.c.b16 %v632, %v630
        %v709 = vpack.c.b16 %v635, %v633
        %v710 = vpack.c.b16 %v636, %v634
        %v711 = vpack.c.b16 %v639, %v637
        %v712 = vpack.c.b16 %v640, %v638
        %v713 = vpack.c.b16 %v643, %v641
        %v714 = vpack.c.b16 %v644, %v642
        %v715 = vpack.c.b16 %v647, %v645
        %v716 = vpack.c.b16 %v648, %v646
        %v717 = vpack.c.b16 %v651, %v649
        %v718 = vpack.c.b16 %v652, %v650
        %v719 = vpack.c.b16 %v655, %v653
        %v720 = vpack.c.b16 %v656, %v654
        %v721 = vpack.c.b16 %v659, %v657
        %v722 = vpack.c.b16 %v660, %v658
        %v723 = vpack.c.b16 %v663, %v661
        %v724 = vpack.c.b16 %v664, %v662
        %v725 = vpack.c.b16 %v667, %v665
        %v726 = vpack.c.b16 %v668, %v666
        %v727 = vpack.c.b16 %v671, %v669
        %v728 = vpack.c.b16 %v672, %v670
        %v729 = vpack.c.b16 %v675, %v673
        %v730 = vpack.c.b16 %v676, %v674
        %v731 = vpack.c.b16 %v679, %v677
        %v732 = vpack.c.b16 %v680, %v678
        %v733 = vpack.c.b16 %v683, %v681
        %v734 = vpack.c.b16 %v684, %v682
        %v735 = vpack.c.b16 %v687, %v685
        %v736 = vpack.c.b16 %v688, %v686
        %785 = vmatprep.subr.bf16.mxu0 %v690
        %786 = vmatpush1.bf16.msra.mxu0 %v689
        %787 = vmatprep.subr.bf16.mxu0 %v692
        %788 = vmatpush1.bf16.msra.mxu0 %v691
        %789 = vmatprep.subr.bf16.mxu0 %v694
        %790 = vmatpush1.bf16.msra.mxu0 %v693
        %791 = vmatprep.subr.bf16.mxu0 %v696
        %792 = vmatpush1.bf16.msra.mxu0 %v695
        %793 = vmatprep.subr.bf16.mxu0 %v698
        %794 = vmatpush1.bf16.msra.mxu0 %v697
        %795 = vmatprep.subr.bf16.mxu0 %v700
        %796 = vmatpush1.bf16.msra.mxu0 %v699
        %797 = vmatprep.subr.bf16.mxu0 %v702
        %798 = vmatpush1.bf16.msra.mxu0 %v701
        %799 = vmatprep.subr.bf16.mxu0 %v704
        %800 = vmatpush1.bf16.msra.mxu0 %v703
        %801 = vmatprep.subr.bf16.mxu0 %v706
        %802 = vmatpush1.bf16.msra.mxu0 %v705
        %803 = vmatprep.subr.bf16.mxu0 %v708
        %804 = vmatpush1.bf16.msra.mxu0 %v707
        %805 = vmatprep.subr.bf16.mxu0 %v710
        %806 = vmatpush1.bf16.msra.mxu0 %v709
        %807 = vmatprep.subr.bf16.mxu0 %v712
        %808 = vmatpush1.bf16.msra.mxu0 %v711
        %809 = vmatprep.subr.bf16.mxu0 %v714
        %810 = vmatpush1.bf16.msra.mxu0 %v713
        %811 = vmatprep.subr.bf16.mxu0 %v716
        %812 = vmatpush1.bf16.msra.mxu0 %v715
        %813 = vmatprep.subr.bf16.mxu0 %v718
        %814 = vmatpush1.bf16.msra.mxu0 %v717
        %815 = vmatprep.subr.bf16.mxu0 %v720
        %816 = vmatpush1.bf16.msra.mxu0 %v719
        %817 = vmatprep.mubr.bf16.mxu0 %v462
        %818 = vmatmul.mubr.bf16.gmra.mrb[0].mxu0 %v461
        %v819 = vpop.f32.mrb[0].mxu0
        %v820 = vadd.f32 %v538, %v819
        %v821 = vpop.f32.mrb[0].mxu0
        %v822 = vadd.f32 %v542, %v821
        %v823 = vpop.f32.mrb[0].mxu0
        %v824 = vadd.f32 %v538, %v823
        %v825 = vpop.f32.mrb[0].mxu0
        %v826 = vadd.f32 %v542, %v825
        %827 = vmatprep.mubr.bf16.mxu0 %v465
        %828 = vmatmul.mubr.bf16.gmra.mrb[0].mxu0 %v464
        %v829 = vpop.f32.mrb[0].mxu0
        %v830 = vadd.f32 %v538, %v829
        %v831 = vpop.f32.mrb[0].mxu0
        %v832 = vadd.f32 %v542, %v831
        %v833 = vpop.f32.mrb[0].mxu0
        %v834 = vadd.f32 %v538, %v833
        %v835 = vpop.f32.mrb[0].mxu0
        %v836 = vadd.f32 %v542, %v835
        %837 = vmatprep.mubr.bf16.mxu0 %v468
        %838 = vmatmul.mubr.bf16.gmra.mrb[0].mxu0 %v467
        %v839 = vpop.f32.mrb[0].mxu0
        %v840 = vadd.f32 %v538, %v839
        %v841 = vpop.f32.mrb[0].mxu0
        %v842 = vadd.f32 %v542, %v841
        %v843 = vpop.f32.mrb[0].mxu0
        %v844 = vadd.f32 %v538, %v843
        %v845 = vpop.f32.mrb[0].mxu0
        %v846 = vadd.f32 %v542, %v845
        %847 = vmatprep.mubr.bf16.mxu0 %v471
        %848 = vmatmul.mubr.bf16.gmra.mrb[0].mxu0 %v470
        %v849 = vpop.f32.mrb[0].mxu0
        %v850 = vadd.f32 %v538, %v849
        %v851 = vpop.f32.mrb[0].mxu0
        %v852 = vadd.f32 %v542, %v851
        %v853 = vpop.f32.mrb[0].mxu0
        %v854 = vadd.f32 %v538, %v853
        %v855 = vpop.f32.mrb[0].mxu0
        %v856 = vadd.f32 %v542, %v855
        %857 = vmatprep.mubr.bf16.mxu0 %v474
        %858 = vmatmul.mubr.bf16.gmra.mrb[0].mxu0 %v473
        %v859 = vpop.f32.mrb[0].mxu0
        %v860 = vadd.f32 %v538, %v859
        %v861 = vpop.f32.mrb[0].mxu0
        %v862 = vadd.f32 %v542, %v861
        %v863 = vpop.f32.mrb[0].mxu0
        %v864 = vadd.f32 %v538, %v863
        %v865 = vpop.f32.mrb[0].mxu0
        %v866 = vadd.f32 %v542, %v865
        %867 = vmatprep.mubr.bf16.mxu0 %v477
        %868 = vmatmul.mubr.bf16.gmra.mrb[0].mxu0 %v476
        %v869 = vpop.f32.mrb[0].mxu0
        %v870 = vadd.f32 %v538, %v869
        %v871 = vpop.f32.mrb[0].mxu0
        %v872 = vadd.f32 %v542, %v871
        %v873 = vpop.f32.mrb[0].mxu0
        %v874 = vadd.f32 %v538, %v873
        %v875 = vpop.f32.mrb[0].mxu0
        %v876 = vadd.f32 %v542, %v875
        %877 = vmatprep.mubr.bf16.mxu0 %v480
        %878 = vmatmul.mubr.bf16.gmra.mrb[0].mxu0 %v479
        %v879 = vpop.f32.mrb[0].mxu0
        %v880 = vadd.f32 %v538, %v879
        %v881 = vpop.f32.mrb[0].mxu0
        %v882 = vadd.f32 %v542, %v881
        %v883 = vpop.f32.mrb[0].mxu0
        %v884 = vadd.f32 %v538, %v883
        %v885 = vpop.f32.mrb[0].mxu0
        %v886 = vadd.f32 %v542, %v885
        %887 = vmatprep.mubr.bf16.mxu0 %v483
        %888 = vmatmul.mubr.bf16.gmra.mrb[0].mxu0 %v482
        %v889 = vpop.f32.mrb[0].mxu0
        %v890 = vadd.f32 %v538, %v889
        %v891 = vpop.f32.mrb[0].mxu0
        %v892 = vadd.f32 %v542, %v891
        %v893 = vpop.f32.mrb[0].mxu0
        %v894 = vadd.f32 %v538, %v893
        %v895 = vpop.f32.mrb[0].mxu0
        %v896 = vadd.f32 %v542, %v895
        %897 = vdwg.mxu0
        %898 = vmatprep.subr.bf16.mxu0 %v722
        %899 = vmatpush1.bf16.msra.mxu0 %v721
        %900 = vmatprep.subr.bf16.mxu0 %v724
        %901 = vmatpush1.bf16.msra.mxu0 %v723
        %902 = vmatprep.subr.bf16.mxu0 %v726
        %903 = vmatpush1.bf16.msra.mxu0 %v725
        %904 = vmatprep.subr.bf16.mxu0 %v728
        %905 = vmatpush1.bf16.msra.mxu0 %v727
        %906 = vmatprep.subr.bf16.mxu0 %v730
        %907 = vmatpush1.bf16.msra.mxu0 %v729
        %908 = vmatprep.subr.bf16.mxu0 %v732
        %909 = vmatpush1.bf16.msra.mxu0 %v731
        %910 = vmatprep.subr.bf16.mxu0 %v734
        %911 = vmatpush1.bf16.msra.mxu0 %v733
        %912 = vmatprep.subr.bf16.mxu0 %v736
        %913 = vmatpush1.bf16.msra.mxu0 %v735
        %914 = vmatprep.subr.bf16.mxu0 0
        %915 = vmatpush1.bf16.msra.mxu0 0
        %916 = vmatprep.subr.bf16.mxu0 0
        %917 = vmatpush1.bf16.msra.mxu0 0
        %918 = vmatprep.subr.bf16.mxu0 0
        %919 = vmatpush1.bf16.msra.mxu0 0
        %920 = vmatprep.subr.bf16.mxu0 0
        %921 = vmatpush1.bf16.msra.mxu0 0
        %922 = vmatprep.subr.bf16.mxu0 0
        %923 = vmatpush1.bf16.msra.mxu0 0
        %924 = vmatprep.subr.bf16.mxu0 0
        %925 = vmatpush1.bf16.msra.mxu0 0
        %926 = vmatprep.subr.bf16.mxu0 0
        %927 = vmatpush1.bf16.msra.mxu0 0
        %928 = vmatprep.subr.bf16.mxu0 0
        %929 = vmatpush1.bf16.msra.mxu0 0
        %930 = vmatprep.mubr.bf16.mxu0 0
        %931 = vmatmul.mubr.bf16.gmra.mrb[0].mxu0 %v463
        %v932 = vpop.f32.mrb[0].mxu0
        %v933 = vadd.f32 %v820, %v932
        %v934 = vpop.f32.mrb[0].mxu0
        %v935 = vadd.f32 %v822, %v934
        %v936 = vpop.f32.mrb[0].mxu0
        %v937 = vadd.f32 %v824, %v936
        %v938 = vpop.f32.mrb[0].mxu0
        %v939 = vadd.f32 %v826, %v938
        %940 = vmatprep.mubr.bf16.mxu0 0
        %941 = vmatmul.mubr.bf16.gmra.mrb[0].mxu0 %v466
        %v942 = vpop.f32.mrb[0].mxu0
        %v943 = vadd.f32 %v830, %v942
        %v944 = vpop.f32.mrb[0].mxu0
        %v945 = vadd.f32 %v832, %v944
        %v946 = vpop.f32.mrb[0].mxu0
        %v947 = vadd.f32 %v834, %v946
        %v948 = vpop.f32.mrb[0].mxu0
        %v949 = vadd.f32 %v836, %v948
        %950 = vmatprep.mubr.bf16.mxu0 0
        %951 = vmatmul.mubr.bf16.gmra.mrb[0].mxu0 %v469
        %v952 = vpop.f32.mrb[0].mxu0
        %v953 = vadd.f32 %v840, %v952
        %v954 = vpop.f32.mrb[0].mxu0
        %v955 = vadd.f32 %v842, %v954
        %v956 = vpop.f32.mrb[0].mxu0
        %v957 = vadd.f32 %v844, %v956
        %v958 = vpop.f32.mrb[0].mxu0
        %v959 = vadd.f32 %v846, %v958
        %960 = vmatprep.mubr.bf16.mxu0 0
        %961 = vmatmul.mubr.bf16.gmra.mrb[0].mxu0 %v472
        %v962 = vpop.f32.mrb[0].mxu0
        %v963 = vadd.f32 %v850, %v962
        %v964 = vpop.f32.mrb[0].mxu0
        %v965 = vadd.f32 %v852, %v964
        %v966 = vpop.f32.mrb[0].mxu0
        %v967 = vadd.f32 %v854, %v966
        %v968 = vpop.f32.mrb[0].mxu0
        %v969 = vadd.f32 %v856, %v968
        %970 = vmatprep.mubr.bf16.mxu0 0
        %971 = vmatmul.mubr.bf16.gmra.mrb[0].mxu0 %v475
        %v972 = vpop.f32.mrb[0].mxu0
        %v973 = vadd.f32 %v860, %v972
        %v974 = vpop.f32.mrb[0].mxu0
        %v975 = vadd.f32 %v862, %v974
        %v976 = vpop.f32.mrb[0].mxu0
        %v977 = vadd.f32 %v864, %v976
        %v978 = vpop.f32.mrb[0].mxu0
        %v979 = vadd.f32 %v866, %v978
        %980 = vmatprep.mubr.bf16.mxu0 0
        %981 = vmatmul.mubr.bf16.gmra.mrb[0].mxu0 %v478
        %v982 = vpop.f32.mrb[0].mxu0
        %v983 = vadd.f32 %v870, %v982
        %v984 = vpop.f32.mrb[0].mxu0
        %v985 = vadd.f32 %v872, %v984
        %v986 = vpop.f32.mrb[0].mxu0
        %v987 = vadd.f32 %v874, %v986
        %v988 = vpop.f32.mrb[0].mxu0
        %v989 = vadd.f32 %v876, %v988
        %990 = vmatprep.mubr.bf16.mxu0 0
        %991 = vmatmul.mubr.bf16.gmra.mrb[0].mxu0 %v481
        %v992 = vpop.f32.mrb[0].mxu0
        %v993 = vadd.f32 %v880, %v992
        %v994 = vpop.f32.mrb[0].mxu0
        %v995 = vadd.f32 %v882, %v994
        %v996 = vpop.f32.mrb[0].mxu0
        %v997 = vadd.f32 %v884, %v996
        %v998 = vpop.f32.mrb[0].mxu0
        %v999 = vadd.f32 %v886, %v998
        %1000 = vmatprep.mubr.bf16.mxu0 0
        %1001 = vmatmul.mubr.bf16.gmra.mrb[0].mxu0 %v484
        %v1002 = vpop.f32.mrb[0].mxu0
        %v1003 = vadd.f32 %v890, %v1002
        %v1004 = vpop.f32.mrb[0].mxu0
        %v1005 = vadd.f32 %v892, %v1004
        %v1006 = vpop.f32.mrb[0].mxu0
        %v1007 = vadd.f32 %v894, %v1006
        %v1008 = vpop.f32.mrb[0].mxu0
        %v1009 = vadd.f32 %v896, %v1008
        %1010 = vdwg.mxu0
        %v1011 = vmax.f32 %v933, 0.0
        %v1012 = vmax.f32 %v935, 0.0
        %v1013 = vmax.f32 %v937, 0.0
        %v1014 = vmax.f32 %v939, 0.0
        %v1015 = vmax.f32 %v943, 0.0
        %v1016 = vmax.f32 %v945, 0.0
        %v1017 = vmax.f32 %v947, 0.0
        %v1018 = vmax.f32 %v949, 0.0
        %v1019 = vmax.f32 %v953, 0.0
        %v1020 = vmax.f32 %v955, 0.0
        %v1021 = vmax.f32 %v957, 0.0
        %v1022 = vmax.f32 %v959, 0.0
        %v1023 = vmax.f32 %v963, 0.0
        %v1024 = vmax.f32 %v965, 0.0
        %v1025 = vmax.f32 %v967, 0.0
        %v1026 = vmax.f32 %v969, 0.0
        %v1027 = vmax.f32 %v973, 0.0
        %v1028 = vmax.f32 %v975, 0.0
        %v1029 = vmax.f32 %v977, 0.0
        %v1030 = vmax.f32 %v979, 0.0
        %v1031 = vmax.f32 %v983, 0.0
        %v1032 = vmax.f32 %v985, 0.0
        %v1033 = vmax.f32 %v987, 0.0
        %v1034 = vmax.f32 %v989, 0.0
        %v1035 = vmax.f32 %v993, 0.0
        %v1036 = vmax.f32 %v995, 0.0
        %v1037 = vmax.f32 %v997, 0.0
        %v1038 = vmax.f32 %v999, 0.0
        %v1039 = vmax.f32 %v1003, 0.0
        %v1040 = vmax.f32 %v1005, 0.0
        %v1041 = vmax.f32 %v1007, 0.0
        %v1042 = vmax.f32 %v1009, 0.0
        %v1043 = vpack.c.bf16 %v1013, %v1011
        %v1044 = vpack.c.bf16 %v1014, %v1012
        %v1045 = vpack.c.bf16 %v1017, %v1015
        %v1046 = vpack.c.bf16 %v1018, %v1016
        %v1047 = vpack.c.bf16 %v1021, %v1019
        %v1048 = vpack.c.bf16 %v1022, %v1020
        %v1049 = vpack.c.bf16 %v1025, %v1023
        %v1050 = vpack.c.bf16 %v1026, %v1024
        %v1051 = vpack.c.bf16 %v1029, %v1027
        %v1052 = vpack.c.bf16 %v1030, %v1028
        %v1053 = vpack.c.bf16 %v1033, %v1031
        %v1054 = vpack.c.bf16 %v1034, %v1032
        %v1055 = vpack.c.bf16 %v1037, %v1035
        %v1056 = vpack.c.bf16 %v1038, %v1036
        %v1057 = vpack.c.bf16 %v1041, %v1039
        %v1058 = vpack.c.bf16 %v1042, %v1040
        %v1059 = vld [vmem:[#allocation7] sm:$0xff]
        %v1060 = vld [vmem:[#allocation7 + $0x8] sm:$0xff]
        %v1061 = vld [vmem:[#allocation7 + $0x10] sm:$0xff]
        %v1062 = vld [vmem:[#allocation7 + $0x18] sm:$0xff]
        %v1063 = vld [vmem:[#allocation7 + $0x20] sm:$0xff]
        %v1064 = vld [vmem:[#allocation7 + $0x28] sm:$0xff]
        %v1065 = vld [vmem:[#allocation7 + $0x30] sm:$0xff]
        %v1066 = vld [vmem:[#allocation7 + $0x38] sm:$0xff]
        %v1067 = vld [vmem:[#allocation7 + $0x40] sm:$0xff]
        %v1068 = vld [vmem:[#allocation7 + $0x48] sm:$0xff]
        %v1069 = vld [vmem:[#allocation7 + $0x50] sm:$0xff]
        %v1070 = vld [vmem:[#allocation7 + $0x58] sm:$0xff]
        %v1071 = vld [vmem:[#allocation7 + $0x60] sm:$0xff]
        %v1072 = vld [vmem:[#allocation7 + $0x68] sm:$0xff]
        %v1073 = vld [vmem:[#allocation7 + $0x70] sm:$0xff]
        %v1074 = vld [vmem:[#allocation7 + $0x78] sm:$0xff]
        %v1075 = vld [vmem:[#allocation7 + $0x80] sm:$0xff]
        %v1076 = vld [vmem:[#allocation7 + $0x88] sm:$0xff]
        %v1077 = vld [vmem:[#allocation7 + $0x90] sm:$0xff]
        %v1078 = vld [vmem:[#allocation7 + $0x98] sm:$0xff]
        %v1079 = vld [vmem:[#allocation7 + $0xa0] sm:$0xff]
        %v1080 = vld [vmem:[#allocation7 + $0xa8] sm:$0xff]
        %v1081 = vld [vmem:[#allocation7 + $0xb0] sm:$0xff]
        %v1082 = vld [vmem:[#allocation7 + $0xb8] sm:$0xff]
        %v1083 = vld [vmem:[#allocation7 + $0xc0] sm:$0xff]
        %v1084 = vld [vmem:[#allocation7 + $0xc8] sm:$0xff]
        %v1085 = vld [vmem:[#allocation7 + $0xd0] sm:$0xff]
        %v1086 = vld [vmem:[#allocation7 + $0xd8] sm:$0xff]
        %v1087 = vld [vmem:[#allocation7 + $0xe0] sm:$0xff]
        %v1088 = vld [vmem:[#allocation7 + $0xe8] sm:$0xff]
        %v1089 = vld [vmem:[#allocation7 + $0xf0] sm:$0xff]
        %v1090 = vld [vmem:[#allocation7 + $0xf8] sm:$0xff]
        %v1091 = vld [vmem:[%s4] sm:$0x3]
        %v1093 = vlaneseq
        %v1094 = vshrl.u32 %v1093, 7
        %v1095 = vsub.s32 0, %v1094
        %v1096 = vrot.slane %v1091, %v1095
        %v1097 = vlaneseq
        %v1098 = vshrl.u32 %v1097, 7
        %v1099 = vsub.s32 1, %v1098
        %v1100 = vrot.slane %v1091, %v1099
        %v1135 = vunpack.c.l.b16 %v1059
        %v1136 = vunpack.c.h.b16 %v1059
        %v1137 = vunpack.c.l.b16 %v1060
        %v1138 = vunpack.c.h.b16 %v1060
        %v1139 = vunpack.c.l.b16 %v1061
        %v1140 = vunpack.c.h.b16 %v1061
        %v1141 = vunpack.c.l.b16 %v1062
        %v1142 = vunpack.c.h.b16 %v1062
        %v1143 = vunpack.c.l.b16 %v1063
        %v1144 = vunpack.c.h.b16 %v1063
        %v1145 = vunpack.c.l.b16 %v1064
        %v1146 = vunpack.c.h.b16 %v1064
        %v1147 = vunpack.c.l.b16 %v1065
        %v1148 = vunpack.c.h.b16 %v1065
        %v1149 = vunpack.c.l.b16 %v1066
        %v1150 = vunpack.c.h.b16 %v1066
        %v1151 = vunpack.c.l.b16 %v1067
        %v1152 = vunpack.c.h.b16 %v1067
        %v1153 = vunpack.c.l.b16 %v1068
        %v1154 = vunpack.c.h.b16 %v1068
        %v1155 = vunpack.c.l.b16 %v1069
        %v1156 = vunpack.c.h.b16 %v1069
        %v1157 = vunpack.c.l.b16 %v1070
        %v1158 = vunpack.c.h.b16 %v1070
        %v1159 = vunpack.c.l.b16 %v1071
        %v1160 = vunpack.c.h.b16 %v1071
        %v1161 = vunpack.c.l.b16 %v1072
        %v1162 = vunpack.c.h.b16 %v1072
        %v1163 = vunpack.c.l.b16 %v1073
        %v1164 = vunpack.c.h.b16 %v1073
        %v1165 = vunpack.c.l.b16 %v1074
        %v1166 = vunpack.c.h.b16 %v1074
        %v1167 = vunpack.c.l.b16 %v1075
        %v1168 = vunpack.c.h.b16 %v1075
        %v1169 = vunpack.c.l.b16 %v1076
        %v1170 = vunpack.c.h.b16 %v1076
        %v1171 = vunpack.c.l.b16 %v1077
        %v1172 = vunpack.c.h.b16 %v1077
        %v1173 = vunpack.c.l.b16 %v1078
        %v1174 = vunpack.c.h.b16 %v1078
        %v1175 = vunpack.c.l.b16 %v1079
        %v1176 = vunpack.c.h.b16 %v1079
        %v1177 = vunpack.c.l.b16 %v1080
        %v1178 = vunpack.c.h.b16 %v1080
        %v1179 = vunpack.c.l.b16 %v1081
        %v1180 = vunpack.c.h.b16 %v1081
        %v1181 = vunpack.c.l.b16 %v1082
        %v1182 = vunpack.c.h.b16 %v1082
        %v1183 = vunpack.c.l.b16 %v1083
        %v1184 = vunpack.c.h.b16 %v1083
        %v1185 = vunpack.c.l.b16 %v1084
        %v1186 = vunpack.c.h.b16 %v1084
        %v1187 = vunpack.c.l.b16 %v1085
        %v1188 = vunpack.c.h.b16 %v1085
        %v1189 = vunpack.c.l.b16 %v1086
        %v1190 = vunpack.c.h.b16 %v1086
        %v1191 = vunpack.c.l.b16 %v1087
        %v1192 = vunpack.c.h.b16 %v1087
        %v1193 = vunpack.c.l.b16 %v1088
        %v1194 = vunpack.c.h.b16 %v1088
        %v1195 = vunpack.c.l.b16 %v1089
        %v1196 = vunpack.c.h.b16 %v1089
        %v1197 = vunpack.c.l.b16 %v1090
        %v1198 = vunpack.c.h.b16 %v1090
        %v1199 = vpack.c.b16 %v1137, %v1135
        %v1200 = vpack.c.b16 %v1138, %v1136
        %v1201 = vpack.c.b16 %v1141, %v1139
        %v1202 = vpack.c.b16 %v1142, %v1140
        %v1203 = vpack.c.b16 %v1145, %v1143
        %v1204 = vpack.c.b16 %v1146, %v1144
        %v1205 = vpack.c.b16 %v1149, %v1147
        %v1206 = vpack.c.b16 %v1150, %v1148
        %v1207 = vpack.c.b16 %v1153, %v1151
        %v1208 = vpack.c.b16 %v1154, %v1152
        %v1209 = vpack.c.b16 %v1157, %v1155
        %v1210 = vpack.c.b16 %v1158, %v1156
        %v1211 = vpack.c.b16 %v1161, %v1159
        %v1212 = vpack.c.b16 %v1162, %v1160
        %v1213 = vpack.c.b16 %v1165, %v1163
        %v1214 = vpack.c.b16 %v1166, %v1164
        %v1215 = vpack.c.b16 %v1169, %v1167
        %v1216 = vpack.c.b16 %v1170, %v1168
        %v1217 = vpack.c.b16 %v1173, %v1171
        %v1218 = vpack.c.b16 %v1174, %v1172
        %v1219 = vpack.c.b16 %v1177, %v1175
        %v1220 = vpack.c.b16 %v1178, %v1176
        %v1221 = vpack.c.b16 %v1181, %v1179
        %v1222 = vpack.c.b16 %v1182, %v1180
        %v1223 = vpack.c.b16 %v1185, %v1183
        %v1224 = vpack.c.b16 %v1186, %v1184
        %v1225 = vpack.c.b16 %v1189, %v1187
        %v1226 = vpack.c.b16 %v1190, %v1188
        %v1227 = vpack.c.b16 %v1193, %v1191
        %v1228 = vpack.c.b16 %v1194, %v1192
        %v1229 = vpack.c.b16 %v1197, %v1195
        %v1230 = vpack.c.b16 %v1198, %v1196
        %1263 = vmatprep.subr.bf16.mxu0 %v1200
        %1264 = vmatpush1.bf16.msra.mxu0 %v1199
        %1265 = vmatprep.subr.bf16.mxu0 %v1202
        %1266 = vmatpush1.bf16.msra.mxu0 %v1201
        %1267 = vmatprep.subr.bf16.mxu0 %v1204
        %1268 = vmatpush1.bf16.msra.mxu0 %v1203
        %1269 = vmatprep.subr.bf16.mxu0 %v1206
        %1270 = vmatpush1.bf16.msra.mxu0 %v1205
        %1271 = vmatprep.subr.bf16.mxu0 %v1208
        %1272 = vmatpush1.bf16.msra.mxu0 %v1207
        %1273 = vmatprep.subr.bf16.mxu0 %v1210
        %1274 = vmatpush1.bf16.msra.mxu0 %v1209
        %1275 = vmatprep.subr.bf16.mxu0 %v1212
        %1276 = vmatpush1.bf16.msra.mxu0 %v1211
        %1277 = vmatprep.subr.bf16.mxu0 %v1214
        %1278 = vmatpush1.bf16.msra.mxu0 %v1213
        %1279 = vmatprep.subr.bf16.mxu0 %v1216
        %1280 = vmatpush1.bf16.msra.mxu0 %v1215
        %1281 = vmatprep.subr.bf16.mxu0 %v1218
        %1282 = vmatpush1.bf16.msra.mxu0 %v1217
        %1283 = vmatprep.subr.bf16.mxu0 %v1220
        %1284 = vmatpush1.bf16.msra.mxu0 %v1219
        %1285 = vmatprep.subr.bf16.mxu0 %v1222
        %1286 = vmatpush1.bf16.msra.mxu0 %v1221
        %1287 = vmatprep.subr.bf16.mxu0 %v1224
        %1288 = vmatpush1.bf16.msra.mxu0 %v1223
        %1289 = vmatprep.subr.bf16.mxu0 %v1226
        %1290 = vmatpush1.bf16.msra.mxu0 %v1225
        %1291 = vmatprep.subr.bf16.mxu0 %v1228
        %1292 = vmatpush1.bf16.msra.mxu0 %v1227
        %1293 = vmatprep.subr.bf16.mxu0 %v1230
        %1294 = vmatpush1.bf16.msra.mxu0 %v1229
        %1295 = vmatprep.mubr.bf16.mxu0 %v1044
        %1296 = vmatmul.mubr.bf16.gmra.mrb[0].mxu0 %v1043
        %v1297 = vpop.f32.mrb[0].mxu0
        %v1298 = vadd.f32 %v1096, %v1297
        %v1299 = vpop.f32.mrb[0].mxu0
        %v1300 = vadd.f32 %v1100, %v1299
        %v1301 = vpop.f32.mrb[0].mxu0
        %v1302 = vadd.f32 %v1096, %v1301
        %v1303 = vpop.f32.mrb[0].mxu0
        %v1304 = vadd.f32 %v1100, %v1303
        %1305 = vmatprep.mubr.bf16.mxu0 %v1046
        %1306 = vmatmul.mubr.bf16.gmra.mrb[0].mxu0 %v1045
        %v1307 = vpop.f32.mrb[0].mxu0
        %v1308 = vadd.f32 %v1096, %v1307
        %v1309 = vpop.f32.mrb[0].mxu0
        %v1310 = vadd.f32 %v1100, %v1309
        %v1311 = vpop.f32.mrb[0].mxu0
        %v1312 = vadd.f32 %v1096, %v1311
        %v1313 = vpop.f32.mrb[0].mxu0
        %v1314 = vadd.f32 %v1100, %v1313
        %1315 = vmatprep.mubr.bf16.mxu0 %v1048
        %1316 = vmatmul.mubr.bf16.gmra.mrb[0].mxu0 %v1047
        %v1317 = vpop.f32.mrb[0].mxu0
        %v1318 = vadd.f32 %v1096, %v1317
        %v1319 = vpop.f32.mrb[0].mxu0
        %v1320 = vadd.f32 %v1100, %v1319
        %v1321 = vpop.f32.mrb[0].mxu0
        %v1322 = vadd.f32 %v1096, %v1321
        %v1323 = vpop.f32.mrb[0].mxu0
        %v1324 = vadd.f32 %v1100, %v1323
        %1325 = vmatprep.mubr.bf16.mxu0 %v1050
        %1326 = vmatmul.mubr.bf16.gmra.mrb[0].mxu0 %v1049
        %v1327 = vpop.f32.mrb[0].mxu0
        %v1328 = vadd.f32 %v1096, %v1327
        %v1329 = vpop.f32.mrb[0].mxu0
        %v1330 = vadd.f32 %v1100, %v1329
        %v1331 = vpop.f32.mrb[0].mxu0
        %v1332 = vadd.f32 %v1096, %v1331
        %v1333 = vpop.f32.mrb[0].mxu0
        %v1334 = vadd.f32 %v1100, %v1333
        %1335 = vmatprep.mubr.bf16.mxu0 %v1052
        %1336 = vmatmul.mubr.bf16.gmra.mrb[0].mxu0 %v1051
        %v1337 = vpop.f32.mrb[0].mxu0
        %v1338 = vadd.f32 %v1096, %v1337
        %v1339 = vpop.f32.mrb[0].mxu0
        %v1340 = vadd.f32 %v1100, %v1339
        %v1341 = vpop.f32.mrb[0].mxu0
        %v1342 = vadd.f32 %v1096, %v1341
        %v1343 = vpop.f32.mrb[0].mxu0
        %v1344 = vadd.f32 %v1100, %v1343
        %1345 = vmatprep.mubr.bf16.mxu0 %v1054
        %1346 = vmatmul.mubr.bf16.gmra.mrb[0].mxu0 %v1053
        %v1347 = vpop.f32.mrb[0].mxu0
        %v1348 = vadd.f32 %v1096, %v1347
        %v1349 = vpop.f32.mrb[0].mxu0
        %v1350 = vadd.f32 %v1100, %v1349
        %v1351 = vpop.f32.mrb[0].mxu0
        %v1352 = vadd.f32 %v1096, %v1351
        %v1353 = vpop.f32.mrb[0].mxu0
        %v1354 = vadd.f32 %v1100, %v1353
        %1355 = vmatprep.mubr.bf16.mxu0 %v1056
        %1356 = vmatmul.mubr.bf16.gmra.mrb[0].mxu0 %v1055
        %v1357 = vpop.f32.mrb[0].mxu0
        %v1358 = vadd.f32 %v1096, %v1357
        %v1359 = vpop.f32.mrb[0].mxu0
        %v1360 = vadd.f32 %v1100, %v1359
        %v1361 = vpop.f32.mrb[0].mxu0
        %v1362 = vadd.f32 %v1096, %v1361
        %v1363 = vpop.f32.mrb[0].mxu0
        %v1364 = vadd.f32 %v1100, %v1363
        %1365 = vmatprep.mubr.bf16.mxu0 %v1058
        %1366 = vmatmul.mubr.bf16.gmra.mrb[0].mxu0 %v1057
        %v1367 = vpop.f32.mrb[0].mxu0
        %v1368 = vadd.f32 %v1096, %v1367
        %v1369 = vpop.f32.mrb[0].mxu0
        %v1370 = vadd.f32 %v1100, %v1369
        %v1371 = vpop.f32.mrb[0].mxu0
        %v1372 = vadd.f32 %v1096, %v1371
        %v1373 = vpop.f32.mrb[0].mxu0
        %v1374 = vadd.f32 %v1100, %v1373
        %1375 = vdwg.mxu0
        %v1376 = vpack.c.bf16 %v1302, %v1298
        %v1377 = vpack.c.bf16 %v1304, %v1300
        %v1378 = vpack.c.bf16 %v1312, %v1308
        %v1379 = vpack.c.bf16 %v1314, %v1310
        %v1380 = vpack.c.bf16 %v1322, %v1318
        %v1381 = vpack.c.bf16 %v1324, %v1320
        %v1382 = vpack.c.bf16 %v1332, %v1328
        %v1383 = vpack.c.bf16 %v1334, %v1330
        %v1384 = vpack.c.bf16 %v1342, %v1338
        %v1385 = vpack.c.bf16 %v1344, %v1340
        %v1386 = vpack.c.bf16 %v1352, %v1348
        %v1387 = vpack.c.bf16 %v1354, %v1350
        %v1388 = vpack.c.bf16 %v1362, %v1358
        %v1389 = vpack.c.bf16 %v1364, %v1360
        %v1390 = vpack.c.bf16 %v1372, %v1368
        %v1391 = vpack.c.bf16 %v1374, %v1370
        %v1392 = vld [vmem:[#allocation8] sm:$0xff]
        %v1393 = vld [vmem:[#allocation8 + $0x8] sm:$0xff]
        %v1394 = vld [vmem:[#allocation8 + $0x10] sm:$0xff]
        %v1395 = vld [vmem:[#allocation8 + $0x18] sm:$0xff]
        %v1396 = vld [vmem:[#allocation8 + $0x20] sm:$0xff]
        %v1397 = vld [vmem:[#allocation8 + $0x28] sm:$0xff]
        %v1398 = vld [vmem:[#allocation8 + $0x30] sm:$0xff]
        %v1399 = vld [vmem:[#allocation8 + $0x38] sm:$0xff]
        %v1400 = vld [vmem:[#allocation8 + $0x40] sm:$0xff]
        %v1401 = vld [vmem:[#allocation8 + $0x48] sm:$0xff]
        %v1402 = vld [vmem:[#allocation8 + $0x50] sm:$0xff]
        %v1403 = vld [vmem:[#allocation8 + $0x58] sm:$0xff]
        %v1404 = vld [vmem:[#allocation8 + $0x60] sm:$0xff]
        %v1405 = vld [vmem:[#allocation8 + $0x68] sm:$0xff]
        %v1406 = vld [vmem:[#allocation8 + $0x70] sm:$0xff]
        %v1407 = vld [vmem:[#allocation8 + $0x78] sm:$0xff]
        %v1408 = vld [vmem:[#allocation8 + $0x80] sm:$0xff]
        %v1409 = vld [vmem:[#allocation8 + $0x88] sm:$0xff]
        %v1410 = vld [vmem:[#allocation8 + $0x90] sm:$0xff]
        %v1411 = vld [vmem:[#allocation8 + $0x98] sm:$0xff]
        %v1412 = vld [vmem:[#allocation8 + $0xa0] sm:$0xff]
        %v1413 = vld [vmem:[#allocation8 + $0xa8] sm:$0xff]
        %v1414 = vld [vmem:[#allocation8 + $0xb0] sm:$0xff]
        %v1415 = vld [vmem:[#allocation8 + $0xb8] sm:$0xff]
        %v1416 = vld [vmem:[#allocation8 + $0xc0] sm:$0xff]
        %v1417 = vld [vmem:[#allocation8 + $0xc8] sm:$0xff]
        %v1418 = vld [vmem:[#allocation8 + $0xd0] sm:$0xff]
        %v1419 = vld [vmem:[#allocation8 + $0xd8] sm:$0xff]
        %v1420 = vld [vmem:[#allocation8 + $0xe0] sm:$0xff]
        %v1421 = vld [vmem:[#allocation8 + $0xe8] sm:$0xff]
        %v1422 = vld [vmem:[#allocation8 + $0xf0] sm:$0xff]
        %v1423 = vld [vmem:[#allocation8 + $0xf8] sm:$0xff]
        %v1424 = vld [vmem:[%s6] sm:$0x3]
        %v1426 = vlaneseq
        %v1427 = vshrl.u32 %v1426, 7
        %v1428 = vsub.s32 0, %v1427
        %v1429 = vrot.slane %v1424, %v1428
        %v1430 = vlaneseq
        %v1431 = vshrl.u32 %v1430, 7
        %v1432 = vsub.s32 1, %v1431
        %v1433 = vrot.slane %v1424, %v1432
        %v1468 = vunpack.c.l.b16 %v1392
        %v1469 = vunpack.c.h.b16 %v1392
        %v1470 = vunpack.c.l.b16 %v1393
        %v1471 = vunpack.c.h.b16 %v1393
        %v1472 = vunpack.c.l.b16 %v1394
        %v1473 = vunpack.c.h.b16 %v1394
        %v1474 = vunpack.c.l.b16 %v1395
        %v1475 = vunpack.c.h.b16 %v1395
        %v1476 = vunpack.c.l.b16 %v1396
        %v1477 = vunpack.c.h.b16 %v1396
        %v1478 = vunpack.c.l.b16 %v1397
        %v1479 = vunpack.c.h.b16 %v1397
        %v1480 = vunpack.c.l.b16 %v1398
        %v1481 = vunpack.c.h.b16 %v1398
        %v1482 = vunpack.c.l.b16 %v1399
        %v1483 = vunpack.c.h.b16 %v1399
        %v1484 = vunpack.c.l.b16 %v1400
        %v1485 = vunpack.c.h.b16 %v1400
        %v1486 = vunpack.c.l.b16 %v1401
        %v1487 = vunpack.c.h.b16 %v1401
        %v1488 = vunpack.c.l.b16 %v1402
        %v1489 = vunpack.c.h.b16 %v1402
        %v1490 = vunpack.c.l.b16 %v1403
        %v1491 = vunpack.c.h.b16 %v1403
        %v1492 = vunpack.c.l.b16 %v1404
        %v1493 = vunpack.c.h.b16 %v1404
        %v1494 = vunpack.c.l.b16 %v1405
        %v1495 = vunpack.c.h.b16 %v1405
        %v1496 = vunpack.c.l.b16 %v1406
        %v1497 = vunpack.c.h.b16 %v1406
        %v1498 = vunpack.c.l.b16 %v1407
        %v1499 = vunpack.c.h.b16 %v1407
        %v1500 = vunpack.c.l.b16 %v1408
        %v1501 = vunpack.c.h.b16 %v1408
        %v1502 = vunpack.c.l.b16 %v1409
        %v1503 = vunpack.c.h.b16 %v1409
        %v1504 = vunpack.c.l.b16 %v1410
        %v1505 = vunpack.c.h.b16 %v1410
        %v1506 = vunpack.c.l.b16 %v1411
        %v1507 = vunpack.c.h.b16 %v1411
        %v1508 = vunpack.c.l.b16 %v1412
        %v1509 = vunpack.c.h.b16 %v1412
        %v1510 = vunpack.c.l.b16 %v1413
        %v1511 = vunpack.c.h.b16 %v1413
        %v1512 = vunpack.c.l.b16 %v1414
        %v1513 = vunpack.c.h.b16 %v1414
        %v1514 = vunpack.c.l.b16 %v1415
        %v1515 = vunpack.c.h.b16 %v1415
        %v1516 = vunpack.c.l.b16 %v1416
        %v1517 = vunpack.c.h.b16 %v1416
        %v1518 = vunpack.c.l.b16 %v1417
        %v1519 = vunpack.c.h.b16 %v1417
        %v1520 = vunpack.c.l.b16 %v1418
        %v1521 = vunpack.c.h.b16 %v1418
        %v1522 = vunpack.c.l.b16 %v1419
        %v1523 = vunpack.c.h.b16 %v1419
        %v1524 = vunpack.c.l.b16 %v1420
        %v1525 = vunpack.c.h.b16 %v1420
        %v1526 = vunpack.c.l.b16 %v1421
        %v1527 = vunpack.c.h.b16 %v1421
        %v1528 = vunpack.c.l.b16 %v1422
        %v1529 = vunpack.c.h.b16 %v1422
        %v1530 = vunpack.c.l.b16 %v1423
        %v1531 = vunpack.c.h.b16 %v1423
        %v1532 = vpack.c.b16 %v1470, %v1468
        %v1533 = vpack.c.b16 %v1471, %v1469
        %v1534 = vpack.c.b16 %v1474, %v1472
        %v1535 = vpack.c.b16 %v1475, %v1473
        %v1536 = vpack.c.b16 %v1478, %v1476
        %v1537 = vpack.c.b16 %v1479, %v1477
        %v1538 = vpack.c.b16 %v1482, %v1480
        %v1539 = vpack.c.b16 %v1483, %v1481
        %v1540 = vpack.c.b16 %v1486, %v1484
        %v1541 = vpack.c.b16 %v1487, %v1485
        %v1542 = vpack.c.b16 %v1490, %v1488
        %v1543 = vpack.c.b16 %v1491, %v1489
        %v1544 = vpack.c.b16 %v1494, %v1492
        %v1545 = vpack.c.b16 %v1495, %v1493
        %v1546 = vpack.c.b16 %v1498, %v1496
        %v1547 = vpack.c.b16 %v1499, %v1497
        %v1548 = vpack.c.b16 %v1502, %v1500
        %v1549 = vpack.c.b16 %v1503, %v1501
        %v1550 = vpack.c.b16 %v1506, %v1504
        %v1551 = vpack.c.b16 %v1507, %v1505
        %v1552 = vpack.c.b16 %v1510, %v1508
        %v1553 = vpack.c.b16 %v1511, %v1509
        %v1554 = vpack.c.b16 %v1514, %v1512
        %v1555 = vpack.c.b16 %v1515, %v1513
        %v1556 = vpack.c.b16 %v1518, %v1516
        %v1557 = vpack.c.b16 %v1519, %v1517
        %v1558 = vpack.c.b16 %v1522, %v1520
        %v1559 = vpack.c.b16 %v1523, %v1521
        %v1560 = vpack.c.b16 %v1526, %v1524
        %v1561 = vpack.c.b16 %v1527, %v1525
        %v1562 = vpack.c.b16 %v1530, %v1528
        %v1563 = vpack.c.b16 %v1531, %v1529
        %1596 = vmatprep.subr.bf16.mxu0 %v1533
        %1597 = vmatpush1.bf16.msra.mxu0 %v1532
        %1598 = vmatprep.subr.bf16.mxu0 %v1535
        %1599 = vmatpush1.bf16.msra.mxu0 %v1534
        %1600 = vmatprep.subr.bf16.mxu0 %v1537
        %1601 = vmatpush1.bf16.msra.mxu0 %v1536
        %1602 = vmatprep.subr.bf16.mxu0 %v1539
        %1603 = vmatpush1.bf16.msra.mxu0 %v1538
        %1604 = vmatprep.subr.bf16.mxu0 %v1541
        %1605 = vmatpush1.bf16.msra.mxu0 %v1540
        %1606 = vmatprep.subr.bf16.mxu0 %v1543
        %1607 = vmatpush1.bf16.msra.mxu0 %v1542
        %1608 = vmatprep.subr.bf16.mxu0 %v1545
        %1609 = vmatpush1.bf16.msra.mxu0 %v1544
        %1610 = vmatprep.subr.bf16.mxu0 %v1547
        %1611 = vmatpush1.bf16.msra.mxu0 %v1546
        %1612 = vmatprep.subr.bf16.mxu0 %v1549
        %1613 = vmatpush1.bf16.msra.mxu0 %v1548
        %1614 = vmatprep.subr.bf16.mxu0 %v1551
        %1615 = vmatpush1.bf16.msra.mxu0 %v1550
        %1616 = vmatprep.subr.bf16.mxu0 %v1553
        %1617 = vmatpush1.bf16.msra.mxu0 %v1552
        %1618 = vmatprep.subr.bf16.mxu0 %v1555
        %1619 = vmatpush1.bf16.msra.mxu0 %v1554
        %1620 = vmatprep.subr.bf16.mxu0 %v1557
        %1621 = vmatpush1.bf16.msra.mxu0 %v1556
        %1622 = vmatprep.subr.bf16.mxu0 %v1559
        %1623 = vmatpush1.bf16.msra.mxu0 %v1558
        %1624 = vmatprep.subr.bf16.mxu0 %v1561
        %1625 = vmatpush1.bf16.msra.mxu0 %v1560
        %1626 = vmatprep.subr.bf16.mxu0 %v1563
        %1627 = vmatpush1.bf16.msra.mxu0 %v1562
        %1628 = vmatprep.mubr.bf16.mxu0 %v1377
        %1629 = vmatmul.mubr.bf16.gmra.mrb[0].mxu0 %v1376
        %v1630 = vpop.f32.mrb[0].mxu0
        %v1631 = vadd.f32 %v1429, %v1630
        %v1632 = vpop.f32.mrb[0].mxu0
        %v1633 = vadd.f32 %v1433, %v1632
        %v1634 = vpop.f32.mrb[0].mxu0
        %v1635 = vadd.f32 %v1429, %v1634
        %v1636 = vpop.f32.mrb[0].mxu0
        %v1637 = vadd.f32 %v1433, %v1636
        %1638 = vmatprep.mubr.bf16.mxu0 %v1379
        %1639 = vmatmul.mubr.bf16.gmra.mrb[0].mxu0 %v1378
        %v1640 = vpop.f32.mrb[0].mxu0
        %v1641 = vadd.f32 %v1429, %v1640
        %v1642 = vpop.f32.mrb[0].mxu0
        %v1643 = vadd.f32 %v1433, %v1642
        %v1644 = vpop.f32.mrb[0].mxu0
        %v1645 = vadd.f32 %v1429, %v1644
        %v1646 = vpop.f32.mrb[0].mxu0
        %v1647 = vadd.f32 %v1433, %v1646
        %1648 = vmatprep.mubr.bf16.mxu0 %v1381
        %1649 = vmatmul.mubr.bf16.gmra.mrb[0].mxu0 %v1380
        %v1650 = vpop.f32.mrb[0].mxu0
        %v1651 = vadd.f32 %v1429, %v1650
        %v1652 = vpop.f32.mrb[0].mxu0
        %v1653 = vadd.f32 %v1433, %v1652
        %v1654 = vpop.f32.mrb[0].mxu0
        %v1655 = vadd.f32 %v1429, %v1654
        %v1656 = vpop.f32.mrb[0].mxu0
        %v1657 = vadd.f32 %v1433, %v1656
        %1658 = vmatprep.mubr.bf16.mxu0 %v1383
        %1659 = vmatmul.mubr.bf16.gmra.mrb[0].mxu0 %v1382
        %v1660 = vpop.f32.mrb[0].mxu0
        %v1661 = vadd.f32 %v1429, %v1660
        %v1662 = vpop.f32.mrb[0].mxu0
        %v1663 = vadd.f32 %v1433, %v1662
        %v1664 = vpop.f32.mrb[0].mxu0
        %v1665 = vadd.f32 %v1429, %v1664
        %v1666 = vpop.f32.mrb[0].mxu0
        %v1667 = vadd.f32 %v1433, %v1666
        %1668 = vmatprep.mubr.bf16.mxu0 %v1385
        %1669 = vmatmul.mubr.bf16.gmra.mrb[0].mxu0 %v1384
        %v1670 = vpop.f32.mrb[0].mxu0
        %v1671 = vadd.f32 %v1429, %v1670
        %v1672 = vpop.f32.mrb[0].mxu0
        %v1673 = vadd.f32 %v1433, %v1672
        %v1674 = vpop.f32.mrb[0].mxu0
        %v1675 = vadd.f32 %v1429, %v1674
        %v1676 = vpop.f32.mrb[0].mxu0
        %v1677 = vadd.f32 %v1433, %v1676
        %1678 = vmatprep.mubr.bf16.mxu0 %v1387
        %1679 = vmatmul.mubr.bf16.gmra.mrb[0].mxu0 %v1386
        %v1680 = vpop.f32.mrb[0].mxu0
        %v1681 = vadd.f32 %v1429, %v1680
        %v1682 = vpop.f32.mrb[0].mxu0
        %v1683 = vadd.f32 %v1433, %v1682
        %v1684 = vpop.f32.mrb[0].mxu0
        %v1685 = vadd.f32 %v1429, %v1684
        %v1686 = vpop.f32.mrb[0].mxu0
        %v1687 = vadd.f32 %v1433, %v1686
        %1688 = vmatprep.mubr.bf16.mxu0 %v1389
        %1689 = vmatmul.mubr.bf16.gmra.mrb[0].mxu0 %v1388
        %v1690 = vpop.f32.mrb[0].mxu0
        %v1691 = vadd.f32 %v1429, %v1690
        %v1692 = vpop.f32.mrb[0].mxu0
        %v1693 = vadd.f32 %v1433, %v1692
        %v1694 = vpop.f32.mrb[0].mxu0
        %v1695 = vadd.f32 %v1429, %v1694
        %v1696 = vpop.f32.mrb[0].mxu0
        %v1697 = vadd.f32 %v1433, %v1696
        %1698 = vmatprep.mubr.bf16.mxu0 %v1391
        %1699 = vmatmul.mubr.bf16.gmra.mrb[0].mxu0 %v1390
        %v1700 = vpop.f32.mrb[0].mxu0
        %v1701 = vadd.f32 %v1429, %v1700
        %v1702 = vpop.f32.mrb[0].mxu0
        %v1703 = vadd.f32 %v1433, %v1702
        %v1704 = vpop.f32.mrb[0].mxu0
        %v1705 = vadd.f32 %v1429, %v1704
        %v1706 = vpop.f32.mrb[0].mxu0
        %v1707 = vadd.f32 %v1433, %v1706
        %1708 = vdwg.mxu0
        %v1709 = vmax.f32 %v1631, 0.0
        %v1710 = vmax.f32 %v1633, 0.0
        %v1711 = vmax.f32 %v1635, 0.0
        %v1712 = vmax.f32 %v1637, 0.0
        %v1713 = vmax.f32 %v1641, 0.0
        %v1714 = vmax.f32 %v1643, 0.0
        %v1715 = vmax.f32 %v1645, 0.0
        %v1716 = vmax.f32 %v1647, 0.0
        %v1717 = vmax.f32 %v1651, 0.0
        %v1718 = vmax.f32 %v1653, 0.0
        %v1719 = vmax.f32 %v1655, 0.0
        %v1720 = vmax.f32 %v1657, 0.0
        %v1721 = vmax.f32 %v1661, 0.0
        %v1722 = vmax.f32 %v1663, 0.0
        %v1723 = vmax.f32 %v1665, 0.0
        %v1724 = vmax.f32 %v1667, 0.0
        %v1725 = vmax.f32 %v1671, 0.0
        %v1726 = vmax.f32 %v1673, 0.0
        %v1727 = vmax.f32 %v1675, 0.0
        %v1728 = vmax.f32 %v1677, 0.0
        %v1729 = vmax.f32 %v1681, 0.0
        %v1730 = vmax.f32 %v1683, 0.0
        %v1731 = vmax.f32 %v1685, 0.0
        %v1732 = vmax.f32 %v1687, 0.0
        %v1733 = vmax.f32 %v1691, 0.0
        %v1734 = vmax.f32 %v1693, 0.0
        %v1735 = vmax.f32 %v1695, 0.0
        %v1736 = vmax.f32 %v1697, 0.0
        %v1737 = vmax.f32 %v1701, 0.0
        %v1738 = vmax.f32 %v1703, 0.0
        %v1739 = vmax.f32 %v1705, 0.0
        %v1740 = vmax.f32 %v1707, 0.0
        %v1741 = vpack.c.bf16 %v1711, %v1709
        %v1742 = vpack.c.bf16 %v1712, %v1710
        %v1743 = vpack.c.bf16 %v1715, %v1713
        %v1744 = vpack.c.bf16 %v1716, %v1714
        %v1745 = vpack.c.bf16 %v1719, %v1717
        %v1746 = vpack.c.bf16 %v1720, %v1718
        %v1747 = vpack.c.bf16 %v1723, %v1721
        %v1748 = vpack.c.bf16 %v1724, %v1722
        %v1749 = vpack.c.bf16 %v1727, %v1725
        %v1750 = vpack.c.bf16 %v1728, %v1726
        %v1751 = vpack.c.bf16 %v1731, %v1729
        %v1752 = vpack.c.bf16 %v1732, %v1730
        %v1753 = vpack.c.bf16 %v1735, %v1733
        %v1754 = vpack.c.bf16 %v1736, %v1734
        %v1755 = vpack.c.bf16 %v1739, %v1737
        %v1756 = vpack.c.bf16 %v1740, %v1738
        %v1757 = vld [vmem:[#allocation10] sm:$0xff]
        %v1758 = vld [vmem:[#allocation10 + $0x8] sm:$0xf]
        %v1759 = vld [vmem:[#allocation10 + $0xc] sm:$0xff]
        %v1760 = vld [vmem:[#allocation10 + $0x14] sm:$0xf]
        %v1761 = vld [vmem:[#allocation10 + $0x18] sm:$0xff]
        %v1762 = vld [vmem:[#allocation10 + $0x20] sm:$0xf]
        %v1763 = vld [vmem:[#allocation10 + $0x24] sm:$0xff]
        %v1764 = vld [vmem:[#allocation10 + $0x2c] sm:$0xf]
        %v1765 = vld [vmem:[#allocation10 + $0x30] sm:$0xff]
        %v1766 = vld [vmem:[#allocation10 + $0x38] sm:$0xf]
        %v1767 = vld [vmem:[#allocation10 + $0x3c] sm:$0xff]
        %v1768 = vld [vmem:[#allocation10 + $0x44] sm:$0xf]
        %v1769 = vld [vmem:[#allocation10 + $0x48] sm:$0xff]
        %v1770 = vld [vmem:[#allocation10 + $0x50] sm:$0xf]
        %v1771 = vld [vmem:[#allocation10 + $0x54] sm:$0xff]
        %v1772 = vld [vmem:[#allocation10 + $0x5c] sm:$0xf]
        %v1773 = vld [vmem:[#allocation10 + $0x60] sm:$0xff]
        %v1774 = vld [vmem:[#allocation10 + $0x68] sm:$0xf]
        %v1775 = vld [vmem:[#allocation10 + $0x6c] sm:$0xff]
        %v1776 = vld [vmem:[#allocation10 + $0x74] sm:$0xf]
        %v1777 = vld [vmem:[#allocation10 + $0x78] sm:$0xff]
        %v1778 = vld [vmem:[#allocation10 + $0x80] sm:$0xf]
        %v1779 = vld [vmem:[#allocation10 + $0x84] sm:$0xff]
        %v1780 = vld [vmem:[#allocation10 + $0x8c] sm:$0xf]
        %v1781 = vld [vmem:[#allocation10 + $0x90] sm:$0xff]
        %v1782 = vld [vmem:[#allocation10 + $0x98] sm:$0xf]
        %v1783 = vld [vmem:[#allocation10 + $0x9c] sm:$0xff]
        %v1784 = vld [vmem:[#allocation10 + $0xa4] sm:$0xf]
        %v1785 = vld [vmem:[#allocation10 + $0xa8] sm:$0xff]
        %v1786 = vld [vmem:[#allocation10 + $0xb0] sm:$0xf]
        %v1787 = vld [vmem:[#allocation10 + $0xb4] sm:$0xff]
        %v1788 = vld [vmem:[#allocation10 + $0xbc] sm:$0xf]
        %v1789 = vld [vmem:[#allocation10 + $0xc0] sm:$0xff]
        %v1790 = vld [vmem:[#allocation10 + $0xc8] sm:$0xf]
        %v1791 = vld [vmem:[#allocation10 + $0xcc] sm:$0xff]
        %v1792 = vld [vmem:[#allocation10 + $0xd4] sm:$0xf]
        %v1793 = vld [vmem:[#allocation10 + $0xd8] sm:$0xff]
        %v1794 = vld [vmem:[#allocation10 + $0xe0] sm:$0xf]
        %v1795 = vld [vmem:[#allocation10 + $0xe4] sm:$0xff]
        %v1796 = vld [vmem:[#allocation10 + $0xec] sm:$0xf]
        %v1797 = vld [vmem:[#allocation10 + $0xf0] sm:$0xff]
        %v1798 = vld [vmem:[#allocation10 + $0xf8] sm:$0xf]
        %v1799 = vld [vmem:[#allocation10 + $0xfc] sm:$0xff]
        %v1800 = vld [vmem:[#allocation10 + $0x104] sm:$0xf]
        %v1801 = vld [vmem:[#allocation10 + $0x108] sm:$0xff]
        %v1802 = vld [vmem:[#allocation10 + $0x110] sm:$0xf]
        %v1803 = vld [vmem:[#allocation10 + $0x114] sm:$0xff]
        %v1804 = vld [vmem:[#allocation10 + $0x11c] sm:$0xf]
        %v1805 = vld [vmem:[#allocation10 + $0x120] sm:$0xff]
        %v1806 = vld [vmem:[#allocation10 + $0x128] sm:$0xf]
        %v1807 = vld [vmem:[#allocation10 + $0x12c] sm:$0xff]
        %v1808 = vld [vmem:[#allocation10 + $0x134] sm:$0xf]
        %v1809 = vld [vmem:[#allocation10 + $0x138] sm:$0xff]
        %v1810 = vld [vmem:[#allocation10 + $0x140] sm:$0xf]
        %v1811 = vld [vmem:[#allocation10 + $0x144] sm:$0xff]
        %v1812 = vld [vmem:[#allocation10 + $0x14c] sm:$0xf]
        %v1813 = vld [vmem:[#allocation10 + $0x150] sm:$0xff]
        %v1814 = vld [vmem:[#allocation10 + $0x158] sm:$0xf]
        %v1815 = vld [vmem:[#allocation10 + $0x15c] sm:$0xff]
        %v1816 = vld [vmem:[#allocation10 + $0x164] sm:$0xf]
        %v1817 = vld [vmem:[#allocation10 + $0x168] sm:$0xff]
        %v1818 = vld [vmem:[#allocation10 + $0x170] sm:$0xf]
        %v1819 = vld [vmem:[#allocation10 + $0x174] sm:$0xff]
        %v1820 = vld [vmem:[#allocation10 + $0x17c] sm:$0xf]
        %v1821 = vld [vmem:[%s8] sm:$0x7]
        %v1823 = vlaneseq
        %v1824 = vshrl.u32 %v1823, 7
        %v1825 = vsub.s32 0, %v1824
        %v1826 = vrot.slane %v1821, %v1825
        %v1827 = vlaneseq
        %v1828 = vshrl.u32 %v1827, 7
        %v1829 = vsub.s32 1, %v1828
        %v1830 = vrot.slane %v1821, %v1829
        %v1831 = vlaneseq
        %v1832 = vshrl.u32 %v1831, 7
        %v1833 = vsub.s32 2, %v1832
        %v1834 = vrot.slane %v1821, %v1833
        %v1902 = vunpack.c.l.b16 %v1757
        %v1903 = vunpack.c.h.b16 %v1757
        %v1904 = vunpack.c.l.b16 %v1758
        %v1905 = vunpack.c.l.b16 %v1759
        %v1906 = vunpack.c.h.b16 %v1759
        %v1907 = vunpack.c.l.b16 %v1760
        %v1908 = vunpack.c.l.b16 %v1761
        %v1909 = vunpack.c.h.b16 %v1761
        %v1910 = vunpack.c.l.b16 %v1762
        %v1911 = vunpack.c.l.b16 %v1763
        %v1912 = vunpack.c.h.b16 %v1763
        %v1913 = vunpack.c.l.b16 %v1764
        %v1914 = vunpack.c.l.b16 %v1765
        %v1915 = vunpack.c.h.b16 %v1765
        %v1916 = vunpack.c.l.b16 %v1766
        %v1917 = vunpack.c.l.b16 %v1767
        %v1918 = vunpack.c.h.b16 %v1767
        %v1919 = vunpack.c.l.b16 %v1768
        %v1920 = vunpack.c.l.b16 %v1769
        %v1921 = vunpack.c.h.b16 %v1769
        %v1922 = vunpack.c.l.b16 %v1770
        %v1923 = vunpack.c.l.b16 %v1771
        %v1924 = vunpack.c.h.b16 %v1771
        %v1925 = vunpack.c.l.b16 %v1772
        %v1926 = vunpack.c.l.b16 %v1773
        %v1927 = vunpack.c.h.b16 %v1773
        %v1928 = vunpack.c.l.b16 %v1774
        %v1929 = vunpack.c.l.b16 %v1775
        %v1930 = vunpack.c.h.b16 %v1775
        %v1931 = vunpack.c.l.b16 %v1776
        %v1932 = vunpack.c.l.b16 %v1777
        %v1933 = vunpack.c.h.b16 %v1777
        %v1934 = vunpack.c.l.b16 %v1778
        %v1935 = vunpack.c.l.b16 %v1779
        %v1936 = vunpack.c.h.b16 %v1779
        %v1937 = vunpack.c.l.b16 %v1780
        %v1938 = vunpack.c.l.b16 %v1781
        %v1939 = vunpack.c.h.b16 %v1781
        %v1940 = vunpack.c.l.b16 %v1782
        %v1941 = vunpack.c.l.b16 %v1783
        %v1942 = vunpack.c.h.b16 %v1783
        %v1943 = vunpack.c.l.b16 %v1784
        %v1944 = vunpack.c.l.b16 %v1785
        %v1945 = vunpack.c.h.b16 %v1785
        %v1946 = vunpack.c.l.b16 %v1786
        %v1947 = vunpack.c.l.b16 %v1787
        %v1948 = vunpack.c.h.b16 %v1787
        %v1949 = vunpack.c.l.b16 %v1788
        %v1950 = vunpack.c.l.b16 %v1789
        %v1951 = vunpack.c.h.b16 %v1789
        %v1952 = vunpack.c.l.b16 %v1790
        %v1953 = vunpack.c.l.b16 %v1791
        %v1954 = vunpack.c.h.b16 %v1791
        %v1955 = vunpack.c.l.b16 %v1792
        %v1956 = vunpack.c.l.b16 %v1793
        %v1957 = vunpack.c.h.b16 %v1793
        %v1958 = vunpack.c.l.b16 %v1794
        %v1959 = vunpack.c.l.b16 %v1795
        %v1960 = vunpack.c.h.b16 %v1795
        %v1961 = vunpack.c.l.b16 %v1796
        %v1962 = vunpack.c.l.b16 %v1797
        %v1963 = vunpack.c.h.b16 %v1797
        %v1964 = vunpack.c.l.b16 %v1798
        %v1965 = vunpack.c.l.b16 %v1799
        %v1966 = vunpack.c.h.b16 %v1799
        %v1967 = vunpack.c.l.b16 %v1800
        %v1968 = vunpack.c.l.b16 %v1801
        %v1969 = vunpack.c.h.b16 %v1801
        %v1970 = vunpack.c.l.b16 %v1802
        %v1971 = vunpack.c.l.b16 %v1803
        %v1972 = vunpack.c.h.b16 %v1803
        %v1973 = vunpack.c.l.b16 %v1804
        %v1974 = vunpack.c.l.b16 %v1805
        %v1975 = vunpack.c.h.b16 %v1805
        %v1976 = vunpack.c.l.b16 %v1806
        %v1977 = vunpack.c.l.b16 %v1807
        %v1978 = vunpack.c.h.b16 %v1807
        %v1979 = vunpack.c.l.b16 %v1808
        %v1980 = vunpack.c.l.b16 %v1809
        %v1981 = vunpack.c.h.b16 %v1809
        %v1982 = vunpack.c.l.b16 %v1810
        %v1983 = vunpack.c.l.b16 %v1811
        %v1984 = vunpack.c.h.b16 %v1811
        %v1985 = vunpack.c.l.b16 %v1812
        %v1986 = vunpack.c.l.b16 %v1813
        %v1987 = vunpack.c.h.b16 %v1813
        %v1988 = vunpack.c.l.b16 %v1814
        %v1989 = vunpack.c.l.b16 %v1815
        %v1990 = vunpack.c.h.b16 %v1815
        %v1991 = vunpack.c.l.b16 %v1816
        %v1992 = vunpack.c.l.b16 %v1817
        %v1993 = vunpack.c.h.b16 %v1817
        %v1994 = vunpack.c.l.b16 %v1818
        %v1995 = vunpack.c.l.b16 %v1819
        %v1996 = vunpack.c.h.b16 %v1819
        %v1997 = vunpack.c.l.b16 %v1820
        %v1998 = vpack.c.b16 %v1905, %v1902
        %v1999 = vpack.c.b16 %v1906, %v1903
        %v2000 = vpack.c.b16 %v1907, %v1904
        %v2001 = vpack.c.b16 %v1911, %v1908
        %v2002 = vpack.c.b16 %v1912, %v1909
        %v2003 = vpack.c.b16 %v1913, %v1910
        %v2004 = vpack.c.b16 %v1917, %v1914
        %v2005 = vpack.c.b16 %v1918, %v1915
        %v2006 = vpack.c.b16 %v1919, %v1916
        %v2007 = vpack.c.b16 %v1923, %v1920
        %v2008 = vpack.c.b16 %v1924, %v1921
        %v2009 = vpack.c.b16 %v1925, %v1922
        %v2010 = vpack.c.b16 %v1929, %v1926
        %v2011 = vpack.c.b16 %v1930, %v1927
        %v2012 = vpack.c.b16 %v1931, %v1928
        %v2013 = vpack.c.b16 %v1935, %v1932
        %v2014 = vpack.c.b16 %v1936, %v1933
        %v2015 = vpack.c.b16 %v1937, %v1934
        %v2016 = vpack.c.b16 %v1941, %v1938
        %v2017 = vpack.c.b16 %v1942, %v1939
        %v2018 = vpack.c.b16 %v1943, %v1940
        %v2019 = vpack.c.b16 %v1947, %v1944
        %v2020 = vpack.c.b16 %v1948, %v1945
        %v2021 = vpack.c.b16 %v1949, %v1946
        %v2022 = vpack.c.b16 %v1953, %v1950
        %v2023 = vpack.c.b16 %v1954, %v1951
        %v2024 = vpack.c.b16 %v1955, %v1952
        %v2025 = vpack.c.b16 %v1959, %v1956
        %v2026 = vpack.c.b16 %v1960, %v1957
        %v2027 = vpack.c.b16 %v1961, %v1958
        %v2028 = vpack.c.b16 %v1965, %v1962
        %v2029 = vpack.c.b16 %v1966, %v1963
        %v2030 = vpack.c.b16 %v1967, %v1964
        %v2031 = vpack.c.b16 %v1971, %v1968
        %v2032 = vpack.c.b16 %v1972, %v1969
        %v2033 = vpack.c.b16 %v1973, %v1970
        %v2034 = vpack.c.b16 %v1977, %v1974
        %v2035 = vpack.c.b16 %v1978, %v1975
        %v2036 = vpack.c.b16 %v1979, %v1976
        %v2037 = vpack.c.b16 %v1983, %v1980
        %v2038 = vpack.c.b16 %v1984, %v1981
        %v2039 = vpack.c.b16 %v1985, %v1982
        %v2040 = vpack.c.b16 %v1989, %v1986
        %v2041 = vpack.c.b16 %v1990, %v1987
        %v2042 = vpack.c.b16 %v1991, %v1988
        %v2043 = vpack.c.b16 %v1995, %v1992
        %v2044 = vpack.c.b16 %v1996, %v1993
        %v2045 = vpack.c.b16 %v1997, %v1994
        %2094 = vmatprep.subr.bf16.mxu0 %v1999
        %2095 = vmatpush1.bf16.msra.mxu0 %v1998
        %2096 = vmatprep.subr.bf16.mxu0 %v2002
        %2097 = vmatpush1.bf16.msra.mxu0 %v2001
        %2098 = vmatprep.subr.bf16.mxu0 %v2005
        %2099 = vmatpush1.bf16.msra.mxu0 %v2004
        %2100 = vmatprep.subr.bf16.mxu0 %v2008
        %2101 = vmatpush1.bf16.msra.mxu0 %v2007
        %2102 = vmatprep.subr.bf16.mxu0 %v2011
        %2103 = vmatpush1.bf16.msra.mxu0 %v2010
        %2104 = vmatprep.subr.bf16.mxu0 %v2014
        %2105 = vmatpush1.bf16.msra.mxu0 %v2013
        %2106 = vmatprep.subr.bf16.mxu0 %v2017
        %2107 = vmatpush1.bf16.msra.mxu0 %v2016
        %2108 = vmatprep.subr.bf16.mxu0 %v2020
        %2109 = vmatpush1.bf16.msra.mxu0 %v2019
        %2110 = vmatprep.subr.bf16.mxu0 %v2023
        %2111 = vmatpush1.bf16.msra.mxu0 %v2022
        %2112 = vmatprep.subr.bf16.mxu0 %v2026
        %2113 = vmatpush1.bf16.msra.mxu0 %v2025
        %2114 = vmatprep.subr.bf16.mxu0 %v2029
        %2115 = vmatpush1.bf16.msra.mxu0 %v2028
        %2116 = vmatprep.subr.bf16.mxu0 %v2032
        %2117 = vmatpush1.bf16.msra.mxu0 %v2031
        %2118 = vmatprep.subr.bf16.mxu0 %v2035
        %2119 = vmatpush1.bf16.msra.mxu0 %v2034
        %2120 = vmatprep.subr.bf16.mxu0 %v2038
        %2121 = vmatpush1.bf16.msra.mxu0 %v2037
        %2122 = vmatprep.subr.bf16.mxu0 %v2041
        %2123 = vmatpush1.bf16.msra.mxu0 %v2040
        %2124 = vmatprep.subr.bf16.mxu0 %v2044
        %2125 = vmatpush1.bf16.msra.mxu0 %v2043
        %2126 = vmatprep.mubr.bf16.mxu0 %v1742
        %2127 = vmatmul.mubr.bf16.gmra.mrb[0].mxu0 %v1741
        %v2128 = vpop.f32.mrb[0].mxu0
        %v2129 = vadd.f32 %v1826, %v2128
        %v2130 = vpop.f32.mrb[0].mxu0
        %v2131 = vadd.f32 %v1830, %v2130
        %v2132 = vpop.f32.mrb[0].mxu0
        %v2133 = vadd.f32 %v1826, %v2132
        %v2134 = vpop.f32.mrb[0].mxu0
        %v2135 = vadd.f32 %v1830, %v2134
        %2136 = vmatprep.mubr.bf16.mxu0 %v1744
        %2137 = vmatmul.mubr.bf16.gmra.mrb[0].mxu0 %v1743
        %v2138 = vpop.f32.mrb[0].mxu0
        %v2139 = vadd.f32 %v1826, %v2138
        %v2140 = vpop.f32.mrb[0].mxu0
        %v2141 = vadd.f32 %v1830, %v2140
        %v2142 = vpop.f32.mrb[0].mxu0
        %v2143 = vadd.f32 %v1826, %v2142
        %v2144 = vpop.f32.mrb[0].mxu0
        %v2145 = vadd.f32 %v1830, %v2144
        %2146 = vmatprep.mubr.bf16.mxu0 %v1746
        %2147 = vmatmul.mubr.bf16.gmra.mrb[0].mxu0 %v1745
        %v2148 = vpop.f32.mrb[0].mxu0
        %v2149 = vadd.f32 %v1826, %v2148
        %v2150 = vpop.f32.mrb[0].mxu0
        %v2151 = vadd.f32 %v1830, %v2150
        %v2152 = vpop.f32.mrb[0].mxu0
        %v2153 = vadd.f32 %v1826, %v2152
        %v2154 = vpop.f32.mrb[0].mxu0
        %v2155 = vadd.f32 %v1830, %v2154
        %2156 = vmatprep.mubr.bf16.mxu0 %v1748
        %2157 = vmatmul.mubr.bf16.gmra.mrb[0].mxu0 %v1747
        %v2158 = vpop.f32.mrb[0].mxu0
        %v2159 = vadd.f32 %v1826, %v2158
        %v2160 = vpop.f32.mrb[0].mxu0
        %v2161 = vadd.f32 %v1830, %v2160
        %v2162 = vpop.f32.mrb[0].mxu0
        %v2163 = vadd.f32 %v1826, %v2162
        %v2164 = vpop.f32.mrb[0].mxu0
        %v2165 = vadd.f32 %v1830, %v2164
        %2166 = vmatprep.mubr.bf16.mxu0 %v1750
        %2167 = vmatmul.mubr.bf16.gmra.mrb[0].mxu0 %v1749
        %v2168 = vpop.f32.mrb[0].mxu0
        %v2169 = vadd.f32 %v1826, %v2168
        %v2170 = vpop.f32.mrb[0].mxu0
        %v2171 = vadd.f32 %v1830, %v2170
        %v2172 = vpop.f32.mrb[0].mxu0
        %v2173 = vadd.f32 %v1826, %v2172
        %v2174 = vpop.f32.mrb[0].mxu0
        %v2175 = vadd.f32 %v1830, %v2174
        %2176 = vmatprep.mubr.bf16.mxu0 %v1752
        %2177 = vmatmul.mubr.bf16.gmra.mrb[0].mxu0 %v1751
        %v2178 = vpop.f32.mrb[0].mxu0
        %v2179 = vadd.f32 %v1826, %v2178
        %v2180 = vpop.f32.mrb[0].mxu0
        %v2181 = vadd.f32 %v1830, %v2180
        %v2182 = vpop.f32.mrb[0].mxu0
        %v2183 = vadd.f32 %v1826, %v2182
        %v2184 = vpop.f32.mrb[0].mxu0
        %v2185 = vadd.f32 %v1830, %v2184
        %2186 = vmatprep.mubr.bf16.mxu0 %v1754
        %2187 = vmatmul.mubr.bf16.gmra.mrb[0].mxu0 %v1753
        %v2188 = vpop.f32.mrb[0].mxu0
        %v2189 = vadd.f32 %v1826, %v2188
        %v2190 = vpop.f32.mrb[0].mxu0
        %v2191 = vadd.f32 %v1830, %v2190
        %v2192 = vpop.f32.mrb[0].mxu0
        %v2193 = vadd.f32 %v1826, %v2192
        %v2194 = vpop.f32.mrb[0].mxu0
        %v2195 = vadd.f32 %v1830, %v2194
        %2196 = vmatprep.mubr.bf16.mxu0 %v1756
        %2197 = vmatmul.mubr.bf16.gmra.mrb[0].mxu0 %v1755
        %v2198 = vpop.f32.mrb[0].mxu0
        %v2199 = vadd.f32 %v1826, %v2198
        %v2200 = vpop.f32.mrb[0].mxu0
        %v2201 = vadd.f32 %v1830, %v2200
        %v2202 = vpop.f32.mrb[0].mxu0
        %v2203 = vadd.f32 %v1826, %v2202
        %v2204 = vpop.f32.mrb[0].mxu0
        %v2205 = vadd.f32 %v1830, %v2204
        %2206 = vdwg.mxu0
        %2207 = vmatprep.subr.bf16.mxu0 0
        %2208 = vmatpush1.bf16.msra.mxu0 %v2000
        %2209 = vmatprep.subr.bf16.mxu0 0
        %2210 = vmatpush1.bf16.msra.mxu0 %v2003
        %2211 = vmatprep.subr.bf16.mxu0 0
        %2212 = vmatpush1.bf16.msra.mxu0 %v2006
        %2213 = vmatprep.subr.bf16.mxu0 0
        %2214 = vmatpush1.bf16.msra.mxu0 %v2009
        %2215 = vmatprep.subr.bf16.mxu0 0
        %2216 = vmatpush1.bf16.msra.mxu0 %v2012
        %2217 = vmatprep.subr.bf16.mxu0 0
        %2218 = vmatpush1.bf16.msra.mxu0 %v2015
        %2219 = vmatprep.subr.bf16.mxu0 0
        %2220 = vmatpush1.bf16.msra.mxu0 %v2018
        %2221 = vmatprep.subr.bf16.mxu0 0
        %2222 = vmatpush1.bf16.msra.mxu0 %v2021
        %2223 = vmatprep.subr.bf16.mxu0 0
        %2224 = vmatpush1.bf16.msra.mxu0 %v2024
        %2225 = vmatprep.subr.bf16.mxu0 0
        %2226 = vmatpush1.bf16.msra.mxu0 %v2027
        %2227 = vmatprep.subr.bf16.mxu0 0
        %2228 = vmatpush1.bf16.msra.mxu0 %v2030
        %2229 = vmatprep.subr.bf16.mxu0 0
        %2230 = vmatpush1.bf16.msra.mxu0 %v2033
        %2231 = vmatprep.subr.bf16.mxu0 0
        %2232 = vmatpush1.bf16.msra.mxu0 %v2036
        %2233 = vmatprep.subr.bf16.mxu0 0
        %2234 = vmatpush1.bf16.msra.mxu0 %v2039
        %2235 = vmatprep.subr.bf16.mxu0 0
        %2236 = vmatpush1.bf16.msra.mxu0 %v2042
        %2237 = vmatprep.subr.bf16.mxu0 0
        %2238 = vmatpush1.bf16.msra.mxu0 %v2045
        %2239 = vmatprep.mubr.bf16.mxu0 %v1742
        %2240 = vmatmul.mubr.bf16.gmra.mrb[0].mxu0 %v1741
        %v2241 = vpop.f32.mrb[0].mxu0
        %v2242 = vadd.f32 %v1834, %v2241
        %v2243 = vpop.f32.mrb[0].mxu0
        %v2244 = vpop.f32.mrb[0].mxu0
        %v2245 = vadd.f32 %v1834, %v2244
        %v2246 = vpop.f32.mrb[0].mxu0
        %2247 = vmatprep.mubr.bf16.mxu0 %v1744
        %2248 = vmatmul.mubr.bf16.gmra.mrb[0].mxu0 %v1743
        %v2249 = vpop.f32.mrb[0].mxu0
        %v2250 = vadd.f32 %v1834, %v2249
        %v2251 = vpop.f32.mrb[0].mxu0
        %v2252 = vpop.f32.mrb[0].mxu0
        %v2253 = vadd.f32 %v1834, %v2252
        %v2254 = vpop.f32.mrb[0].mxu0
        %2255 = vmatprep.mubr.bf16.mxu0 %v1746
        %2256 = vmatmul.mubr.bf16.gmra.mrb[0].mxu0 %v1745
        %v2257 = vpop.f32.mrb[0].mxu0
        %v2258 = vadd.f32 %v1834, %v2257
        %v2259 = vpop.f32.mrb[0].mxu0
        %v2260 = vpop.f32.mrb[0].mxu0
        %v2261 = vadd.f32 %v1834, %v2260
        %v2262 = vpop.f32.mrb[0].mxu0
        %2263 = vmatprep.mubr.bf16.mxu0 %v1748
        %2264 = vmatmul.mubr.bf16.gmra.mrb[0].mxu0 %v1747
        %v2265 = vpop.f32.mrb[0].mxu0
        %v2266 = vadd.f32 %v1834, %v2265
        %v2267 = vpop.f32.mrb[0].mxu0
        %v2268 = vpop.f32.mrb[0].mxu0
        %v2269 = vadd.f32 %v1834, %v2268
        %v2270 = vpop.f32.mrb[0].mxu0
        %2271 = vmatprep.mubr.bf16.mxu0 %v1750
        %2272 = vmatmul.mubr.bf16.gmra.mrb[0].mxu0 %v1749
        %v2273 = vpop.f32.mrb[0].mxu0
        %v2274 = vadd.f32 %v1834, %v2273
        %v2275 = vpop.f32.mrb[0].mxu0
        %v2276 = vpop.f32.mrb[0].mxu0
        %v2277 = vadd.f32 %v1834, %v2276
        %v2278 = vpop.f32.mrb[0].mxu0
        %2279 = vmatprep.mubr.bf16.mxu0 %v1752
        %2280 = vmatmul.mubr.bf16.gmra.mrb[0].mxu0 %v1751
        %v2281 = vpop.f32.mrb[0].mxu0
        %v2282 = vadd.f32 %v1834, %v2281
        %v2283 = vpop.f32.mrb[0].mxu0
        %v2284 = vpop.f32.mrb[0].mxu0
        %v2285 = vadd.f32 %v1834, %v2284
        %v2286 = vpop.f32.mrb[0].mxu0
        %2287 = vmatprep.mubr.bf16.mxu0 %v1754
        %2288 = vmatmul.mubr.bf16.gmra.mrb[0].mxu0 %v1753
        %v2289 = vpop.f32.mrb[0].mxu0
        %v2290 = vadd.f32 %v1834, %v2289
        %v2291 = vpop.f32.mrb[0].mxu0
        %v2292 = vpop.f32.mrb[0].mxu0
        %v2293 = vadd.f32 %v1834, %v2292
        %v2294 = vpop.f32.mrb[0].mxu0
        %2295 = vmatprep.mubr.bf16.mxu0 %v1756
        %2296 = vmatmul.mubr.bf16.gmra.mrb[0].mxu0 %v1755
        %v2297 = vpop.f32.mrb[0].mxu0
        %v2298 = vadd.f32 %v1834, %v2297
        %v2299 = vpop.f32.mrb[0].mxu0
        %v2300 = vpop.f32.mrb[0].mxu0
        %v2301 = vadd.f32 %v1834, %v2300
        %v2302 = vpop.f32.mrb[0].mxu0
        %2303 = vdwg.mxu0
        %2304 = vst [vmem:[%s409] sm:$0xff] %v2129
        %2305 = vst [vmem:[%s409 + $0x8] sm:$0xff] %v2131
        %2306 = vst [vmem:[%s409 + $0x10] sm:$0xff] %v2242
        %2307 = vst [vmem:[%s409 + $0x18] sm:$0xff] %v2133
        %2308 = vst [vmem:[%s409 + $0x20] sm:$0xff] %v2135
        %2309 = vst [vmem:[%s409 + $0x28] sm:$0xff] %v2245
        %2310 = vst [vmem:[%s409 + $0x30] sm:$0xff] %v2139
        %2311 = vst [vmem:[%s409 + $0x38] sm:$0xff] %v2141
        %2312 = vst [vmem:[%s409 + $0x40] sm:$0xff] %v2250
        %2313 = vst [vmem:[%s409 + $0x48] sm:$0xff] %v2143
        %2314 = vst [vmem:[%s409 + $0x50] sm:$0xff] %v2145
        %2315 = vst [vmem:[%s409 + $0x58] sm:$0xff] %v2253
        %2316 = vst [vmem:[%s409 + $0x60] sm:$0xff] %v2149
        %2317 = vst [vmem:[%s409 + $0x68] sm:$0xff] %v2151
        %2318 = vst [vmem:[%s409 + $0x70] sm:$0xff] %v2258
        %2319 = vst [vmem:[%s409 + $0x78] sm:$0xff] %v2153
        %2320 = vst [vmem:[%s409 + $0x80] sm:$0xff] %v2155
        %2321 = vst [vmem:[%s409 + $0x88] sm:$0xff] %v2261
        %2322 = vst [vmem:[%s409 + $0x90] sm:$0xff] %v2159
        %2323 = vst [vmem:[%s409 + $0x98] sm:$0xff] %v2161
        %2324 = vst [vmem:[%s409 + $0xa0] sm:$0xff] %v2266
        %2325 = vst [vmem:[%s409 + $0xa8] sm:$0xff] %v2163
        %2326 = vst [vmem:[%s409 + $0xb0] sm:$0xff] %v2165
        %2327 = vst [vmem:[%s409 + $0xb8] sm:$0xff] %v2269
        %2328 = vst [vmem:[%s409 + $0xc0] sm:$0xff] %v2169
        %2329 = vst [vmem:[%s409 + $0xc8] sm:$0xff] %v2171
        %2330 = vst [vmem:[%s409 + $0xd0] sm:$0xff] %v2274
        %2331 = vst [vmem:[%s409 + $0xd8] sm:$0xff] %v2173
        %2332 = vst [vmem:[%s409 + $0xe0] sm:$0xff] %v2175
        %2333 = vst [vmem:[%s409 + $0xe8] sm:$0xff] %v2277
        %2334 = vst [vmem:[%s409 + $0xf0] sm:$0xff] %v2179
        %2335 = vst [vmem:[%s409 + $0xf8] sm:$0xff] %v2181
        %2336 = vst [vmem:[%s409 + $0x100] sm:$0xff] %v2282
        %2337 = vst [vmem:[%s409 + $0x108] sm:$0xff] %v2183
        %2338 = vst [vmem:[%s409 + $0x110] sm:$0xff] %v2185
        %2339 = vst [vmem:[%s409 + $0x118] sm:$0xff] %v2285
        %2340 = vst [vmem:[%s409 + $0x120] sm:$0xff] %v2189
        %2341 = vst [vmem:[%s409 + $0x128] sm:$0xff] %v2191
        %2342 = vst [vmem:[%s409 + $0x130] sm:$0xff] %v2290
        %2343 = vst [vmem:[%s409 + $0x138] sm:$0xff] %v2193
        %2344 = vst [vmem:[%s409 + $0x140] sm:$0xff] %v2195
        %2345 = vst [vmem:[%s409 + $0x148] sm:$0xff] %v2293
        %2346 = vst [vmem:[%s409 + $0x150] sm:$0xff] %v2199
        %2347 = vst [vmem:[%s409 + $0x158] sm:$0xff] %v2201
        %2348 = vst [vmem:[%s409 + $0x160] sm:$0xff] %v2298
        %2349 = vst [vmem:[%s409 + $0x168] sm:$0xff] %v2203
        %2350 = vst [vmem:[%s409 + $0x170] sm:$0xff] %v2205
        %2351 = vst [vmem:[%s409 + $0x178] sm:$0xff] %v2301
        %s2352 = sand.u32 %s230, 1
        %s2353 = scalar_lea.sflag [#allocation4], %s2352
        %s2354 = sand.u32 %s230, 1
        %s2355 = smul.addr %s2354, 384
        %s2356 = scalar_lea.vmem [#allocation11], %s2355
        // Predicated region
        $region77: #{tpu_custom_call.1} parent=55 // pred_check
          %p2357 = pneg %p240
        $region78: #{tpu_custom_call.1} parent=55 // pred_check_branch
          %2359 = sbr.rel (%p2357) target = $region80
        $region79: #{tpu_custom_call.1} parent=55 // pred_region
          %s2360 = smul.u32 16, %s28
          %s2362 = ssub.s32 6144, 6144
          %2363 = vsyncadd %s2353, %s2362
          %s2364 = smul.addr %s2360, 3
          %s2365 = smul.addr %s2364, 128
          %s2366 = scalar_lea.hbm %s9, %s2365
          %s2367 = sshll.u32 %s2356, 4
          %s2368 = int_to_ptr.vmem [resolvable:$true] %s2367
          %2373 = dma.vmem_to_hbm [thread:$0]  %s2368, 6144, %s2366, %s2353, 384, 384, 24
        $region80: #{tpu_custom_call.1} parent=55 // pred_fallthru
          _
      $region56: #{tpu_custom_call.1} parent=5 // pred_fallthru
        _
      %p2374 = scmp.le.s32.totalorder 2, %s23
      // Predicated region
      $region81: #{tpu_custom_call.1} parent=5 // pred_check
        %p2375 = pneg %p2374
      $region82: #{tpu_custom_call.1} parent=5 // pred_check_branch
        %2377 = sbr.rel (%p2375) target = $region84
      $region83: #{tpu_custom_call.1} parent=5 // pred_region
        %s2378 = ssub.s32 %s23, 2
        // Predicated region
        $region85: #{tpu_custom_call.1} parent=83 // pred_check
          %p2379 = pneg %p246
        $region86: #{tpu_custom_call.1} parent=83 // pred_check_branch
          %2381 = sbr.rel (%p2379) target = $region88
        $region87: #{tpu_custom_call.1} parent=83 // pred_region
          %s2382 = sand.u32 %s231, 1
          %s2383 = scalar_lea.sflag [#allocation4], %s2382
          %s2384 = sand.u32 %s231, 1
          %s2385 = smul.addr %s2384, 384
          %s2386 = scalar_lea.vmem [#allocation11], %s2385
          %2387 = dma.done %s2383, 6144
        $region88: #{tpu_custom_call.1} parent=83 // pred_fallthru
          _
      $region84: #{tpu_custom_call.1} parent=5 // pred_fallthru
        _
    $region6: #{tpu_custom_call.1} parent=1 // loop_footer
      %s27 = sadd.s32 1, %s23
    $region7: #{tpu_custom_call.1} parent=1 // loop_footer_branch
      %22 = sbr.rel target = $region3
    $region8: #{tpu_custom_call.1} parent=1 // loop_exit
      _
    %2388 = vsyncpa [#allocation3], 1
    %s2389 = scalar_lea.sflag [#allocation3], 1
    %2390 = vsyncpa %s2389, 1
    %2391 = vsyncpa [#allocation6], 1
    %2392 = vsyncpa [#allocation9], 1
    %2393 = vsyncpa [#allocation4], 1
    %s2394 = scalar_lea.sflag [#allocation4], 1
    %2395 = vsyncpa %s2394, 1

</llo_original>
